<compile_context>
chip_gen: v7x
topology: tpu7x:2x2x1
jax: 0.10.0
libtpu: 0.0.40
codegen_flags: <defaults>
</compile_context>

<pallas_src>
import functools

import numpy as np
import jax
import jax.numpy as jnp
from jax import lax
from jax.experimental import pallas as pl
from jax.experimental.pallas import tpu as pltpu

CHAR_EMB = 30          # char embedding dim (conv image width)
CPAD = 32              # sublane-friendly padded embedding width
HIDDEN = 100           # LSTM hidden size
HPAD = 128             # lane-aligned padded hidden size (per gate)
GDIM = 4 * HPAD        # 512: four lane-padded gates (i, f, g, o)
SEG_W = CHAR_EMB - 1   # 29: width after the 2x2 conv
BLK = 8                # LSTM steps per block (one (8,128) output tile)


# --------------------------------------------------------------------------
# Fused kernel: conv segmenter + on-device reset mask + LSTM recurrence
# --------------------------------------------------------------------------
def _fused_kernel(len_ref, sb_ref, x_ref, bmat_ref, dvec_ref, wih_ref, whh_ref,
                  lb_ref, seg_ref, hout_ref, xw_ref, keep_ref, *, lpad):
    true_len = len_ref[0]                                      # true word length (i32)
    row = lax.broadcasted_iota(jnp.int32, (lpad, 1), 0)
    valid = (row < true_len).astype(jnp.float32)               # rows >= L are padding

    # ---- 4 x (3x3 conv pad=1 + ReLU): width = banded matmuls, height = XLU rolls ----
    y = x_ref[...] * valid                                     # (lpad, 32)
    for layer in range(4):
        yup = pltpu.roll(y, shift=1, axis=0)                   # y[i-1]; wrap row is 0 (lpad > L)
        ydn = pltpu.roll(y, shift=lpad - 1, axis=0)            # y[i+1]
        acc = (jnp.dot(yup, bmat_ref[3 * layer + 0], preferred_element_type=jnp.float32)
               + jnp.dot(y, bmat_ref[3 * layer + 1], preferred_element_type=jnp.float32)
               + jnp.dot(ydn, bmat_ref[3 * layer + 2], preferred_element_type=jnp.float32))
        y = jnp.maximum(acc + sb_ref[layer], 0.0) * valid      # re-zero padding rows

    # ---- final 2x2 conv (no pad) folded with Linear(29 -> 1) + sigmoid ----
    ydn = pltpu.roll(y, shift=lpad - 1, axis=0)                # y[i+1]
    logit = (jnp.sum(y * dvec_ref[0:1, :], axis=-1, keepdims=True)
             + jnp.sum(ydn * dvec_ref[1:2, :], axis=-1, keepdims=True)
             + sb_ref[4])                                      # (lpad, 1); rows 0..L-2 valid
    seg = jax.nn.sigmoid(logit)
    seg_ref[...] = seg                                         # tiny D2H payload

    # ---- keep (1 - reset) mask built on device: keep[t] = 0 at a segment start ----
    not_boundary = jnp.broadcast_to(jnp.where(seg >= 0.5, 0.0, 1.0), (lpad, HPAD))
    keep = pltpu.roll(not_boundary, shift=1, axis=0)           # keep[t] <- not_boundary[t-1]
    keep_ref[...] = jnp.where(row == 0, 0.0, keep)

    # ---- LSTM(30, 100): hoisted bf16 input projection ----
    xw_ref[...] = (jnp.dot(x_ref[...].astype(jnp.bfloat16), wih_ref[...],
                           preferred_element_type=jnp.float32) + lb_ref[...])

    # ---- time recurrence: fori_loop over 8-step blocks, (h, c) carried as values ----
    def block_body(blk, carry):
        h, c = carry
        base = pl.multiple_of(blk * BLK, BLK)
        xw_blk = xw_ref[pl.ds(base, BLK), :]                   # (8, 512) full-tile load
        keep_blk = keep_ref[pl.ds(base, BLK), :]               # (8, 128)
        hrows = []
        for j in range(BLK):                                   # unrolled 8-step inner loop
            keep_t = keep_blk[j:j + 1, :]
            h_prev = h * keep_t                                # multiplicative segment reset
            c_prev = c * keep_t
            gates = xw_blk[j:j + 1, :] + jnp.dot(
                h_prev.astype(jnp.bfloat16), whh_ref[...],
                preferred_element_type=jnp.float32)            # (1, 512)
            gi = jax.nn.sigmoid(gates[:, 0:HPAD])              # PyTorch gate order i, f, g, o
            gf = jax.nn.sigmoid(gates[:, HPAD:2 * HPAD])
            gg = jnp.tanh(gates[:, 2 * HPAD:3 * HPAD])
            go = jax.nn.sigmoid(gates[:, 3 * HPAD:4 * HPAD])
            c = gf * c_prev + gi * gg
            h = go * jnp.tanh(c)
            hrows.append(h)
        # one full (8,128) store per block instead of 8 masked single-row stores
        hout_ref[pl.ds(base, BLK), :] = jnp.concatenate(hrows, axis=0)
        return h, c

    zero = jnp.zeros((1, HPAD), jnp.float32)
    lax.fori_loop(0, pl.cdiv(true_len, BLK), block_body, (zero, zero))


@functools.lru_cache(maxsize=None)
def _build_fused(lpad):
    call = pl.pallas_call(
        functools.partial(_fused_kernel, lpad=lpad),
        out_shape=(jax.ShapeDtypeStruct((lpad, 1), jnp.float32),      # seg probs
                   jax.ShapeDtypeStruct((lpad, HPAD), jnp.float32)),  # all hidden states
        in_specs=[
            pl.BlockSpec(memory_space=pltpu.MemorySpace.SMEM),   # true length   i32[1]
            pl.BlockSpec(memory_space=pltpu.MemorySpace.SMEM),   # conv/final biases f32[5]
            pl.BlockSpec(memory_space=pltpu.MemorySpace.VMEM),   # x             [lpad, 32] f32
            pl.BlockSpec(memory_space=pltpu.MemorySpace.VMEM),   # bmat          [12, 32, 32] f32
            pl.BlockSpec(memory_space=pltpu.MemorySpace.VMEM),   # dvec          [2, 32] f32
            pl.BlockSpec(memory_space=pltpu.MemorySpace.VMEM),   # wih_t         [32, 512] bf16
            pl.BlockSpec(memory_space=pltpu.MemorySpace.VMEM),   # whh_t         [128, 512] bf16
            pl.BlockSpec(memory_space=pltpu.MemorySpace.VMEM),   # lstm bias     [1, 512] f32
        ],
        out_specs=(pl.BlockSpec(memory_space=pltpu.MemorySpace.VMEM),
                   pl.BlockSpec(memory_space=pltpu.MemorySpace.VMEM)),
        scratch_shapes=[
            pltpu.VMEM((lpad, GDIM), jnp.float32),   # hoisted X @ Wih (+ bias)
            pltpu.VMEM((lpad, HPAD), jnp.float32),   # keep (1 - reset) mask
        ],
    )
    return jax.jit(call)


# --------------------------------------------------------------------------
# Model wrapper (parameter prep + host-side data-dependent glue)
# --------------------------------------------------------------------------
class MyModelPallas:
    def __init__(self, char_to_idx, char_len, word_len):
        self.char_to_idx = char_to_idx
        key = jax.random.PRNGKey(0)
        ks = jax.random.split(key, 10)

        ct = np.zeros((char_len, CPAD), np.float32)
        ct[:, :CHAR_EMB] = np.asarray(
            jax.random.normal(ks[0], (char_len, CHAR_EMB), jnp.float32)) * 0.5
        self.char_table = jnp.asarray(ct)                                 # (char_len, 32)
        # TODO(synk): word_embeds (word_len x 100) and the `thresh` Linear(1,1) are
        # never used in MyModel.forward, so they are not instantiated here.

        conv_w3 = np.asarray(jax.random.normal(ks[1], (4, 3, 3), jnp.float32)) * 0.3
        conv_w2 = np.asarray(jax.random.normal(ks[2], (2, 2), jnp.float32)) * 0.3
        conv_b = np.asarray(jax.random.normal(ks[3], (5,), jnp.float32)) * 0.1
        lin_w = np.asarray(jax.random.normal(ks[4], (SEG_W,), jnp.float32)) * 0.3
        lin_b = float(jax.random.normal(ks[5], (), jnp.float32)) * 0.1

        # Banded matrices B[3*layer+kh] (32x32): the width direction of each 3x3 conv
        # (incl. its zero width-padding) becomes a lane-aligned matmul.
        bmat = np.zeros((12, CPAD, CPAD), np.float32)
        for layer in range(4):
            for kh in range(3):
                for c in range(CHAR_EMB):
                    for j in range(CHAR_EMB):
                        kw = c - j + 1
                        if 0 <= kw <= 2:
                            bmat[3 * layer + kh, c, j] = conv_w3[layer, kh, kw]
        self.bmat = jnp.asarray(bmat)

        # Fold the final 2x2 conv + Linear(29->1) into two 30-wide row vectors plus
        # one scalar bias (b5 * sum(lin_w) + lin_b).
        dvec = np.zeros((2, CPAD), np.float32)
        for kh in range(2):
            for c in range(CHAR_EMB):
                for kw in range(2):
                    j = c - kw
                    if 0 <= j < SEG_W:
                        dvec[kh, c] += lin_w[j] * conv_w2[kh, kw]
        self.dvec = jnp.asarray(dvec)
        bias_final = lin_b + float(conv_b[4]) * float(lin_w.sum())
        self.scalar_bias = jnp.asarray(
            np.concatenate([conv_b[:4], [bias_final]]).astype(np.float32))

        # LSTM(30, 100) in PyTorch gate order (i, f, g, o); each gate padded 100 -> 128
        # lanes, Whh rows 100..127 zero, Wih rows 30/31 zero -> padded lanes stay zero.
        wih = np.asarray(jax.random.normal(ks[6], (4 * HIDDEN, CHAR_EMB), jnp.float32)) * 0.1
        whh = np.asarray(jax.random.normal(ks[7], (4 * HIDDEN, HIDDEN), jnp.float32)) * 0.1
        b_ih = np.asarray(jax.random.normal(ks[8], (4 * HIDDEN,), jnp.float32)) * 0.1
        b_hh = np.asarray(jax.random.normal(ks[9], (4 * HIDDEN,), jnp.float32)) * 0.1

        def pad_gate_cols(m_t):   # (K, 400) -> (K, 512): each gate padded 100 -> 128
            blocks = [np.pad(m_t[:, g * HIDDEN:(g + 1) * HIDDEN],
                             ((0, 0), (0, HPAD - HIDDEN))) for g in range(4)]
            return np.concatenate(blocks, axis=1)

        wih_t = np.pad(pad_gate_cols(wih.T), ((0, CPAD - CHAR_EMB), (0, 0)))   # (32, 512)
        whh_t = np.pad(pad_gate_cols(whh.T), ((0, HPAD - HIDDEN), (0, 0)))     # (128, 512)
        self.wih_t = jnp.asarray(wih_t, dtype=jnp.bfloat16)
        self.whh_t = jnp.asarray(whh_t, dtype=jnp.bfloat16)
        self.lstm_bias = jnp.asarray(pad_gate_cols((b_ih + b_hh)[None, :]))    # (1, 512) f32

    def forward(self, word):
        L = len(word)
        lpad = (L // BLK + 1) * BLK                       # length bucket; always >= L + 1
        idx = np.zeros((lpad,), np.int32)
        idx[:L] = [self.char_to_idx[c] for c in word]
        emb = jnp.take(self.char_table, jnp.asarray(idx), axis=0)       # (lpad, 32)

        seg, h_all = _build_fused(lpad)(
            jnp.asarray([L], jnp.int32), self.scalar_bias, emb,
            self.bmat, self.dvec, self.wih_t, self.whh_t, self.lstm_bias)

        if L == 1:   # mirror the single-character PyTorch branch (returns the word itself)
            return h_all[0:1, :HIDDEN], word

        # Host logic only for the data-dependent split / gather (mirrors the PyTorch
        # Python-level control flow), after all device compute has been issued.
        seg_np = np.asarray(jax.device_get(seg)).reshape(-1)[:L - 1]
        boundaries = np.where(seg_np >= 0.5)[0] + 1
        result = np.concatenate([[0], boundaries, [L]]).astype(np.int32)
        starts, ends = result[:-1], result[1:]

        lstm_out = h_all[jnp.asarray(ends - 1), :HIDDEN]                # (n_seg, 100)
        morph_char = [word[s:e] for s, e in zip(starts, ends)]
        return lstm_out, morph_char


if __name__ == "__main__":
    # synthetic vocab setup (replaces the module-level full_sent / word_vocab globals)
    full_sent = "the quick brown fox jumps over the lazy dog"
    character_vocab = sorted(set(full_sent))
    char_len = len(character_vocab)
    char_to_idx = {c: i for i, c in enumerate(character_vocab)}
    word_len = 16  # word-embedding table is unused in forward

    model = MyModelPallas(char_to_idx, char_len, word_len)

    # Multi-character path (L=8 -> lpad=16 bucket).
    word = "blowfish"
    lstm_out, morph_char = model.forward(word)
    lstm_out = jax.block_until_ready(lstm_out)
    assert lstm_out.ndim == 2 and lstm_out.shape[1] == HIDDEN
    assert lstm_out.shape[0] == len(morph_char)
    assert "".join(morph_char) == word

    # Another word in the lpad=8 bucket (exercises bucket reuse, no recompile for "a").
    out2, morph2 = model.forward("dog")
    out2 = jax.block_until_ready(out2)
    assert out2.shape[1] == HIDDEN and "".join(morph2) == "dog"

    # Single-character branch.
    out1, m1 = model.forward("a")
    out1 = jax.block_until_ready(out1)
    assert out1.shape == (1, HIDDEN) and m1 == "a"

    print("KERNEL_OK")
</pallas_src>

<mosaic_0001>
module attributes {stable_mosaic.version = 11 : i64} {
  func.func @_fused_kernel(%arg0: memref<1xi32, #tpu.memory_space<smem>>, %arg1: memref<5xf32, #tpu.memory_space<smem>>, %arg2: memref<16x32xf32, #tpu.memory_space<vmem>>, %arg3: memref<12x32x32xf32, #tpu.memory_space<vmem>>, %arg4: memref<2x32xf32, #tpu.memory_space<vmem>>, %arg5: memref<32x512xbf16, #tpu.memory_space<vmem>>, %arg6: memref<128x512xbf16, #tpu.memory_space<vmem>>, %arg7: memref<1x512xf32, #tpu.memory_space<vmem>>, %arg8: memref<16x1xf32, #tpu.memory_space<vmem>>, %arg9: memref<16x128xf32, #tpu.memory_space<vmem>>, %arg10: memref<16x512xf32, #tpu.memory_space<vmem>>, %arg11: memref<16x128xf32, #tpu.memory_space<vmem>>) attributes {dimension_semantics = [], scalar_prefetch = 0 : i64, scratch_operands = 2 : i64, tpu.core_type = #tpu.core_type<tc>} {
    %c0 = arith.constant 0 : index
    %0 = memref.load %arg0[%c0] : memref<1xi32, #tpu.memory_space<smem>>
    %1 = tpu.iota {dimensions = array<i32: 0>} : vector<16x1xi32>
    %2 = vector.broadcast %0 : i32 to vector<16x1xi32>
    %3 = arith.cmpi slt, %1, %2 : vector<16x1xi32>
    %4 = arith.extui %3 : vector<16x1xi1> to vector<16x1xi32>
    %5 = arith.sitofp %4 : vector<16x1xi32> to vector<16x1xf32>
    %c0_0 = arith.constant 0 : index
    %c0_1 = arith.constant 0 : index
    %6 = vector.load %arg2[%c0_0, %c0_1] : memref<16x32xf32, #tpu.memory_space<vmem>>, vector<16x32xf32>
    %7 = vector.broadcast %5 : vector<16x1xf32> to vector<16x32xf32>
    %8 = arith.mulf %6, %7 : vector<16x32xf32>
    %c1_i32 = arith.constant 1 : i32
    %9 = tpu.dynamic_rotate %8 by %c1_i32 dim 0 : vector<16x32xf32>, i32 -> vector<16x32xf32>
    %c15_i32 = arith.constant 15 : i32
    %10 = tpu.dynamic_rotate %8 by %c15_i32 dim 0 : vector<16x32xf32>, i32 -> vector<16x32xf32>
    %c0_2 = arith.constant 0 : index
    %c0_3 = arith.constant 0 : index
    %c0_4 = arith.constant 0 : index
    %11 = vector.load %arg3[%c0_2, %c0_3, %c0_4] : memref<12x32x32xf32, #tpu.memory_space<vmem>>, vector<1x32x32xf32>
    %12 = vector.shape_cast %11 : vector<1x32x32xf32> to vector<32x32xf32>
    %cst = arith.constant dense<0.000000e+00> : vector<16x32xf32>
    %13 = tpu.matmul %9, %12, %cst {dimension_numbers = #tpu.dot_dimension_numbers<[1], [0], [0], [1], [0, 0, 1, 1], [], []>} : vector<16x32xf32>, vector<32x32xf32>, vector<16x32xf32> -> vector<16x32xf32>
    %c1 = arith.constant 1 : index
    %c0_5 = arith.constant 0 : index
    %c0_6 = arith.constant 0 : index
    %14 = vector.load %arg3[%c1, %c0_5, %c0_6] : memref<12x32x32xf32, #tpu.memory_space<vmem>>, vector<1x32x32xf32>
    %15 = vector.shape_cast %14 : vector<1x32x32xf32> to vector<32x32xf32>
    %cst_7 = arith.constant dense<0.000000e+00> : vector<16x32xf32>
    %16 = tpu.matmul %8, %15, %cst_7 {dimension_numbers = #tpu.dot_dimension_numbers<[1], [0], [0], [1], [0, 0, 1, 1], [], []>} : vector<16x32xf32>, vector<32x32xf32>, vector<16x32xf32> -> vector<16x32xf32>
    %17 = arith.addf %13, %16 : vector<16x32xf32>
    %c2 = arith.constant 2 : index
    %c0_8 = arith.constant 0 : index
    %c0_9 = arith.constant 0 : index
    %18 = vector.load %arg3[%c2, %c0_8, %c0_9] : memref<12x32x32xf32, #tpu.memory_space<vmem>>, vector<1x32x32xf32>
    %19 = vector.shape_cast %18 : vector<1x32x32xf32> to vector<32x32xf32>
    %cst_10 = arith.constant dense<0.000000e+00> : vector<16x32xf32>
    %20 = tpu.matmul %10, %19, %cst_10 {dimension_numbers = #tpu.dot_dimension_numbers<[1], [0], [0], [1], [0, 0, 1, 1], [], []>} : vector<16x32xf32>, vector<32x32xf32>, vector<16x32xf32> -> vector<16x32xf32>
    %21 = arith.addf %17, %20 : vector<16x32xf32>
    %c0_11 = arith.constant 0 : index
    %22 = memref.load %arg1[%c0_11] : memref<5xf32, #tpu.memory_space<smem>>
    %23 = vector.broadcast %22 : f32 to vector<16x32xf32>
    %24 = arith.addf %21, %23 : vector<16x32xf32>
    %cst_12 = arith.constant 0.000000e+00 : f32
    %25 = vector.broadcast %cst_12 : f32 to vector<16x32xf32>
    %26 = arith.maximumf %24, %25 : vector<16x32xf32>
    %27 = vector.broadcast %5 : vector<16x1xf32> to vector<16x32xf32>
    %28 = arith.mulf %26, %27 : vector<16x32xf32>
    %c1_i32_13 = arith.constant 1 : i32
    %29 = tpu.dynamic_rotate %28 by %c1_i32_13 dim 0 : vector<16x32xf32>, i32 -> vector<16x32xf32>
    %c15_i32_14 = arith.constant 15 : i32
    %30 = tpu.dynamic_rotate %28 by %c15_i32_14 dim 0 : vector<16x32xf32>, i32 -> vector<16x32xf32>
    %c3 = arith.constant 3 : index
    %c0_15 = arith.constant 0 : index
    %c0_16 = arith.constant 0 : index
    %31 = vector.load %arg3[%c3, %c0_15, %c0_16] : memref<12x32x32xf32, #tpu.memory_space<vmem>>, vector<1x32x32xf32>
    %32 = vector.shape_cast %31 : vector<1x32x32xf32> to vector<32x32xf32>
    %cst_17 = arith.constant dense<0.000000e+00> : vector<16x32xf32>
    %33 = tpu.matmul %29, %32, %cst_17 {dimension_numbers = #tpu.dot_dimension_numbers<[1], [0], [0], [1], [0, 0, 1, 1], [], []>} : vector<16x32xf32>, vector<32x32xf32>, vector<16x32xf32> -> vector<16x32xf32>
    %c4 = arith.constant 4 : index
    %c0_18 = arith.constant 0 : index
    %c0_19 = arith.constant 0 : index
    %34 = vector.load %arg3[%c4, %c0_18, %c0_19] : memref<12x32x32xf32, #tpu.memory_space<vmem>>, vector<1x32x32xf32>
    %35 = vector.shape_cast %34 : vector<1x32x32xf32> to vector<32x32xf32>
    %cst_20 = arith.constant dense<0.000000e+00> : vector<16x32xf32>
    %36 = tpu.matmul %28, %35, %cst_20 {dimension_numbers = #tpu.dot_dimension_numbers<[1], [0], [0], [1], [0, 0, 1, 1], [], []>} : vector<16x32xf32>, vector<32x32xf32>, vector<16x32xf32> -> vector<16x32xf32>
    %37 = arith.addf %33, %36 : vector<16x32xf32>
    %c5 = arith.constant 5 : index
    %c0_21 = arith.constant 0 : index
    %c0_22 = arith.constant 0 : index
    %38 = vector.load %arg3[%c5, %c0_21, %c0_22] : memref<12x32x32xf32, #tpu.memory_space<vmem>>, vector<1x32x32xf32>
    %39 = vector.shape_cast %38 : vector<1x32x32xf32> to vector<32x32xf32>
    %cst_23 = arith.constant dense<0.000000e+00> : vector<16x32xf32>
    %40 = tpu.matmul %30, %39, %cst_23 {dimension_numbers = #tpu.dot_dimension_numbers<[1], [0], [0], [1], [0, 0, 1, 1], [], []>} : vector<16x32xf32>, vector<32x32xf32>, vector<16x32xf32> -> vector<16x32xf32>
    %41 = arith.addf %37, %40 : vector<16x32xf32>
    %c1_24 = arith.constant 1 : index
    %42 = memref.load %arg1[%c1_24] : memref<5xf32, #tpu.memory_space<smem>>
    %43 = vector.broadcast %42 : f32 to vector<16x32xf32>
    %44 = arith.addf %41, %43 : vector<16x32xf32>
    %cst_25 = arith.constant 0.000000e+00 : f32
    %45 = vector.broadcast %cst_25 : f32 to vector<16x32xf32>
    %46 = arith.maximumf %44, %45 : vector<16x32xf32>
    %47 = vector.broadcast %5 : vector<16x1xf32> to vector<16x32xf32>
    %48 = arith.mulf %46, %47 : vector<16x32xf32>
    %c1_i32_26 = arith.constant 1 : i32
    %49 = tpu.dynamic_rotate %48 by %c1_i32_26 dim 0 : vector<16x32xf32>, i32 -> vector<16x32xf32>
    %c15_i32_27 = arith.constant 15 : i32
    %50 = tpu.dynamic_rotate %48 by %c15_i32_27 dim 0 : vector<16x32xf32>, i32 -> vector<16x32xf32>
    %c6 = arith.constant 6 : index
    %c0_28 = arith.constant 0 : index
    %c0_29 = arith.constant 0 : index
    %51 = vector.load %arg3[%c6, %c0_28, %c0_29] : memref<12x32x32xf32, #tpu.memory_space<vmem>>, vector<1x32x32xf32>
    %52 = vector.shape_cast %51 : vector<1x32x32xf32> to vector<32x32xf32>
    %cst_30 = arith.constant dense<0.000000e+00> : vector<16x32xf32>
    %53 = tpu.matmul %49, %52, %cst_30 {dimension_numbers = #tpu.dot_dimension_numbers<[1], [0], [0], [1], [0, 0, 1, 1], [], []>} : vector<16x32xf32>, vector<32x32xf32>, vector<16x32xf32> -> vector<16x32xf32>
    %c7 = arith.constant 7 : index
    %c0_31 = arith.constant 0 : index
    %c0_32 = arith.constant 0 : index
    %54 = vector.load %arg3[%c7, %c0_31, %c0_32] : memref<12x32x32xf32, #tpu.memory_space<vmem>>, vector<1x32x32xf32>
    %55 = vector.shape_cast %54 : vector<1x32x32xf32> to vector<32x32xf32>
    %cst_33 = arith.constant dense<0.000000e+00> : vector<16x32xf32>
    %56 = tpu.matmul %48, %55, %cst_33 {dimension_numbers = #tpu.dot_dimension_numbers<[1], [0], [0], [1], [0, 0, 1, 1], [], []>} : vector<16x32xf32>, vector<32x32xf32>, vector<16x32xf32> -> vector<16x32xf32>
    %57 = arith.addf %53, %56 : vector<16x32xf32>
    %c8 = arith.constant 8 : index
    %c0_34 = arith.constant 0 : index
    %c0_35 = arith.constant 0 : index
    %58 = vector.load %arg3[%c8, %c0_34, %c0_35] : memref<12x32x32xf32, #tpu.memory_space<vmem>>, vector<1x32x32xf32>
    %59 = vector.shape_cast %58 : vector<1x32x32xf32> to vector<32x32xf32>
    %cst_36 = arith.constant dense<0.000000e+00> : vector<16x32xf32>
    %60 = tpu.matmul %50, %59, %cst_36 {dimension_numbers = #tpu.dot_dimension_numbers<[1], [0], [0], [1], [0, 0, 1, 1], [], []>} : vector<16x32xf32>, vector<32x32xf32>, vector<16x32xf32> -> vector<16x32xf32>
    %61 = arith.addf %57, %60 : vector<16x32xf32>
    %c2_37 = arith.constant 2 : index
    %62 = memref.load %arg1[%c2_37] : memref<5xf32, #tpu.memory_space<smem>>
    %63 = vector.broadcast %62 : f32 to vector<16x32xf32>
    %64 = arith.addf %61, %63 : vector<16x32xf32>
    %cst_38 = arith.constant 0.000000e+00 : f32
    %65 = vector.broadcast %cst_38 : f32 to vector<16x32xf32>
    %66 = arith.maximumf %64, %65 : vector<16x32xf32>
    %67 = vector.broadcast %5 : vector<16x1xf32> to vector<16x32xf32>
    %68 = arith.mulf %66, %67 : vector<16x32xf32>
    %c1_i32_39 = arith.constant 1 : i32
    %69 = tpu.dynamic_rotate %68 by %c1_i32_39 dim 0 : vector<16x32xf32>, i32 -> vector<16x32xf32>
    %c15_i32_40 = arith.constant 15 : i32
    %70 = tpu.dynamic_rotate %68 by %c15_i32_40 dim 0 : vector<16x32xf32>, i32 -> vector<16x32xf32>
    %c9 = arith.constant 9 : index
    %c0_41 = arith.constant 0 : index
    %c0_42 = arith.constant 0 : index
    %71 = vector.load %arg3[%c9, %c0_41, %c0_42] : memref<12x32x32xf32, #tpu.memory_space<vmem>>, vector<1x32x32xf32>
    %72 = vector.shape_cast %71 : vector<1x32x32xf32> to vector<32x32xf32>
    %cst_43 = arith.constant dense<0.000000e+00> : vector<16x32xf32>
    %73 = tpu.matmul %69, %72, %cst_43 {dimension_numbers = #tpu.dot_dimension_numbers<[1], [0], [0], [1], [0, 0, 1, 1], [], []>} : vector<16x32xf32>, vector<32x32xf32>, vector<16x32xf32> -> vector<16x32xf32>
    %c10 = arith.constant 10 : index
    %c0_44 = arith.constant 0 : index
    %c0_45 = arith.constant 0 : index
    %74 = vector.load %arg3[%c10, %c0_44, %c0_45] : memref<12x32x32xf32, #tpu.memory_space<vmem>>, vector<1x32x32xf32>
    %75 = vector.shape_cast %74 : vector<1x32x32xf32> to vector<32x32xf32>
    %cst_46 = arith.constant dense<0.000000e+00> : vector<16x32xf32>
    %76 = tpu.matmul %68, %75, %cst_46 {dimension_numbers = #tpu.dot_dimension_numbers<[1], [0], [0], [1], [0, 0, 1, 1], [], []>} : vector<16x32xf32>, vector<32x32xf32>, vector<16x32xf32> -> vector<16x32xf32>
    %77 = arith.addf %73, %76 : vector<16x32xf32>
    %c11 = arith.constant 11 : index
    %c0_47 = arith.constant 0 : index
    %c0_48 = arith.constant 0 : index
    %78 = vector.load %arg3[%c11, %c0_47, %c0_48] : memref<12x32x32xf32, #tpu.memory_space<vmem>>, vector<1x32x32xf32>
    %79 = vector.shape_cast %78 : vector<1x32x32xf32> to vector<32x32xf32>
    %cst_49 = arith.constant dense<0.000000e+00> : vector<16x32xf32>
    %80 = tpu.matmul %70, %79, %cst_49 {dimension_numbers = #tpu.dot_dimension_numbers<[1], [0], [0], [1], [0, 0, 1, 1], [], []>} : vector<16x32xf32>, vector<32x32xf32>, vector<16x32xf32> -> vector<16x32xf32>
    %81 = arith.addf %77, %80 : vector<16x32xf32>
    %c3_50 = arith.constant 3 : index
    %82 = memref.load %arg1[%c3_50] : memref<5xf32, #tpu.memory_space<smem>>
    %83 = vector.broadcast %82 : f32 to vector<16x32xf32>
    %84 = arith.addf %81, %83 : vector<16x32xf32>
    %cst_51 = arith.constant 0.000000e+00 : f32
    %85 = vector.broadcast %cst_51 : f32 to vector<16x32xf32>
    %86 = arith.maximumf %84, %85 : vector<16x32xf32>
    %87 = vector.broadcast %5 : vector<16x1xf32> to vector<16x32xf32>
    %88 = arith.mulf %86, %87 : vector<16x32xf32>
    %c15_i32_52 = arith.constant 15 : i32
    %89 = tpu.dynamic_rotate %88 by %c15_i32_52 dim 0 : vector<16x32xf32>, i32 -> vector<16x32xf32>
    %c0_53 = arith.constant 0 : index
    %c0_54 = arith.constant 0 : index
    %90 = vector.load %arg4[%c0_53, %c0_54] : memref<2x32xf32, #tpu.memory_space<vmem>>, vector<1x32xf32>
    %91 = vector.broadcast %90 : vector<1x32xf32> to vector<16x32xf32>
    %92 = arith.mulf %88, %91 : vector<16x32xf32>
    %cst_55 = arith.constant dense<0.000000e+00> : vector<16xf32>
    %93 = vector.multi_reduction <add>, %92, %cst_55 [1] : vector<16x32xf32> to vector<16xf32>
    %94 = vector.shape_cast %93 : vector<16xf32> to vector<16x1xf32>
    %c1_56 = arith.constant 1 : index
    %c0_57 = arith.constant 0 : index
    %95 = vector.load %arg4[%c1_56, %c0_57] : memref<2x32xf32, #tpu.memory_space<vmem>>, vector<1x32xf32>
    %96 = vector.broadcast %95 : vector<1x32xf32> to vector<16x32xf32>
    %97 = arith.mulf %89, %96 : vector<16x32xf32>
    %cst_58 = arith.constant dense<0.000000e+00> : vector<16xf32>
    %98 = vector.multi_reduction <add>, %97, %cst_58 [1] : vector<16x32xf32> to vector<16xf32>
    %99 = vector.shape_cast %98 : vector<16xf32> to vector<16x1xf32>
    %100 = arith.addf %94, %99 : vector<16x1xf32>
    %c4_59 = arith.constant 4 : index
    %101 = memref.load %arg1[%c4_59] : memref<5xf32, #tpu.memory_space<smem>>
    %102 = vector.broadcast %101 : f32 to vector<16x1xf32>
    %103 = arith.addf %100, %102 : vector<16x1xf32>
    %104 = arith.negf %103 : vector<16x1xf32>
    %105 = math.exp %104 : vector<16x1xf32>
    %cst_60 = arith.constant 1.000000e+00 : f32
    %106 = vector.broadcast %cst_60 : f32 to vector<16x1xf32>
    %107 = arith.addf %106, %105 : vector<16x1xf32>
    %108 = arith.divf %106, %107 : vector<16x1xf32>
    %c0_61 = arith.constant 0 : index
    %c0_62 = arith.constant 0 : index
    %109 = vector.load %arg8[%c0_61, %c0_62] : memref<16x1xf32, #tpu.memory_space<vmem>>, vector<16x1xf32>
    tpu.vector_store %arg8[%c0_61, %c0_62], %108 {strides = array<i32>} : memref<16x1xf32, #tpu.memory_space<vmem>>, vector<16x1xf32>,
    %cst_63 = arith.constant 5.000000e-01 : f32
    %110 = vector.broadcast %cst_63 : f32 to vector<16x1xf32>
    %111 = arith.cmpf oge, %108, %110 : vector<16x1xf32>
    %cst_64 = arith.constant 0.000000e+00 : f32
    %cst_65 = arith.constant 1.000000e+00 : f32
    %112 = vector.broadcast %cst_64 : f32 to vector<16x1xf32>
    %113 = vector.broadcast %cst_65 : f32 to vector<16x1xf32>
    %114 = arith.select %111, %112, %113 : vector<16x1xi1>, vector<16x1xf32>
    %115 = vector.shape_cast %114 : vector<16x1xf32> to vector<16x1xf32>
    %116 = vector.broadcast %115 : vector<16x1xf32> to vector<16x128xf32>
    %c1_i32_66 = arith.constant 1 : i32
    %117 = tpu.dynamic_rotate %116 by %c1_i32_66 dim 0 : vector<16x128xf32>, i32 -> vector<16x128xf32>
    %c0_i32 = arith.constant 0 : i32
    %118 = vector.broadcast %c0_i32 : i32 to vector<16x1xi32>
    %119 = arith.cmpi eq, %1, %118 : vector<16x1xi32>
    %cst_67 = arith.constant 0.000000e+00 : f32
    %120 = vector.shape_cast %119 : vector<16x1xi1> to vector<16x1xi1>
    %121 = vector.broadcast %120 : vector<16x1xi1> to vector<16x128xi1>
    %122 = vector.broadcast %cst_67 : f32 to vector<16x128xf32>
    %123 = arith.select %121, %122, %117 : vector<16x128xi1>, vector<16x128xf32>
    %c0_68 = arith.constant 0 : index
    %c0_69 = arith.constant 0 : index
    %124 = vector.load %arg11[%c0_68, %c0_69] : memref<16x128xf32, #tpu.memory_space<vmem>>, vector<16x128xf32>
    tpu.vector_store %arg11[%c0_68, %c0_69], %123 {strides = array<i32>} : memref<16x128xf32, #tpu.memory_space<vmem>>, vector<16x128xf32>,
    %c0_70 = arith.constant 0 : index
    %c0_71 = arith.constant 0 : index
    %125 = vector.load %arg2[%c0_70, %c0_71] : memref<16x32xf32, #tpu.memory_space<vmem>>, vector<16x32xf32>
    %126 = arith.truncf %125 : vector<16x32xf32> to vector<16x32xbf16>
    %c0_72 = arith.constant 0 : index
    %c0_73 = arith.constant 0 : index
    %127 = vector.load %arg5[%c0_72, %c0_73] : memref<32x512xbf16, #tpu.memory_space<vmem>>, vector<32x512xbf16>
    %cst_74 = arith.constant dense<0.000000e+00> : vector<16x512xf32>
    %128 = tpu.matmul %126, %127, %cst_74 {dimension_numbers = #tpu.dot_dimension_numbers<[1], [0], [0], [1], [0, 0, 1, 1], [], []>} : vector<16x32xbf16>, vector<32x512xbf16>, vector<16x512xf32> -> vector<16x512xf32>
    %c0_75 = arith.constant 0 : index
    %c0_76 = arith.constant 0 : index
    %129 = vector.load %arg7[%c0_75, %c0_76] : memref<1x512xf32, #tpu.memory_space<vmem>>, vector<1x512xf32>
    %130 = vector.broadcast %129 : vector<1x512xf32> to vector<16x512xf32>
    %131 = arith.addf %128, %130 : vector<16x512xf32>
    %c0_77 = arith.constant 0 : index
    %c0_78 = arith.constant 0 : index
    %132 = vector.load %arg10[%c0_77, %c0_78] : memref<16x512xf32, #tpu.memory_space<vmem>>, vector<16x512xf32>
    tpu.vector_store %arg10[%c0_77, %c0_78], %131 {strides = array<i32>} : memref<16x512xf32, #tpu.memory_space<vmem>>, vector<16x512xf32>,
    %cst_79 = arith.constant 0.000000e+00 : f32
    %133 = vector.broadcast %cst_79 : f32 to vector<1x128xf32>
    %c7_i32 = arith.constant 7 : i32
    %134 = arith.addi %0, %c7_i32 : i32
    %c8_i32 = arith.constant 8 : i32
    %135 = arith.divsi %134, %c8_i32 : i32
    %c0_i32_80 = arith.constant 0 : i32
    %136 = arith.subi %135, %c0_i32_80 : i32
    %137 = arith.addi %c0_i32_80, %136 : i32
    %c1_i32_81 = arith.constant 1 : i32
    %138:2 = scf.for %arg12 = %c0_i32_80 to %137 step %c1_i32_81 iter_args(%arg13 = %133, %arg14 = %133) -> (vector<1x128xf32>, vector<1x128xf32>)  : i32 {
      %c8_i32_82 = arith.constant 8 : i32
      %139 = arith.muli %arg12, %c8_i32_82 : i32
      %140 = tpu.assume_multiple %139, 8 : i32
      %141 = arith.index_cast %140 : i32 to index
      %c0_83 = arith.constant 0 : index
      %142 = vector.load %arg10[%141, %c0_83] : memref<16x512xf32, #tpu.memory_space<vmem>>, vector<8x512xf32>
      %143 = arith.index_cast %140 : i32 to index
      %c0_84 = arith.constant 0 : index
      %144 = vector.load %arg11[%143, %c0_84] : memref<16x128xf32, #tpu.memory_space<vmem>>, vector<8x128xf32>
      %145 = vector.extract_strided_slice %144 {offsets = [0, 0], sizes = [1, 128], strides = [1, 1]} : vector<8x128xf32> to vector<1x128xf32>
      %146 = arith.mulf %arg13, %145 : vector<1x128xf32>
      %147 = arith.mulf %arg14, %145 : vector<1x128xf32>
      %148 = vector.extract_strided_slice %142 {offsets = [0, 0], sizes = [1, 512], strides = [1, 1]} : vector<8x512xf32> to vector<1x512xf32>
      %149 = arith.truncf %146 : vector<1x128xf32> to vector<1x128xbf16>
      %c0_85 = arith.constant 0 : index
      %c0_86 = arith.constant 0 : index
      %150 = vector.load %arg6[%c0_85, %c0_86] : memref<128x512xbf16, #tpu.memory_space<vmem>>, vector<128x512xbf16>
      %cst_87 = arith.constant dense<0.000000e+00> : vector<1x512xf32>
      %151 = tpu.matmul %149, %150, %cst_87 {dimension_numbers = #tpu.dot_dimension_numbers<[1], [0], [0], [1], [0, 0, 1, 1], [], []>} : vector<1x128xbf16>, vector<128x512xbf16>, vector<1x512xf32> -> vector<1x512xf32>
      %152 = arith.addf %148, %151 : vector<1x512xf32>
      %153 = vector.extract_strided_slice %152 {offsets = [0, 0], sizes = [1, 128], strides = [1, 1]} : vector<1x512xf32> to vector<1x128xf32>
      %154 = arith.negf %153 : vector<1x128xf32>
      %155 = math.exp %154 : vector<1x128xf32>
      %cst_88 = arith.constant 1.000000e+00 : f32
      %156 = vector.broadcast %cst_88 : f32 to vector<1x128xf32>
      %157 = arith.addf %156, %155 : vector<1x128xf32>
      %158 = arith.divf %156, %157 : vector<1x128xf32>
      %159 = vector.extract_strided_slice %152 {offsets = [0, 128], sizes = [1, 128], strides = [1, 1]} : vector<1x512xf32> to vector<1x128xf32>
      %160 = arith.negf %159 : vector<1x128xf32>
      %161 = math.exp %160 : vector<1x128xf32>
      %cst_89 = arith.constant 1.000000e+00 : f32
      %162 = vector.broadcast %cst_89 : f32 to vector<1x128xf32>
      %163 = arith.addf %162, %161 : vector<1x128xf32>
      %164 = arith.divf %162, %163 : vector<1x128xf32>
      %165 = vector.extract_strided_slice %152 {offsets = [0, 256], sizes = [1, 128], strides = [1, 1]} : vector<1x512xf32> to vector<1x128xf32>
      %166 = math.tanh %165 : vector<1x128xf32>
      %167 = vector.extract_strided_slice %152 {offsets = [0, 384], sizes = [1, 128], strides = [1, 1]} : vector<1x512xf32> to vector<1x128xf32>
      %168 = arith.negf %167 : vector<1x128xf32>
      %169 = math.exp %168 : vector<1x128xf32>
      %cst_90 = arith.constant 1.000000e+00 : f32
      %170 = vector.broadcast %cst_90 : f32 to vector<1x128xf32>
      %171 = arith.addf %170, %169 : vector<1x128xf32>
      %172 = arith.divf %170, %171 : vector<1x128xf32>
      %173 = arith.mulf %164, %147 : vector<1x128xf32>
      %174 = arith.mulf %158, %166 : vector<1x128xf32>
      %175 = arith.addf %173, %174 : vector<1x128xf32>
      %176 = math.tanh %175 : vector<1x128xf32>
      %177 = arith.mulf %172, %176 : vector<1x128xf32>
      %178 = vector.extract_strided_slice %144 {offsets = [1, 0], sizes = [1, 128], strides = [1, 1]} : vector<8x128xf32> to vector<1x128xf32>
      %179 = arith.mulf %177, %178 : vector<1x128xf32>
      %180 = arith.mulf %175, %178 : vector<1x128xf32>
      %181 = vector.extract_strided_slice %142 {offsets = [1, 0], sizes = [1, 512], strides = [1, 1]} : vector<8x512xf32> to vector<1x512xf32>
      %182 = arith.truncf %179 : vector<1x128xf32> to vector<1x128xbf16>
      %c0_91 = arith.constant 0 : index
      %c0_92 = arith.constant 0 : index
      %183 = vector.load %arg6[%c0_91, %c0_92] : memref<128x512xbf16, #tpu.memory_space<vmem>>, vector<128x512xbf16>
      %cst_93 = arith.constant dense<0.000000e+00> : vector<1x512xf32>
      %184 = tpu.matmul %182, %183, %cst_93 {dimension_numbers = #tpu.dot_dimension_numbers<[1], [0], [0], [1], [0, 0, 1, 1], [], []>} : vector<1x128xbf16>, vector<128x512xbf16>, vector<1x512xf32> -> vector<1x512xf32>
      %185 = arith.addf %181, %184 : vector<1x512xf32>
      %186 = vector.extract_strided_slice %185 {offsets = [0, 0], sizes = [1, 128], strides = [1, 1]} : vector<1x512xf32> to vector<1x128xf32>
      %187 = arith.negf %186 : vector<1x128xf32>
      %188 = math.exp %187 : vector<1x128xf32>
      %cst_94 = arith.constant 1.000000e+00 : f32
      %189 = vector.broadcast %cst_94 : f32 to vector<1x128xf32>
      %190 = arith.addf %189, %188 : vector<1x128xf32>
      %191 = arith.divf %189, %190 : vector<1x128xf32>
      %192 = vector.extract_strided_slice %185 {offsets = [0, 128], sizes = [1, 128], strides = [1, 1]} : vector<1x512xf32> to vector<1x128xf32>
      %193 = arith.negf %192 : vector<1x128xf32>
      %194 = math.exp %193 : vector<1x128xf32>
      %cst_95 = arith.constant 1.000000e+00 : f32
      %195 = vector.broadcast %cst_95 : f32 to vector<1x128xf32>
      %196 = arith.addf %195, %194 : vector<1x128xf32>
      %197 = arith.divf %195, %196 : vector<1x128xf32>
      %198 = vector.extract_strided_slice %185 {offsets = [0, 256], sizes = [1, 128], strides = [1, 1]} : vector<1x512xf32> to vector<1x128xf32>
      %199 = math.tanh %198 : vector<1x128xf32>
      %200 = vector.extract_strided_slice %185 {offsets = [0, 384], sizes = [1, 128], strides = [1, 1]} : vector<1x512xf32> to vector<1x128xf32>
      %201 = arith.negf %200 : vector<1x128xf32>
      %202 = math.exp %201 : vector<1x128xf32>
      %cst_96 = arith.constant 1.000000e+00 : f32
      %203 = vector.broadcast %cst_96 : f32 to vector<1x128xf32>
      %204 = arith.addf %203, %202 : vector<1x128xf32>
      %205 = arith.divf %203, %204 : vector<1x128xf32>
      %206 = arith.mulf %197, %180 : vector<1x128xf32>
      %207 = arith.mulf %191, %199 : vector<1x128xf32>
      %208 = arith.addf %206, %207 : vector<1x128xf32>
      %209 = math.tanh %208 : vector<1x128xf32>
      %210 = arith.mulf %205, %209 : vector<1x128xf32>
      %211 = vector.extract_strided_slice %144 {offsets = [2, 0], sizes = [1, 128], strides = [1, 1]} : vector<8x128xf32> to vector<1x128xf32>
      %212 = arith.mulf %210, %211 : vector<1x128xf32>
      %213 = arith.mulf %208, %211 : vector<1x128xf32>
      %214 = vector.extract_strided_slice %142 {offsets = [2, 0], sizes = [1, 512], strides = [1, 1]} : vector<8x512xf32> to vector<1x512xf32>
      %215 = arith.truncf %212 : vector<1x128xf32> to vector<1x128xbf16>
      %c0_97 = arith.constant 0 : index
      %c0_98 = arith.constant 0 : index
      %216 = vector.load %arg6[%c0_97, %c0_98] : memref<128x512xbf16, #tpu.memory_space<vmem>>, vector<128x512xbf16>
      %cst_99 = arith.constant dense<0.000000e+00> : vector<1x512xf32>
      %217 = tpu.matmul %215, %216, %cst_99 {dimension_numbers = #tpu.dot_dimension_numbers<[1], [0], [0], [1], [0, 0, 1, 1], [], []>} : vector<1x128xbf16>, vector<128x512xbf16>, vector<1x512xf32> -> vector<1x512xf32>
      %218 = arith.addf %214, %217 : vector<1x512xf32>
      %219 = vector.extract_strided_slice %218 {offsets = [0, 0], sizes = [1, 128], strides = [1, 1]} : vector<1x512xf32> to vector<1x128xf32>
      %220 = arith.negf %219 : vector<1x128xf32>
      %221 = math.exp %220 : vector<1x128xf32>
      %cst_100 = arith.constant 1.000000e+00 : f32
      %222 = vector.broadcast %cst_100 : f32 to vector<1x128xf32>
      %223 = arith.addf %222, %221 : vector<1x128xf32>
      %224 = arith.divf %222, %223 : vector<1x128xf32>
      %225 = vector.extract_strided_slice %218 {offsets = [0, 128], sizes = [1, 128], strides = [1, 1]} : vector<1x512xf32> to vector<1x128xf32>
      %226 = arith.negf %225 : vector<1x128xf32>
      %227 = math.exp %226 : vector<1x128xf32>
      %cst_101 = arith.constant 1.000000e+00 : f32
      %228 = vector.broadcast %cst_101 : f32 to vector<1x128xf32>
      %229 = arith.addf %228, %227 : vector<1x128xf32>
      %230 = arith.divf %228, %229 : vector<1x128xf32>
      %231 = vector.extract_strided_slice %218 {offsets = [0, 256], sizes = [1, 128], strides = [1, 1]} : vector<1x512xf32> to vector<1x128xf32>
      %232 = math.tanh %231 : vector<1x128xf32>
      %233 = vector.extract_strided_slice %218 {offsets = [0, 384], sizes = [1, 128], strides = [1, 1]} : vector<1x512xf32> to vector<1x128xf32>
      %234 = arith.negf %233 : vector<1x128xf32>
      %235 = math.exp %234 : vector<1x128xf32>
      %cst_102 = arith.constant 1.000000e+00 : f32
      %236 = vector.broadcast %cst_102 : f32 to vector<1x128xf32>
      %237 = arith.addf %236, %235 : vector<1x128xf32>
      %238 = arith.divf %236, %237 : vector<1x128xf32>
      %239 = arith.mulf %230, %213 : vector<1x128xf32>
      %240 = arith.mulf %224, %232 : vector<1x128xf32>
      %241 = arith.addf %239, %240 : vector<1x128xf32>
      %242 = math.tanh %241 : vector<1x128xf32>
      %243 = arith.mulf %238, %242 : vector<1x128xf32>
      %244 = vector.extract_strided_slice %144 {offsets = [3, 0], sizes = [1, 128], strides = [1, 1]} : vector<8x128xf32> to vector<1x128xf32>
      %245 = arith.mulf %243, %244 : vector<1x128xf32>
      %246 = arith.mulf %241, %244 : vector<1x128xf32>
      %247 = vector.extract_strided_slice %142 {offsets = [3, 0], sizes = [1, 512], strides = [1, 1]} : vector<8x512xf32> to vector<1x512xf32>
      %248 = arith.truncf %245 : vector<1x128xf32> to vector<1x128xbf16>
      %c0_103 = arith.constant 0 : index
      %c0_104 = arith.constant 0 : index
      %249 = vector.load %arg6[%c0_103, %c0_104] : memref<128x512xbf16, #tpu.memory_space<vmem>>, vector<128x512xbf16>
      %cst_105 = arith.constant dense<0.000000e+00> : vector<1x512xf32>
      %250 = tpu.matmul %248, %249, %cst_105 {dimension_numbers = #tpu.dot_dimension_numbers<[1], [0], [0], [1], [0, 0, 1, 1], [], []>} : vector<1x128xbf16>, vector<128x512xbf16>, vector<1x512xf32> -> vector<1x512xf32>
      %251 = arith.addf %247, %250 : vector<1x512xf32>
      %252 = vector.extract_strided_slice %251 {offsets = [0, 0], sizes = [1, 128], strides = [1, 1]} : vector<1x512xf32> to vector<1x128xf32>
      %253 = arith.negf %252 : vector<1x128xf32>
      %254 = math.exp %253 : vector<1x128xf32>
      %cst_106 = arith.constant 1.000000e+00 : f32
      %255 = vector.broadcast %cst_106 : f32 to vector<1x128xf32>
      %256 = arith.addf %255, %254 : vector<1x128xf32>
      %257 = arith.divf %255, %256 : vector<1x128xf32>
      %258 = vector.extract_strided_slice %251 {offsets = [0, 128], sizes = [1, 128], strides = [1, 1]} : vector<1x512xf32> to vector<1x128xf32>
      %259 = arith.negf %258 : vector<1x128xf32>
      %260 = math.exp %259 : vector<1x128xf32>
      %cst_107 = arith.constant 1.000000e+00 : f32
      %261 = vector.broadcast %cst_107 : f32 to vector<1x128xf32>
      %262 = arith.addf %261, %260 : vector<1x128xf32>
      %263 = arith.divf %261, %262 : vector<1x128xf32>
      %264 = vector.extract_strided_slice %251 {offsets = [0, 256], sizes = [1, 128], strides = [1, 1]} : vector<1x512xf32> to vector<1x128xf32>
      %265 = math.tanh %264 : vector<1x128xf32>
      %266 = vector.extract_strided_slice %251 {offsets = [0, 384], sizes = [1, 128], strides = [1, 1]} : vector<1x512xf32> to vector<1x128xf32>
      %267 = arith.negf %266 : vector<1x128xf32>
      %268 = math.exp %267 : vector<1x128xf32>
      %cst_108 = arith.constant 1.000000e+00 : f32
      %269 = vector.broadcast %cst_108 : f32 to vector<1x128xf32>
      %270 = arith.addf %269, %268 : vector<1x128xf32>
      %271 = arith.divf %269, %270 : vector<1x128xf32>
      %272 = arith.mulf %263, %246 : vector<1x128xf32>
      %273 = arith.mulf %257, %265 : vector<1x128xf32>
      %274 = arith.addf %272, %273 : vector<1x128xf32>
      %275 = math.tanh %274 : vector<1x128xf32>
      %276 = arith.mulf %271, %275 : vector<1x128xf32>
      %277 = vector.extract_strided_slice %144 {offsets = [4, 0], sizes = [1, 128], strides = [1, 1]} : vector<8x128xf32> to vector<1x128xf32>
      %278 = arith.mulf %276, %277 : vector<1x128xf32>
      %279 = arith.mulf %274, %277 : vector<1x128xf32>
      %280 = vector.extract_strided_slice %142 {offsets = [4, 0], sizes = [1, 512], strides = [1, 1]} : vector<8x512xf32> to vector<1x512xf32>
      %281 = arith.truncf %278 : vector<1x128xf32> to vector<1x128xbf16>
      %c0_109 = arith.constant 0 : index
      %c0_110 = arith.constant 0 : index
      %282 = vector.load %arg6[%c0_109, %c0_110] : memref<128x512xbf16, #tpu.memory_space<vmem>>, vector<128x512xbf16>
      %cst_111 = arith.constant dense<0.000000e+00> : vector<1x512xf32>
      %283 = tpu.matmul %281, %282, %cst_111 {dimension_numbers = #tpu.dot_dimension_numbers<[1], [0], [0], [1], [0, 0, 1, 1], [], []>} : vector<1x128xbf16>, vector<128x512xbf16>, vector<1x512xf32> -> vector<1x512xf32>
      %284 = arith.addf %280, %283 : vector<1x512xf32>
      %285 = vector.extract_strided_slice %284 {offsets = [0, 0], sizes = [1, 128], strides = [1, 1]} : vector<1x512xf32> to vector<1x128xf32>
      %286 = arith.negf %285 : vector<1x128xf32>
      %287 = math.exp %286 : vector<1x128xf32>
      %cst_112 = arith.constant 1.000000e+00 : f32
      %288 = vector.broadcast %cst_112 : f32 to vector<1x128xf32>
      %289 = arith.addf %288, %287 : vector<1x128xf32>
      %290 = arith.divf %288, %289 : vector<1x128xf32>
      %291 = vector.extract_strided_slice %284 {offsets = [0, 128], sizes = [1, 128], strides = [1, 1]} : vector<1x512xf32> to vector<1x128xf32>
      %292 = arith.negf %291 : vector<1x128xf32>
      %293 = math.exp %292 : vector<1x128xf32>
      %cst_113 = arith.constant 1.000000e+00 : f32
      %294 = vector.broadcast %cst_113 : f32 to vector<1x128xf32>
      %295 = arith.addf %294, %293 : vector<1x128xf32>
      %296 = arith.divf %294, %295 : vector<1x128xf32>
      %297 = vector.extract_strided_slice %284 {offsets = [0, 256], sizes = [1, 128], strides = [1, 1]} : vector<1x512xf32> to vector<1x128xf32>
      %298 = math.tanh %297 : vector<1x128xf32>
      %299 = vector.extract_strided_slice %284 {offsets = [0, 384], sizes = [1, 128], strides = [1, 1]} : vector<1x512xf32> to vector<1x128xf32>
      %300 = arith.negf %299 : vector<1x128xf32>
      %301 = math.exp %300 : vector<1x128xf32>
      %cst_114 = arith.constant 1.000000e+00 : f32
      %302 = vector.broadcast %cst_114 : f32 to vector<1x128xf32>
      %303 = arith.addf %302, %301 : vector<1x128xf32>
      %304 = arith.divf %302, %303 : vector<1x128xf32>
      %305 = arith.mulf %296, %279 : vector<1x128xf32>
      %306 = arith.mulf %290, %298 : vector<1x128xf32>
      %307 = arith.addf %305, %306 : vector<1x128xf32>
      %308 = math.tanh %307 : vector<1x128xf32>
      %309 = arith.mulf %304, %308 : vector<1x128xf32>
      %310 = vector.extract_strided_slice %144 {offsets = [5, 0], sizes = [1, 128], strides = [1, 1]} : vector<8x128xf32> to vector<1x128xf32>
      %311 = arith.mulf %309, %310 : vector<1x128xf32>
      %312 = arith.mulf %307, %310 : vector<1x128xf32>
      %313 = vector.extract_strided_slice %142 {offsets = [5, 0], sizes = [1, 512], strides = [1, 1]} : vector<8x512xf32> to vector<1x512xf32>
      %314 = arith.truncf %311 : vector<1x128xf32> to vector<1x128xbf16>
      %c0_115 = arith.constant 0 : index
      %c0_116 = arith.constant 0 : index
      %315 = vector.load %arg6[%c0_115, %c0_116] : memref<128x512xbf16, #tpu.memory_space<vmem>>, vector<128x512xbf16>
      %cst_117 = arith.constant dense<0.000000e+00> : vector<1x512xf32>
      %316 = tpu.matmul %314, %315, %cst_117 {dimension_numbers = #tpu.dot_dimension_numbers<[1], [0], [0], [1], [0, 0, 1, 1], [], []>} : vector<1x128xbf16>, vector<128x512xbf16>, vector<1x512xf32> -> vector<1x512xf32>
      %317 = arith.addf %313, %316 : vector<1x512xf32>
      %318 = vector.extract_strided_slice %317 {offsets = [0, 0], sizes = [1, 128], strides = [1, 1]} : vector<1x512xf32> to vector<1x128xf32>
      %319 = arith.negf %318 : vector<1x128xf32>
      %320 = math.exp %319 : vector<1x128xf32>
      %cst_118 = arith.constant 1.000000e+00 : f32
      %321 = vector.broadcast %cst_118 : f32 to vector<1x128xf32>
      %322 = arith.addf %321, %320 : vector<1x128xf32>
      %323 = arith.divf %321, %322 : vector<1x128xf32>
      %324 = vector.extract_strided_slice %317 {offsets = [0, 128], sizes = [1, 128], strides = [1, 1]} : vector<1x512xf32> to vector<1x128xf32>
      %325 = arith.negf %324 : vector<1x128xf32>
      %326 = math.exp %325 : vector<1x128xf32>
      %cst_119 = arith.constant 1.000000e+00 : f32
      %327 = vector.broadcast %cst_119 : f32 to vector<1x128xf32>
      %328 = arith.addf %327, %326 : vector<1x128xf32>
      %329 = arith.divf %327, %328 : vector<1x128xf32>
      %330 = vector.extract_strided_slice %317 {offsets = [0, 256], sizes = [1, 128], strides = [1, 1]} : vector<1x512xf32> to vector<1x128xf32>
      %331 = math.tanh %330 : vector<1x128xf32>
      %332 = vector.extract_strided_slice %317 {offsets = [0, 384], sizes = [1, 128], strides = [1, 1]} : vector<1x512xf32> to vector<1x128xf32>
      %333 = arith.negf %332 : vector<1x128xf32>
      %334 = math.exp %333 : vector<1x128xf32>
      %cst_120 = arith.constant 1.000000e+00 : f32
      %335 = vector.broadcast %cst_120 : f32 to vector<1x128xf32>
      %336 = arith.addf %335, %334 : vector<1x128xf32>
      %337 = arith.divf %335, %336 : vector<1x128xf32>
      %338 = arith.mulf %329, %312 : vector<1x128xf32>
      %339 = arith.mulf %323, %331 : vector<1x128xf32>
      %340 = arith.addf %338, %339 : vector<1x128xf32>
      %341 = math.tanh %340 : vector<1x128xf32>
      %342 = arith.mulf %337, %341 : vector<1x128xf32>
      %343 = vector.extract_strided_slice %144 {offsets = [6, 0], sizes = [1, 128], strides = [1, 1]} : vector<8x128xf32> to vector<1x128xf32>
      %344 = arith.mulf %342, %343 : vector<1x128xf32>
      %345 = arith.mulf %340, %343 : vector<1x128xf32>
      %346 = vector.extract_strided_slice %142 {offsets = [6, 0], sizes = [1, 512], strides = [1, 1]} : vector<8x512xf32> to vector<1x512xf32>
      %347 = arith.truncf %344 : vector<1x128xf32> to vector<1x128xbf16>
      %c0_121 = arith.constant 0 : index
      %c0_122 = arith.constant 0 : index
      %348 = vector.load %arg6[%c0_121, %c0_122] : memref<128x512xbf16, #tpu.memory_space<vmem>>, vector<128x512xbf16>
      %cst_123 = arith.constant dense<0.000000e+00> : vector<1x512xf32>
      %349 = tpu.matmul %347, %348, %cst_123 {dimension_numbers = #tpu.dot_dimension_numbers<[1], [0], [0], [1], [0, 0, 1, 1], [], []>} : vector<1x128xbf16>, vector<128x512xbf16>, vector<1x512xf32> -> vector<1x512xf32>
      %350 = arith.addf %346, %349 : vector<1x512xf32>
      %351 = vector.extract_strided_slice %350 {offsets = [0, 0], sizes = [1, 128], strides = [1, 1]} : vector<1x512xf32> to vector<1x128xf32>
      %352 = arith.negf %351 : vector<1x128xf32>
      %353 = math.exp %352 : vector<1x128xf32>
      %cst_124 = arith.constant 1.000000e+00 : f32
      %354 = vector.broadcast %cst_124 : f32 to vector<1x128xf32>
      %355 = arith.addf %354, %353 : vector<1x128xf32>
      %356 = arith.divf %354, %355 : vector<1x128xf32>
      %357 = vector.extract_strided_slice %350 {offsets = [0, 128], sizes = [1, 128], strides = [1, 1]} : vector<1x512xf32> to vector<1x128xf32>
      %358 = arith.negf %357 : vector<1x128xf32>
      %359 = math.exp %358 : vector<1x128xf32>
      %cst_125 = arith.constant 1.000000e+00 : f32
      %360 = vector.broadcast %cst_125 : f32 to vector<1x128xf32>
      %361 = arith.addf %360, %359 : vector<1x128xf32>
      %362 = arith.divf %360, %361 : vector<1x128xf32>
      %363 = vector.extract_strided_slice %350 {offsets = [0, 256], sizes = [1, 128], strides = [1, 1]} : vector<1x512xf32> to vector<1x128xf32>
      %364 = math.tanh %363 : vector<1x128xf32>
      %365 = vector.extract_strided_slice %350 {offsets = [0, 384], sizes = [1, 128], strides = [1, 1]} : vector<1x512xf32> to vector<1x128xf32>
      %366 = arith.negf %365 : vector<1x128xf32>
      %367 = math.exp %366 : vector<1x128xf32>
      %cst_126 = arith.constant 1.000000e+00 : f32
      %368 = vector.broadcast %cst_126 : f32 to vector<1x128xf32>
      %369 = arith.addf %368, %367 : vector<1x128xf32>
      %370 = arith.divf %368, %369 : vector<1x128xf32>
      %371 = arith.mulf %362, %345 : vector<1x128xf32>
      %372 = arith.mulf %356, %364 : vector<1x128xf32>
      %373 = arith.addf %371, %372 : vector<1x128xf32>
      %374 = math.tanh %373 : vector<1x128xf32>
      %375 = arith.mulf %370, %374 : vector<1x128xf32>
      %376 = vector.extract_strided_slice %144 {offsets = [7, 0], sizes = [1, 128], strides = [1, 1]} : vector<8x128xf32> to vector<1x128xf32>
      %377 = arith.mulf %375, %376 : vector<1x128xf32>
      %378 = arith.mulf %373, %376 : vector<1x128xf32>
      %379 = vector.extract_strided_slice %142 {offsets = [7, 0], sizes = [1, 512], strides = [1, 1]} : vector<8x512xf32> to vector<1x512xf32>
      %380 = arith.truncf %377 : vector<1x128xf32> to vector<1x128xbf16>
      %c0_127 = arith.constant 0 : index
      %c0_128 = arith.constant 0 : index
      %381 = vector.load %arg6[%c0_127, %c0_128] : memref<128x512xbf16, #tpu.memory_space<vmem>>, vector<128x512xbf16>
      %cst_129 = arith.constant dense<0.000000e+00> : vector<1x512xf32>
      %382 = tpu.matmul %380, %381, %cst_129 {dimension_numbers = #tpu.dot_dimension_numbers<[1], [0], [0], [1], [0, 0, 1, 1], [], []>} : vector<1x128xbf16>, vector<128x512xbf16>, vector<1x512xf32> -> vector<1x512xf32>
      %383 = arith.addf %379, %382 : vector<1x512xf32>
      %384 = vector.extract_strided_slice %383 {offsets = [0, 0], sizes = [1, 128], strides = [1, 1]} : vector<1x512xf32> to vector<1x128xf32>
      %385 = arith.negf %384 : vector<1x128xf32>
      %386 = math.exp %385 : vector<1x128xf32>
      %cst_130 = arith.constant 1.000000e+00 : f32
      %387 = vector.broadcast %cst_130 : f32 to vector<1x128xf32>
      %388 = arith.addf %387, %386 : vector<1x128xf32>
      %389 = arith.divf %387, %388 : vector<1x128xf32>
      %390 = vector.extract_strided_slice %383 {offsets = [0, 128], sizes = [1, 128], strides = [1, 1]} : vector<1x512xf32> to vector<1x128xf32>
      %391 = arith.negf %390 : vector<1x128xf32>
      %392 = math.exp %391 : vector<1x128xf32>
      %cst_131 = arith.constant 1.000000e+00 : f32
      %393 = vector.broadcast %cst_131 : f32 to vector<1x128xf32>
      %394 = arith.addf %393, %392 : vector<1x128xf32>
      %395 = arith.divf %393, %394 : vector<1x128xf32>
      %396 = vector.extract_strided_slice %383 {offsets = [0, 256], sizes = [1, 128], strides = [1, 1]} : vector<1x512xf32> to vector<1x128xf32>
      %397 = math.tanh %396 : vector<1x128xf32>
      %398 = vector.extract_strided_slice %383 {offsets = [0, 384], sizes = [1, 128], strides = [1, 1]} : vector<1x512xf32> to vector<1x128xf32>
      %399 = arith.negf %398 : vector<1x128xf32>
      %400 = math.exp %399 : vector<1x128xf32>
      %cst_132 = arith.constant 1.000000e+00 : f32
      %401 = vector.broadcast %cst_132 : f32 to vector<1x128xf32>
      %402 = arith.addf %401, %400 : vector<1x128xf32>
      %403 = arith.divf %401, %402 : vector<1x128xf32>
      %404 = arith.mulf %395, %378 : vector<1x128xf32>
      %405 = arith.mulf %389, %397 : vector<1x128xf32>
      %406 = arith.addf %404, %405 : vector<1x128xf32>
      %407 = math.tanh %406 : vector<1x128xf32>
      %408 = arith.mulf %403, %407 : vector<1x128xf32>
      %409 = tpu.concatenate %177, %210, %243, %276, %309, %342, %375, %408 in 0 : vector<1x128xf32>, vector<1x128xf32>, vector<1x128xf32>, vector<1x128xf32>, vector<1x128xf32>, vector<1x128xf32>, vector<1x128xf32>, vector<1x128xf32> -> vector<8x128xf32>
      %410 = arith.index_cast %140 : i32 to index
      %c0_133 = arith.constant 0 : index
      %411 = vector.load %arg9[%410, %c0_133] : memref<16x128xf32, #tpu.memory_space<vmem>>, vector<8x128xf32>
      tpu.vector_store %arg9[%410, %c0_133], %409 {strides = array<i32>} : memref<16x128xf32, #tpu.memory_space<vmem>>, vector<8x128xf32>,
      scf.yield %408, %406 : vector<1x128xf32>, vector<1x128xf32>
    }
    return
  }
}

</mosaic_0001>

<llo_original>
// kernel: tpu_custom_call.1
$region0: #{tpu_custom_call.1}
  #allocation0 [shape = 'u32[]', space=smem, size = 0x4, offset = 0x4, fixed_abs, tag = 'smem constant byte address 0x4 - core index']
  #allocation1 [shape = 'u32[144,128]{1,0:T(1,128)}', space=vmem, size = 0x12000, scoped, tag = 'internal scratch']
  #allocation2 [shape = 'f32[16,512]{1,0:T(8,128)}', space=vmem, size = 0x8000, scoped, tag = 'scratch operand']
  #allocation3 [shape = 'f32[16,128]{1,0:T(8,128)}', space=vmem, size = 0x2000, scoped, tag = 'scratch operand']
  #allocation4 [shape = 's32[1]{0:T(128)S(6)}', space=smem, size = 0x200, scoped, tag = 'scoped memory for tpu_custom_call.1']
  %s0 = inlined_call_operand.<no memory space> [shape: s32[1], index: 0, kind: input, shape index: {}]
  %s1 = inlined_call_operand.vmem [shape: f32[5], index: 1, kind: input, shape index: {}]
  %s2 = inlined_call_operand.hbm [shape: f32[16,32], index: 2, kind: input, shape index: {}]
  %s3 = inlined_call_operand.hbm [shape: f32[12,32,32], index: 3, kind: input, shape index: {}]
  %s4 = inlined_call_operand.vmem [shape: f32[2,32], index: 4, kind: input, shape index: {}]
  %s5 = inlined_call_operand.hbm [shape: bf16[32,512], index: 5, kind: input, shape index: {}]
  %s6 = inlined_call_operand.hbm [shape: bf16[128,512], index: 6, kind: input, shape index: {}]
  %s7 = inlined_call_operand.vmem [shape: f32[1,512], index: 7, kind: input, shape index: {}]
  %s8 = inlined_call_operand.vmem [shape: f32[16,1], index: 8, kind: output, shape index: {0}]
  %s9 = inlined_call_operand.hbm [shape: f32[16,128], index: 9, kind: output, shape index: {1}]
  %10 = xla_tuple %s8, %s9
  %s11 = sld [smem:[#allocation0]]
  $region77: #{tpu_custom_call.1} parent=0
    _
  %s13 = ssub.s32 1, %s11
  %s14 = scalar_select 0, %s13, %s11
  %15 = sst [smem:[#allocation4]] %s0
  $region1: #{tpu_custom_call.1} parent=0
    #allocation5 [shape = 'u8[512]{0}', space=smem, size = 0x200, scoped, tag = 'input window, operand 1, single buffered']
    #allocation6 [shape = 's32[1]{0}', space=sflag, size = 0x4, scoped, tag = 'scoped memory for tpu_custom_call.1']
    #allocation7 [shape = 's32[1]{0}', space=sflag, size = 0x4, scoped, tag = 'scoped memory for tpu_custom_call.1']
    #allocation8 [shape = 's32[1]{0}', space=sflag, size = 0x4, scoped, tag = 'scoped memory for tpu_custom_call.1']
    #allocation9 [shape = 'u8[8192]{0}', space=vmem, size = 0x2000, scoped, tag = 'input window, operand 2, single buffered']
    #allocation10 [shape = 'u8[196608]{0}', space=vmem, size = 0x30000, scoped, tag = 'input window, operand 3, single buffered']
    #allocation11 [shape = 's32[1]{0}', space=sflag, size = 0x4, scoped, tag = 'scoped memory for tpu_custom_call.1']
    #allocation12 [shape = 'u8[32768]{0}', space=vmem, size = 0x8000, scoped, tag = 'input window, operand 5, single buffered']
    #allocation13 [shape = 'u8[131072]{0}', space=vmem, size = 0x20000, scoped, tag = 'input window, operand 6, single buffered']
    #allocation14 [shape = 's32[1]{0}', space=sflag, size = 0x4, scoped, tag = 'scoped memory for tpu_custom_call.1']
    #allocation15 [shape = 'u8[8192]{0}', space=vmem, size = 0x2000, scoped, tag = 'output window, operand 1, single buffered']
    %16 = vsyncpa [#allocation8], 0
    %17 = vsyncpa [#allocation6], 0
    %18 = vsyncpa [#allocation11], 0
    %19 = vsyncpa [#allocation14], 0
    %20 = vsyncpa [#allocation7], 0
    // Predicated region
    $region2: #{tpu_custom_call.1} parent=1 // pred_check
      _
    $region3: #{tpu_custom_call.1} parent=1 // pred_check_branch
      %22 = sbr.rel (0) target = $region5
    $region4: #{tpu_custom_call.1} parent=1 // pred_region
      _
    $region5: #{tpu_custom_call.1} parent=1 // pred_fallthru
      _
    // Predicated region
    $region6: #{tpu_custom_call.1} parent=1 // pred_check
      _
    $region7: #{tpu_custom_call.1} parent=1 // pred_check_branch
      %24 = sbr.rel (0) target = $region9
    $region8: #{tpu_custom_call.1} parent=1 // pred_region
      %s26 = ssub.s32 16, 16
      %27 = vsyncadd [#allocation8], %s26
      %s29 = sshll.u32 %s1, 4
      %s30 = int_to_ptr.vmem [resolvable:$true] %s29
      %32 = dma.vmem_to_smem %s30, 16, [#allocation5], [#allocation8]
    $region9: #{tpu_custom_call.1} parent=1 // pred_fallthru
      _
    // Predicated region
    $region10: #{tpu_custom_call.1} parent=1 // pred_check
      _
    $region11: #{tpu_custom_call.1} parent=1 // pred_check_branch
      %34 = sbr.rel (0) target = $region13
    $region12: #{tpu_custom_call.1} parent=1 // pred_region
      %s36 = ssub.s32 256, 256
      %37 = vsyncadd [#allocation6], %s36
      %s38 = sshll.u32 [#allocation9], 4
      %s39 = int_to_ptr.vmem [resolvable:$true] %s38
      %44 = dma.hbm_to_vmem [thread:$0]  %s2, 256, %s39, [#allocation6], 128, 128, 8
    $region13: #{tpu_custom_call.1} parent=1 // pred_fallthru
      _
    // Predicated region
    $region14: #{tpu_custom_call.1} parent=1 // pred_check
      _
    $region15: #{tpu_custom_call.1} parent=1 // pred_check_branch
      %46 = sbr.rel (0) target = $region17
    $region16: #{tpu_custom_call.1} parent=1 // pred_region
      %s48 = ssub.s32 6144, 6144
      %49 = vsyncadd [#allocation11], %s48
      %s50 = sshll.u32 [#allocation10], 4
      %s51 = int_to_ptr.vmem [resolvable:$true] %s50
      %56 = dma.hbm_to_vmem [thread:$0]  %s3, 6144, %s51, [#allocation11], 128, 128, 8
    $region17: #{tpu_custom_call.1} parent=1 // pred_fallthru
      _
    // Predicated region
    $region18: #{tpu_custom_call.1} parent=1 // pred_check
      _
    $region19: #{tpu_custom_call.1} parent=1 // pred_check_branch
      %58 = sbr.rel (0) target = $region21
    $region20: #{tpu_custom_call.1} parent=1 // pred_region
      _
    $region21: #{tpu_custom_call.1} parent=1 // pred_fallthru
      _
    // Predicated region
    $region22: #{tpu_custom_call.1} parent=1 // pred_check
      _
    $region23: #{tpu_custom_call.1} parent=1 // pred_check_branch
      %60 = sbr.rel (0) target = $region25
    $region24: #{tpu_custom_call.1} parent=1 // pred_region
      %s62 = ssub.s32 1024, 1024
      %63 = vsyncadd [#allocation11], %s62
      %s64 = sshll.u32 [#allocation12], 4
      %s65 = int_to_ptr.vmem [resolvable:$true] %s64
      %70 = dma.hbm_to_vmem [thread:$0]  %s5, 1024, %s65, [#allocation11], 256, 256, 16
    $region25: #{tpu_custom_call.1} parent=1 // pred_fallthru
      _
    // Predicated region
    $region26: #{tpu_custom_call.1} parent=1 // pred_check
      _
    $region27: #{tpu_custom_call.1} parent=1 // pred_check_branch
      %72 = sbr.rel (0) target = $region29
    $region28: #{tpu_custom_call.1} parent=1 // pred_region
      %s74 = ssub.s32 4096, 4096
      %75 = vsyncadd [#allocation14], %s74
      %s76 = sshll.u32 [#allocation13], 4
      %s77 = int_to_ptr.vmem [resolvable:$true] %s76
      %82 = dma.hbm_to_vmem [thread:$0]  %s6, 4096, %s77, [#allocation14], 256, 256, 16
    $region29: #{tpu_custom_call.1} parent=1 // pred_fallthru
      _
    // Predicated region
    $region30: #{tpu_custom_call.1} parent=1 // pred_check
      _
    $region31: #{tpu_custom_call.1} parent=1 // pred_check_branch
      %84 = sbr.rel (0) target = $region33
    $region32: #{tpu_custom_call.1} parent=1 // pred_region
      _
    $region33: #{tpu_custom_call.1} parent=1 // pred_fallthru
      _
    // Predicated region
    $region34: #{tpu_custom_call.1} parent=1 // pred_check
      _
    $region35: #{tpu_custom_call.1} parent=1 // pred_check_branch
      %86 = sbr.rel (0) target = $region37
    $region36: #{tpu_custom_call.1} parent=1 // pred_region
      %87 = dma.done [#allocation8], 16
    $region37: #{tpu_custom_call.1} parent=1 // pred_fallthru
      _
    // Predicated region
    $region38: #{tpu_custom_call.1} parent=1 // pred_check
      _
    $region39: #{tpu_custom_call.1} parent=1 // pred_check_branch
      %89 = sbr.rel (0) target = $region41
    $region40: #{tpu_custom_call.1} parent=1 // pred_region
      %90 = dma.done [#allocation6], 256
    $region41: #{tpu_custom_call.1} parent=1 // pred_fallthru
      _
    // Predicated region
    $region42: #{tpu_custom_call.1} parent=1 // pred_check
      _
    $region43: #{tpu_custom_call.1} parent=1 // pred_check_branch
      %92 = sbr.rel (0) target = $region45
    $region44: #{tpu_custom_call.1} parent=1 // pred_region
      %93 = dma.done [#allocation11], 6144
    $region45: #{tpu_custom_call.1} parent=1 // pred_fallthru
      _
    // Predicated region
    $region46: #{tpu_custom_call.1} parent=1 // pred_check
      _
    $region47: #{tpu_custom_call.1} parent=1 // pred_check_branch
      %95 = sbr.rel (0) target = $region49
    $region48: #{tpu_custom_call.1} parent=1 // pred_region
      %96 = dma.done [#allocation11], 1024
    $region49: #{tpu_custom_call.1} parent=1 // pred_fallthru
      _
    // Predicated region
    $region50: #{tpu_custom_call.1} parent=1 // pred_check
      _
    $region51: #{tpu_custom_call.1} parent=1 // pred_check_branch
      %98 = sbr.rel (0) target = $region53
    $region52: #{tpu_custom_call.1} parent=1 // pred_region
      %99 = dma.done [#allocation14], 4096
    $region53: #{tpu_custom_call.1} parent=1 // pred_fallthru
      _
    %100 = sfence
    %s102 = sld [smem:[#allocation4]]
    %v103 = vlaneseq
    %v104 = vshrl.u32 %v103, 7
    %v105 = vadd.s32 %v104, 8
    %v106 = vstv %s102
    %vm107 = vcmp.lt.s32.totalorder %v104, %v106
    %vm108 = vcmp.lt.s32.totalorder %v105, %v106
    %v109 = vsel %vm107, 1, 0
    %v110 = vsel %vm108, 1, 0
    %v111 = vcvt.s32.f32 %v109
    %v112 = vcvt.s32.f32 %v110
    %v113 = vld [vmem:[#allocation9] sm:$0xff]
    %v114 = vld [vmem:[#allocation9 + $0x8] sm:$0xff]
    %v115 = vmul.f32 %v113, %v111
    %v116 = vmul.f32 %v114, %v112
    %v117 = vrot.slane %v115, 7
    %v118 = vrot.slane %v116, 7
    %vm119 = vcmp.lt.s32.totalorder %v104, 1
    %v120 = vsel %vm119, %v117, %v118
    %v121 = vsel %vm119, %v118, %v117
    %v122 = vrot.slane %v115, 1
    %v123 = vrot.slane %v116, 1
    %vm124 = vcmp.lt.s32.totalorder %v104, 7
    %v125 = vsel %vm124, %v122, %v123
    %v126 = vsel %vm124, %v123, %v122
    %v127 = vld [vmem:[#allocation10] sm:$0xff]
    %v128 = vld [vmem:[#allocation10 + $0x8] sm:$0xff]
    %v129 = vld [vmem:[#allocation10 + $0x10] sm:$0xff]
    %v130 = vld [vmem:[#allocation10 + $0x18] sm:$0xff]
    %s131 = scalar_lea.vmem [#allocation10], 32
    %v132 = vld [vmem:[%s131] sm:$0xff]
    %v133 = vld [vmem:[%s131 + $0x8] sm:$0xff]
    %v134 = vld [vmem:[%s131 + $0x10] sm:$0xff]
    %v135 = vld [vmem:[%s131 + $0x18] sm:$0xff]
    %vm136 = vcmask 261120
    %v138 = vsel %vm136, %v115, 0
    %v141 = vsel %vm136, %v116, 0
    %143 = vmatprep.subr.mxu0 0.0
    %144 = vmatpush1.msra.mxu0 %v132
    %145 = vmatprep.subr.mxu0 0.0
    %146 = vmatpush1.msra.mxu0 %v133
    %147 = vmatprep.subr.mxu0 0.0
    %148 = vmatpush1.msra.mxu0 %v134
    %149 = vmatprep.subr.mxu0 0.0
    %150 = vmatpush1.msra.mxu0 %v135
    %151 = vmatprep.subr.mxu0 0.0
    %152 = vmatpush1.msra.mxu0 0.0
    %153 = vmatprep.subr.mxu0 0.0
    %154 = vmatpush1.msra.mxu0 0.0
    %155 = vmatprep.subr.mxu0 0.0
    %156 = vmatpush1.msra.mxu0 0.0
    %157 = vmatprep.subr.mxu0 0.0
    %158 = vmatpush1.msra.mxu0 0.0
    %159 = vmatprep.subr.mxu0 0.0
    %160 = vmatpush1.msra.mxu0 0.0
    %161 = vmatprep.subr.mxu0 0.0
    %162 = vmatpush1.msra.mxu0 0.0
    %163 = vmatprep.subr.mxu0 0.0
    %164 = vmatpush1.msra.mxu0 0.0
    %165 = vmatprep.subr.mxu0 0.0
    %166 = vmatpush1.msra.mxu0 0.0
    %167 = vmatprep.subr.mxu0 0.0
    %168 = vmatpush1.msra.mxu0 0.0
    %169 = vmatprep.subr.mxu0 0.0
    %170 = vmatpush1.msra.mxu0 0.0
    %171 = vmatprep.subr.mxu0 0.0
    %172 = vmatpush1.msra.mxu0 0.0
    %173 = vmatprep.subr.mxu0 0.0
    %174 = vmatpush1.msra.mxu0 0.0
    %175 = vmatprep.subr.mxu0 0.0
    %176 = vmatpush1.msra.mxu0 0.0
    %177 = vmatprep.subr.mxu0 0.0
    %178 = vmatpush1.msra.mxu0 0.0
    %179 = vmatprep.subr.mxu0 0.0
    %180 = vmatpush1.msra.mxu0 0.0
    %181 = vmatprep.subr.mxu0 0.0
    %182 = vmatpush1.msra.mxu0 0.0
    %183 = vmatprep.subr.mxu0 0.0
    %184 = vmatpush1.msra.mxu0 0.0
    %185 = vmatprep.subr.mxu0 0.0
    %186 = vmatpush1.msra.mxu0 0.0
    %187 = vmatprep.subr.mxu0 0.0
    %188 = vmatpush1.msra.mxu0 0.0
    %189 = vmatprep.subr.mxu0 0.0
    %190 = vmatpush1.msra.mxu0 0.0
    %191 = vmatprep.subr.mxu0 0.0
    %192 = vmatpush1.msra.mxu0 0.0
    %193 = vmatprep.subr.mxu0 0.0
    %194 = vmatpush1.msra.mxu0 0.0
    %195 = vmatprep.subr.mxu0 0.0
    %196 = vmatpush1.msra.mxu0 0.0
    %197 = vmatprep.subr.mxu0 0.0
    %198 = vmatpush1.msra.mxu0 0.0
    %199 = vmatprep.subr.mxu0 0.0
    %200 = vmatpush1.msra.mxu0 0.0
    %201 = vmatprep.subr.mxu0 0.0
    %202 = vmatpush1.msra.mxu0 0.0
    %203 = vmatprep.subr.mxu0 0.0
    %204 = vmatpush1.msra.mxu0 0.0
    %205 = vmatprep.subr.mxu0 0.0
    %206 = vmatpush1.msra.mxu0 0.0
    %207 = vmatprep.mubr.f32.mxu0 0.0
    %208 = vmatmul.mubr.f32.gmra.mrb[0].mxu0 %v138
    %v209 = vpop.f32.mrb[0].mxu0
    %v210 = vadd.f32 0.0, %v209
    %v211 = vpop.f32.mrb[0].mxu0
    %212 = vmatprep.mubr.f32.mxu0 0.0
    %213 = vmatmul.mubr.f32.gmra.mrb[0].mxu0 %v141
    %v214 = vpop.f32.mrb[0].mxu0
    %v215 = vadd.f32 0.0, %v214
    %v216 = vpop.f32.mrb[0].mxu0
    %217 = vdwg.mxu0
    %v219 = vsel %vm136, %v121, 0
    %v222 = vsel %vm136, %v120, 0
    %224 = vmatprep.subr.mxu0 0.0
    %225 = vmatpush1.msra.mxu0 %v127
    %226 = vmatprep.subr.mxu0 0.0
    %227 = vmatpush1.msra.mxu0 %v128
    %228 = vmatprep.subr.mxu0 0.0
    %229 = vmatpush1.msra.mxu0 %v129
    %230 = vmatprep.subr.mxu0 0.0
    %231 = vmatpush1.msra.mxu0 %v130
    %232 = vmatprep.subr.mxu0 0.0
    %233 = vmatpush1.msra.mxu0 0.0
    %234 = vmatprep.subr.mxu0 0.0
    %235 = vmatpush1.msra.mxu0 0.0
    %236 = vmatprep.subr.mxu0 0.0
    %237 = vmatpush1.msra.mxu0 0.0
    %238 = vmatprep.subr.mxu0 0.0
    %239 = vmatpush1.msra.mxu0 0.0
    %240 = vmatprep.subr.mxu0 0.0
    %241 = vmatpush1.msra.mxu0 0.0
    %242 = vmatprep.subr.mxu0 0.0
    %243 = vmatpush1.msra.mxu0 0.0
    %244 = vmatprep.subr.mxu0 0.0
    %245 = vmatpush1.msra.mxu0 0.0
    %246 = vmatprep.subr.mxu0 0.0
    %247 = vmatpush1.msra.mxu0 0.0
    %248 = vmatprep.subr.mxu0 0.0
    %249 = vmatpush1.msra.mxu0 0.0
    %250 = vmatprep.subr.mxu0 0.0
    %251 = vmatpush1.msra.mxu0 0.0
    %252 = vmatprep.subr.mxu0 0.0
    %253 = vmatpush1.msra.mxu0 0.0
    %254 = vmatprep.subr.mxu0 0.0
    %255 = vmatpush1.msra.mxu0 0.0
    %256 = vmatprep.subr.mxu0 0.0
    %257 = vmatpush1.msra.mxu0 0.0
    %258 = vmatprep.subr.mxu0 0.0
    %259 = vmatpush1.msra.mxu0 0.0
    %260 = vmatprep.subr.mxu0 0.0
    %261 = vmatpush1.msra.mxu0 0.0
    %262 = vmatprep.subr.mxu0 0.0
    %263 = vmatpush1.msra.mxu0 0.0
    %264 = vmatprep.subr.mxu0 0.0
    %265 = vmatpush1.msra.mxu0 0.0
    %266 = vmatprep.subr.mxu0 0.0
    %267 = vmatpush1.msra.mxu0 0.0
    %268 = vmatprep.subr.mxu0 0.0
    %269 = vmatpush1.msra.mxu0 0.0
    %270 = vmatprep.subr.mxu0 0.0
    %271 = vmatpush1.msra.mxu0 0.0
    %272 = vmatprep.subr.mxu0 0.0
    %273 = vmatpush1.msra.mxu0 0.0
    %274 = vmatprep.subr.mxu0 0.0
    %275 = vmatpush1.msra.mxu0 0.0
    %276 = vmatprep.subr.mxu0 0.0
    %277 = vmatpush1.msra.mxu0 0.0
    %278 = vmatprep.subr.mxu0 0.0
    %279 = vmatpush1.msra.mxu0 0.0
    %280 = vmatprep.subr.mxu0 0.0
    %281 = vmatpush1.msra.mxu0 0.0
    %282 = vmatprep.subr.mxu0 0.0
    %283 = vmatpush1.msra.mxu0 0.0
    %284 = vmatprep.subr.mxu0 0.0
    %285 = vmatpush1.msra.mxu0 0.0
    %286 = vmatprep.subr.mxu0 0.0
    %287 = vmatpush1.msra.mxu0 0.0
    %288 = vmatprep.mubr.f32.mxu0 0.0
    %289 = vmatmul.mubr.f32.gmra.mrb[0].mxu0 %v219
    %v290 = vpop.f32.mrb[0].mxu0
    %v291 = vadd.f32 %v210, %v290
    %v292 = vpop.f32.mrb[0].mxu0
    %293 = vmatprep.mubr.f32.mxu0 0.0
    %294 = vmatmul.mubr.f32.gmra.mrb[0].mxu0 %v222
    %v295 = vpop.f32.mrb[0].mxu0
    %v296 = vadd.f32 %v215, %v295
    %v297 = vpop.f32.mrb[0].mxu0
    %298 = vdwg.mxu0
    %s299 = scalar_lea.vmem [#allocation10], 64
    %v300 = vld [vmem:[%s299] sm:$0xff]
    %v301 = vld [vmem:[%s299 + $0x8] sm:$0xff]
    %v302 = vld [vmem:[%s299 + $0x10] sm:$0xff]
    %v303 = vld [vmem:[%s299 + $0x18] sm:$0xff]
    %v305 = vsel %vm136, %v125, 0
    %v308 = vsel %vm136, %v126, 0
    %310 = vmatprep.subr.mxu0 0.0
    %311 = vmatpush1.msra.mxu0 %v300
    %312 = vmatprep.subr.mxu0 0.0
    %313 = vmatpush1.msra.mxu0 %v301
    %314 = vmatprep.subr.mxu0 0.0
    %315 = vmatpush1.msra.mxu0 %v302
    %316 = vmatprep.subr.mxu0 0.0
    %317 = vmatpush1.msra.mxu0 %v303
    %318 = vmatprep.subr.mxu0 0.0
    %319 = vmatpush1.msra.mxu0 0.0
    %320 = vmatprep.subr.mxu0 0.0
    %321 = vmatpush1.msra.mxu0 0.0
    %322 = vmatprep.subr.mxu0 0.0
    %323 = vmatpush1.msra.mxu0 0.0
    %324 = vmatprep.subr.mxu0 0.0
    %325 = vmatpush1.msra.mxu0 0.0
    %326 = vmatprep.subr.mxu0 0.0
    %327 = vmatpush1.msra.mxu0 0.0
    %328 = vmatprep.subr.mxu0 0.0
    %329 = vmatpush1.msra.mxu0 0.0
    %330 = vmatprep.subr.mxu0 0.0
    %331 = vmatpush1.msra.mxu0 0.0
    %332 = vmatprep.subr.mxu0 0.0
    %333 = vmatpush1.msra.mxu0 0.0
    %334 = vmatprep.subr.mxu0 0.0
    %335 = vmatpush1.msra.mxu0 0.0
    %336 = vmatprep.subr.mxu0 0.0
    %337 = vmatpush1.msra.mxu0 0.0
    %338 = vmatprep.subr.mxu0 0.0
    %339 = vmatpush1.msra.mxu0 0.0
    %340 = vmatprep.subr.mxu0 0.0
    %341 = vmatpush1.msra.mxu0 0.0
    %342 = vmatprep.subr.mxu0 0.0
    %343 = vmatpush1.msra.mxu0 0.0
    %344 = vmatprep.subr.mxu0 0.0
    %345 = vmatpush1.msra.mxu0 0.0
    %346 = vmatprep.subr.mxu0 0.0
    %347 = vmatpush1.msra.mxu0 0.0
    %348 = vmatprep.subr.mxu0 0.0
    %349 = vmatpush1.msra.mxu0 0.0
    %350 = vmatprep.subr.mxu0 0.0
    %351 = vmatpush1.msra.mxu0 0.0
    %352 = vmatprep.subr.mxu0 0.0
    %353 = vmatpush1.msra.mxu0 0.0
    %354 = vmatprep.subr.mxu0 0.0
    %355 = vmatpush1.msra.mxu0 0.0
    %356 = vmatprep.subr.mxu0 0.0
    %357 = vmatpush1.msra.mxu0 0.0
    %358 = vmatprep.subr.mxu0 0.0
    %359 = vmatpush1.msra.mxu0 0.0
    %360 = vmatprep.subr.mxu0 0.0
    %361 = vmatpush1.msra.mxu0 0.0
    %362 = vmatprep.subr.mxu0 0.0
    %363 = vmatpush1.msra.mxu0 0.0
    %364 = vmatprep.subr.mxu0 0.0
    %365 = vmatpush1.msra.mxu0 0.0
    %366 = vmatprep.subr.mxu0 0.0
    %367 = vmatpush1.msra.mxu0 0.0
    %368 = vmatprep.subr.mxu0 0.0
    %369 = vmatpush1.msra.mxu0 0.0
    %370 = vmatprep.subr.mxu0 0.0
    %371 = vmatpush1.msra.mxu0 0.0
    %372 = vmatprep.subr.mxu0 0.0
    %373 = vmatpush1.msra.mxu0 0.0
    %374 = vmatprep.mubr.f32.mxu0 0.0
    %375 = vmatmul.mubr.f32.gmra.mrb[0].mxu0 %v305
    %v376 = vpop.f32.mrb[0].mxu0
    %v377 = vadd.f32 0.0, %v376
    %v378 = vpop.f32.mrb[0].mxu0
    %379 = vmatprep.mubr.f32.mxu0 0.0
    %380 = vmatmul.mubr.f32.gmra.mrb[0].mxu0 %v308
    %v381 = vpop.f32.mrb[0].mxu0
    %v382 = vadd.f32 0.0, %v381
    %v383 = vpop.f32.mrb[0].mxu0
    %384 = vdwg.mxu0
    %v385 = vadd.f32 %v291, %v377
    %v386 = vadd.f32 %v296, %v382
    %s387 = sld [smem:[#allocation5]]
    %v388 = vstv %s387
    %v389 = vadd.f32 %v385, %v388
    %v390 = vadd.f32 %v386, %v388
    %v391 = vmax.f32 %v389, 0.0
    %v392 = vmax.f32 %v390, 0.0
    %v393 = vmul.f32 %v391, %v111
    %v394 = vmul.f32 %v392, %v112
    %v395 = vrot.slane %v393, 7
    %v396 = vrot.slane %v394, 7
    %v397 = vsel %vm119, %v395, %v396
    %v398 = vsel %vm119, %v396, %v395
    %v399 = vrot.slane %v393, 1
    %v400 = vrot.slane %v394, 1
    %v401 = vsel %vm124, %v399, %v400
    %v402 = vsel %vm124, %v400, %v399
    %s403 = scalar_lea.vmem [#allocation10], 96
    %v404 = vld [vmem:[%s403] sm:$0xff]
    %v405 = vld [vmem:[%s403 + $0x8] sm:$0xff]
    %v406 = vld [vmem:[%s403 + $0x10] sm:$0xff]
    %v407 = vld [vmem:[%s403 + $0x18] sm:$0xff]
    %s408 = scalar_lea.vmem [#allocation10], 128
    %v409 = vld [vmem:[%s408] sm:$0xff]
    %v410 = vld [vmem:[%s408 + $0x8] sm:$0xff]
    %v411 = vld [vmem:[%s408 + $0x10] sm:$0xff]
    %v412 = vld [vmem:[%s408 + $0x18] sm:$0xff]
    %v414 = vsel %vm136, %v393, 0
    %v417 = vsel %vm136, %v394, 0
    %419 = vmatprep.subr.mxu0 0.0
    %420 = vmatpush1.msra.mxu0 %v409
    %421 = vmatprep.subr.mxu0 0.0
    %422 = vmatpush1.msra.mxu0 %v410
    %423 = vmatprep.subr.mxu0 0.0
    %424 = vmatpush1.msra.mxu0 %v411
    %425 = vmatprep.subr.mxu0 0.0
    %426 = vmatpush1.msra.mxu0 %v412
    %427 = vmatprep.subr.mxu0 0.0
    %428 = vmatpush1.msra.mxu0 0.0
    %429 = vmatprep.subr.mxu0 0.0
    %430 = vmatpush1.msra.mxu0 0.0
    %431 = vmatprep.subr.mxu0 0.0
    %432 = vmatpush1.msra.mxu0 0.0
    %433 = vmatprep.subr.mxu0 0.0
    %434 = vmatpush1.msra.mxu0 0.0
    %435 = vmatprep.subr.mxu0 0.0
    %436 = vmatpush1.msra.mxu0 0.0
    %437 = vmatprep.subr.mxu0 0.0
    %438 = vmatpush1.msra.mxu0 0.0
    %439 = vmatprep.subr.mxu0 0.0
    %440 = vmatpush1.msra.mxu0 0.0
    %441 = vmatprep.subr.mxu0 0.0
    %442 = vmatpush1.msra.mxu0 0.0
    %443 = vmatprep.subr.mxu0 0.0
    %444 = vmatpush1.msra.mxu0 0.0
    %445 = vmatprep.subr.mxu0 0.0
    %446 = vmatpush1.msra.mxu0 0.0
    %447 = vmatprep.subr.mxu0 0.0
    %448 = vmatpush1.msra.mxu0 0.0
    %449 = vmatprep.subr.mxu0 0.0
    %450 = vmatpush1.msra.mxu0 0.0
    %451 = vmatprep.subr.mxu0 0.0
    %452 = vmatpush1.msra.mxu0 0.0
    %453 = vmatprep.subr.mxu0 0.0
    %454 = vmatpush1.msra.mxu0 0.0
    %455 = vmatprep.subr.mxu0 0.0
    %456 = vmatpush1.msra.mxu0 0.0
    %457 = vmatprep.subr.mxu0 0.0
    %458 = vmatpush1.msra.mxu0 0.0
    %459 = vmatprep.subr.mxu0 0.0
    %460 = vmatpush1.msra.mxu0 0.0
    %461 = vmatprep.subr.mxu0 0.0
    %462 = vmatpush1.msra.mxu0 0.0
    %463 = vmatprep.subr.mxu0 0.0
    %464 = vmatpush1.msra.mxu0 0.0
    %465 = vmatprep.subr.mxu0 0.0
    %466 = vmatpush1.msra.mxu0 0.0
    %467 = vmatprep.subr.mxu0 0.0
    %468 = vmatpush1.msra.mxu0 0.0
    %469 = vmatprep.subr.mxu0 0.0
    %470 = vmatpush1.msra.mxu0 0.0
    %471 = vmatprep.subr.mxu0 0.0
    %472 = vmatpush1.msra.mxu0 0.0
    %473 = vmatprep.subr.mxu0 0.0
    %474 = vmatpush1.msra.mxu0 0.0
    %475 = vmatprep.subr.mxu0 0.0
    %476 = vmatpush1.msra.mxu0 0.0
    %477 = vmatprep.subr.mxu0 0.0
    %478 = vmatpush1.msra.mxu0 0.0
    %479 = vmatprep.subr.mxu0 0.0
    %480 = vmatpush1.msra.mxu0 0.0
    %481 = vmatprep.subr.mxu0 0.0
    %482 = vmatpush1.msra.mxu0 0.0
    %483 = vmatprep.mubr.f32.mxu0 0.0
    %484 = vmatmul.mubr.f32.gmra.mrb[0].mxu0 %v414
    %v485 = vpop.f32.mrb[0].mxu0
    %v486 = vadd.f32 0.0, %v485
    %v487 = vpop.f32.mrb[0].mxu0
    %488 = vmatprep.mubr.f32.mxu0 0.0
    %489 = vmatmul.mubr.f32.gmra.mrb[0].mxu0 %v417
    %v490 = vpop.f32.mrb[0].mxu0
    %v491 = vadd.f32 0.0, %v490
    %v492 = vpop.f32.mrb[0].mxu0
    %493 = vdwg.mxu0
    %v495 = vsel %vm136, %v398, 0
    %v498 = vsel %vm136, %v397, 0
    %500 = vmatprep.subr.mxu0 0.0
    %501 = vmatpush1.msra.mxu0 %v404
    %502 = vmatprep.subr.mxu0 0.0
    %503 = vmatpush1.msra.mxu0 %v405
    %504 = vmatprep.subr.mxu0 0.0
    %505 = vmatpush1.msra.mxu0 %v406
    %506 = vmatprep.subr.mxu0 0.0
    %507 = vmatpush1.msra.mxu0 %v407
    %508 = vmatprep.subr.mxu0 0.0
    %509 = vmatpush1.msra.mxu0 0.0
    %510 = vmatprep.subr.mxu0 0.0
    %511 = vmatpush1.msra.mxu0 0.0
    %512 = vmatprep.subr.mxu0 0.0
    %513 = vmatpush1.msra.mxu0 0.0
    %514 = vmatprep.subr.mxu0 0.0
    %515 = vmatpush1.msra.mxu0 0.0
    %516 = vmatprep.subr.mxu0 0.0
    %517 = vmatpush1.msra.mxu0 0.0
    %518 = vmatprep.subr.mxu0 0.0
    %519 = vmatpush1.msra.mxu0 0.0
    %520 = vmatprep.subr.mxu0 0.0
    %521 = vmatpush1.msra.mxu0 0.0
    %522 = vmatprep.subr.mxu0 0.0
    %523 = vmatpush1.msra.mxu0 0.0
    %524 = vmatprep.subr.mxu0 0.0
    %525 = vmatpush1.msra.mxu0 0.0
    %526 = vmatprep.subr.mxu0 0.0
    %527 = vmatpush1.msra.mxu0 0.0
    %528 = vmatprep.subr.mxu0 0.0
    %529 = vmatpush1.msra.mxu0 0.0
    %530 = vmatprep.subr.mxu0 0.0
    %531 = vmatpush1.msra.mxu0 0.0
    %532 = vmatprep.subr.mxu0 0.0
    %533 = vmatpush1.msra.mxu0 0.0
    %534 = vmatprep.subr.mxu0 0.0
    %535 = vmatpush1.msra.mxu0 0.0
    %536 = vmatprep.subr.mxu0 0.0
    %537 = vmatpush1.msra.mxu0 0.0
    %538 = vmatprep.subr.mxu0 0.0
    %539 = vmatpush1.msra.mxu0 0.0
    %540 = vmatprep.subr.mxu0 0.0
    %541 = vmatpush1.msra.mxu0 0.0
    %542 = vmatprep.subr.mxu0 0.0
    %543 = vmatpush1.msra.mxu0 0.0
    %544 = vmatprep.subr.mxu0 0.0
    %545 = vmatpush1.msra.mxu0 0.0
    %546 = vmatprep.subr.mxu0 0.0
    %547 = vmatpush1.msra.mxu0 0.0
    %548 = vmatprep.subr.mxu0 0.0
    %549 = vmatpush1.msra.mxu0 0.0
    %550 = vmatprep.subr.mxu0 0.0
    %551 = vmatpush1.msra.mxu0 0.0
    %552 = vmatprep.subr.mxu0 0.0
    %553 = vmatpush1.msra.mxu0 0.0
    %554 = vmatprep.subr.mxu0 0.0
    %555 = vmatpush1.msra.mxu0 0.0
    %556 = vmatprep.subr.mxu0 0.0
    %557 = vmatpush1.msra.mxu0 0.0
    %558 = vmatprep.subr.mxu0 0.0
    %559 = vmatpush1.msra.mxu0 0.0
    %560 = vmatprep.subr.mxu0 0.0
    %561 = vmatpush1.msra.mxu0 0.0
    %562 = vmatprep.subr.mxu0 0.0
    %563 = vmatpush1.msra.mxu0 0.0
    %564 = vmatprep.mubr.f32.mxu0 0.0
    %565 = vmatmul.mubr.f32.gmra.mrb[0].mxu0 %v495
    %v566 = vpop.f32.mrb[0].mxu0
    %v567 = vadd.f32 %v486, %v566
    %v568 = vpop.f32.mrb[0].mxu0
    %569 = vmatprep.mubr.f32.mxu0 0.0
    %570 = vmatmul.mubr.f32.gmra.mrb[0].mxu0 %v498
    %v571 = vpop.f32.mrb[0].mxu0
    %v572 = vadd.f32 %v491, %v571
    %v573 = vpop.f32.mrb[0].mxu0
    %574 = vdwg.mxu0
    %s575 = scalar_lea.vmem [#allocation10], 160
    %v576 = vld [vmem:[%s575] sm:$0xff]
    %v577 = vld [vmem:[%s575 + $0x8] sm:$0xff]
    %v578 = vld [vmem:[%s575 + $0x10] sm:$0xff]
    %v579 = vld [vmem:[%s575 + $0x18] sm:$0xff]
    %v581 = vsel %vm136, %v401, 0
    %v584 = vsel %vm136, %v402, 0
    %586 = vmatprep.subr.mxu0 0.0
    %587 = vmatpush1.msra.mxu0 %v576
    %588 = vmatprep.subr.mxu0 0.0
    %589 = vmatpush1.msra.mxu0 %v577
    %590 = vmatprep.subr.mxu0 0.0
    %591 = vmatpush1.msra.mxu0 %v578
    %592 = vmatprep.subr.mxu0 0.0
    %593 = vmatpush1.msra.mxu0 %v579
    %594 = vmatprep.subr.mxu0 0.0
    %595 = vmatpush1.msra.mxu0 0.0
    %596 = vmatprep.subr.mxu0 0.0
    %597 = vmatpush1.msra.mxu0 0.0
    %598 = vmatprep.subr.mxu0 0.0
    %599 = vmatpush1.msra.mxu0 0.0
    %600 = vmatprep.subr.mxu0 0.0
    %601 = vmatpush1.msra.mxu0 0.0
    %602 = vmatprep.subr.mxu0 0.0
    %603 = vmatpush1.msra.mxu0 0.0
    %604 = vmatprep.subr.mxu0 0.0
    %605 = vmatpush1.msra.mxu0 0.0
    %606 = vmatprep.subr.mxu0 0.0
    %607 = vmatpush1.msra.mxu0 0.0
    %608 = vmatprep.subr.mxu0 0.0
    %609 = vmatpush1.msra.mxu0 0.0
    %610 = vmatprep.subr.mxu0 0.0
    %611 = vmatpush1.msra.mxu0 0.0
    %612 = vmatprep.subr.mxu0 0.0
    %613 = vmatpush1.msra.mxu0 0.0
    %614 = vmatprep.subr.mxu0 0.0
    %615 = vmatpush1.msra.mxu0 0.0
    %616 = vmatprep.subr.mxu0 0.0
    %617 = vmatpush1.msra.mxu0 0.0
    %618 = vmatprep.subr.mxu0 0.0
    %619 = vmatpush1.msra.mxu0 0.0
    %620 = vmatprep.subr.mxu0 0.0
    %621 = vmatpush1.msra.mxu0 0.0
    %622 = vmatprep.subr.mxu0 0.0
    %623 = vmatpush1.msra.mxu0 0.0
    %624 = vmatprep.subr.mxu0 0.0
    %625 = vmatpush1.msra.mxu0 0.0
    %626 = vmatprep.subr.mxu0 0.0
    %627 = vmatpush1.msra.mxu0 0.0
    %628 = vmatprep.subr.mxu0 0.0
    %629 = vmatpush1.msra.mxu0 0.0
    %630 = vmatprep.subr.mxu0 0.0
    %631 = vmatpush1.msra.mxu0 0.0
    %632 = vmatprep.subr.mxu0 0.0
    %633 = vmatpush1.msra.mxu0 0.0
    %634 = vmatprep.subr.mxu0 0.0
    %635 = vmatpush1.msra.mxu0 0.0
    %636 = vmatprep.subr.mxu0 0.0
    %637 = vmatpush1.msra.mxu0 0.0
    %638 = vmatprep.subr.mxu0 0.0
    %639 = vmatpush1.msra.mxu0 0.0
    %640 = vmatprep.subr.mxu0 0.0
    %641 = vmatpush1.msra.mxu0 0.0
    %642 = vmatprep.subr.mxu0 0.0
    %643 = vmatpush1.msra.mxu0 0.0
    %644 = vmatprep.subr.mxu0 0.0
    %645 = vmatpush1.msra.mxu0 0.0
    %646 = vmatprep.subr.mxu0 0.0
    %647 = vmatpush1.msra.mxu0 0.0
    %648 = vmatprep.subr.mxu0 0.0
    %649 = vmatpush1.msra.mxu0 0.0
    %650 = vmatprep.mubr.f32.mxu0 0.0
    %651 = vmatmul.mubr.f32.gmra.mrb[0].mxu0 %v581
    %v652 = vpop.f32.mrb[0].mxu0
    %v653 = vadd.f32 0.0, %v652
    %v654 = vpop.f32.mrb[0].mxu0
    %655 = vmatprep.mubr.f32.mxu0 0.0
    %656 = vmatmul.mubr.f32.gmra.mrb[0].mxu0 %v584
    %v657 = vpop.f32.mrb[0].mxu0
    %v658 = vadd.f32 0.0, %v657
    %v659 = vpop.f32.mrb[0].mxu0
    %660 = vdwg.mxu0
    %v661 = vadd.f32 %v567, %v653
    %v662 = vadd.f32 %v572, %v658
    %s663 = sld [smem:[#allocation5 + $0x1]]
    %v664 = vstv %s663
    %v665 = vadd.f32 %v661, %v664
    %v666 = vadd.f32 %v662, %v664
    %v667 = vmax.f32 %v665, 0.0
    %v668 = vmax.f32 %v666, 0.0
    %v669 = vmul.f32 %v667, %v111
    %v670 = vmul.f32 %v668, %v112
    %v671 = vrot.slane %v669, 7
    %v672 = vrot.slane %v670, 7
    %v673 = vsel %vm119, %v671, %v672
    %v674 = vsel %vm119, %v672, %v671
    %v675 = vrot.slane %v669, 1
    %v676 = vrot.slane %v670, 1
    %v677 = vsel %vm124, %v675, %v676
    %v678 = vsel %vm124, %v676, %v675
    %s679 = scalar_lea.vmem [#allocation10], 192
    %v680 = vld [vmem:[%s679] sm:$0xff]
    %v681 = vld [vmem:[%s679 + $0x8] sm:$0xff]
    %v682 = vld [vmem:[%s679 + $0x10] sm:$0xff]
    %v683 = vld [vmem:[%s679 + $0x18] sm:$0xff]
    %s684 = scalar_lea.vmem [#allocation10], 224
    %v685 = vld [vmem:[%s684] sm:$0xff]
    %v686 = vld [vmem:[%s684 + $0x8] sm:$0xff]
    %v687 = vld [vmem:[%s684 + $0x10] sm:$0xff]
    %v688 = vld [vmem:[%s684 + $0x18] sm:$0xff]
    %v690 = vsel %vm136, %v669, 0
    %v693 = vsel %vm136, %v670, 0
    %695 = vmatprep.subr.mxu0 0.0
    %696 = vmatpush1.msra.mxu0 %v685
    %697 = vmatprep.subr.mxu0 0.0
    %698 = vmatpush1.msra.mxu0 %v686
    %699 = vmatprep.subr.mxu0 0.0
    %700 = vmatpush1.msra.mxu0 %v687
    %701 = vmatprep.subr.mxu0 0.0
    %702 = vmatpush1.msra.mxu0 %v688
    %703 = vmatprep.subr.mxu0 0.0
    %704 = vmatpush1.msra.mxu0 0.0
    %705 = vmatprep.subr.mxu0 0.0
    %706 = vmatpush1.msra.mxu0 0.0
    %707 = vmatprep.subr.mxu0 0.0
    %708 = vmatpush1.msra.mxu0 0.0
    %709 = vmatprep.subr.mxu0 0.0
    %710 = vmatpush1.msra.mxu0 0.0
    %711 = vmatprep.subr.mxu0 0.0
    %712 = vmatpush1.msra.mxu0 0.0
    %713 = vmatprep.subr.mxu0 0.0
    %714 = vmatpush1.msra.mxu0 0.0
    %715 = vmatprep.subr.mxu0 0.0
    %716 = vmatpush1.msra.mxu0 0.0
    %717 = vmatprep.subr.mxu0 0.0
    %718 = vmatpush1.msra.mxu0 0.0
    %719 = vmatprep.subr.mxu0 0.0
    %720 = vmatpush1.msra.mxu0 0.0
    %721 = vmatprep.subr.mxu0 0.0
    %722 = vmatpush1.msra.mxu0 0.0
    %723 = vmatprep.subr.mxu0 0.0
    %724 = vmatpush1.msra.mxu0 0.0
    %725 = vmatprep.subr.mxu0 0.0
    %726 = vmatpush1.msra.mxu0 0.0
    %727 = vmatprep.subr.mxu0 0.0
    %728 = vmatpush1.msra.mxu0 0.0
    %729 = vmatprep.subr.mxu0 0.0
    %730 = vmatpush1.msra.mxu0 0.0
    %731 = vmatprep.subr.mxu0 0.0
    %732 = vmatpush1.msra.mxu0 0.0
    %733 = vmatprep.subr.mxu0 0.0
    %734 = vmatpush1.msra.mxu0 0.0
    %735 = vmatprep.subr.mxu0 0.0
    %736 = vmatpush1.msra.mxu0 0.0
    %737 = vmatprep.subr.mxu0 0.0
    %738 = vmatpush1.msra.mxu0 0.0
    %739 = vmatprep.subr.mxu0 0.0
    %740 = vmatpush1.msra.mxu0 0.0
    %741 = vmatprep.subr.mxu0 0.0
    %742 = vmatpush1.msra.mxu0 0.0
    %743 = vmatprep.subr.mxu0 0.0
    %744 = vmatpush1.msra.mxu0 0.0
    %745 = vmatprep.subr.mxu0 0.0
    %746 = vmatpush1.msra.mxu0 0.0
    %747 = vmatprep.subr.mxu0 0.0
    %748 = vmatpush1.msra.mxu0 0.0
    %749 = vmatprep.subr.mxu0 0.0
    %750 = vmatpush1.msra.mxu0 0.0
    %751 = vmatprep.subr.mxu0 0.0
    %752 = vmatpush1.msra.mxu0 0.0
    %753 = vmatprep.subr.mxu0 0.0
    %754 = vmatpush1.msra.mxu0 0.0
    %755 = vmatprep.subr.mxu0 0.0
    %756 = vmatpush1.msra.mxu0 0.0
    %757 = vmatprep.subr.mxu0 0.0
    %758 = vmatpush1.msra.mxu0 0.0
    %759 = vmatprep.mubr.f32.mxu0 0.0
    %760 = vmatmul.mubr.f32.gmra.mrb[0].mxu0 %v690
    %v761 = vpop.f32.mrb[0].mxu0
    %v762 = vadd.f32 0.0, %v761
    %v763 = vpop.f32.mrb[0].mxu0
    %764 = vmatprep.mubr.f32.mxu0 0.0
    %765 = vmatmul.mubr.f32.gmra.mrb[0].mxu0 %v693
    %v766 = vpop.f32.mrb[0].mxu0
    %v767 = vadd.f32 0.0, %v766
    %v768 = vpop.f32.mrb[0].mxu0
    %769 = vdwg.mxu0
    %v771 = vsel %vm136, %v674, 0
    %v774 = vsel %vm136, %v673, 0
    %776 = vmatprep.subr.mxu0 0.0
    %777 = vmatpush1.msra.mxu0 %v680
    %778 = vmatprep.subr.mxu0 0.0
    %779 = vmatpush1.msra.mxu0 %v681
    %780 = vmatprep.subr.mxu0 0.0
    %781 = vmatpush1.msra.mxu0 %v682
    %782 = vmatprep.subr.mxu0 0.0
    %783 = vmatpush1.msra.mxu0 %v683
    %784 = vmatprep.subr.mxu0 0.0
    %785 = vmatpush1.msra.mxu0 0.0
    %786 = vmatprep.subr.mxu0 0.0
    %787 = vmatpush1.msra.mxu0 0.0
    %788 = vmatprep.subr.mxu0 0.0
    %789 = vmatpush1.msra.mxu0 0.0
    %790 = vmatprep.subr.mxu0 0.0
    %791 = vmatpush1.msra.mxu0 0.0
    %792 = vmatprep.subr.mxu0 0.0
    %793 = vmatpush1.msra.mxu0 0.0
    %794 = vmatprep.subr.mxu0 0.0
    %795 = vmatpush1.msra.mxu0 0.0
    %796 = vmatprep.subr.mxu0 0.0
    %797 = vmatpush1.msra.mxu0 0.0
    %798 = vmatprep.subr.mxu0 0.0
    %799 = vmatpush1.msra.mxu0 0.0
    %800 = vmatprep.subr.mxu0 0.0
    %801 = vmatpush1.msra.mxu0 0.0
    %802 = vmatprep.subr.mxu0 0.0
    %803 = vmatpush1.msra.mxu0 0.0
    %804 = vmatprep.subr.mxu0 0.0
    %805 = vmatpush1.msra.mxu0 0.0
    %806 = vmatprep.subr.mxu0 0.0
    %807 = vmatpush1.msra.mxu0 0.0
    %808 = vmatprep.subr.mxu0 0.0
    %809 = vmatpush1.msra.mxu0 0.0
    %810 = vmatprep.subr.mxu0 0.0
    %811 = vmatpush1.msra.mxu0 0.0
    %812 = vmatprep.subr.mxu0 0.0
    %813 = vmatpush1.msra.mxu0 0.0
    %814 = vmatprep.subr.mxu0 0.0
    %815 = vmatpush1.msra.mxu0 0.0
    %816 = vmatprep.subr.mxu0 0.0
    %817 = vmatpush1.msra.mxu0 0.0
    %818 = vmatprep.subr.mxu0 0.0
    %819 = vmatpush1.msra.mxu0 0.0
    %820 = vmatprep.subr.mxu0 0.0
    %821 = vmatpush1.msra.mxu0 0.0
    %822 = vmatprep.subr.mxu0 0.0
    %823 = vmatpush1.msra.mxu0 0.0
    %824 = vmatprep.subr.mxu0 0.0
    %825 = vmatpush1.msra.mxu0 0.0
    %826 = vmatprep.subr.mxu0 0.0
    %827 = vmatpush1.msra.mxu0 0.0
    %828 = vmatprep.subr.mxu0 0.0
    %829 = vmatpush1.msra.mxu0 0.0
    %830 = vmatprep.subr.mxu0 0.0
    %831 = vmatpush1.msra.mxu0 0.0
    %832 = vmatprep.subr.mxu0 0.0
    %833 = vmatpush1.msra.mxu0 0.0
    %834 = vmatprep.subr.mxu0 0.0
    %835 = vmatpush1.msra.mxu0 0.0
    %836 = vmatprep.subr.mxu0 0.0
    %837 = vmatpush1.msra.mxu0 0.0
    %838 = vmatprep.subr.mxu0 0.0
    %839 = vmatpush1.msra.mxu0 0.0
    %840 = vmatprep.mubr.f32.mxu0 0.0
    %841 = vmatmul.mubr.f32.gmra.mrb[0].mxu0 %v771
    %v842 = vpop.f32.mrb[0].mxu0
    %v843 = vadd.f32 %v762, %v842
    %v844 = vpop.f32.mrb[0].mxu0
    %845 = vmatprep.mubr.f32.mxu0 0.0
    %846 = vmatmul.mubr.f32.gmra.mrb[0].mxu0 %v774
    %v847 = vpop.f32.mrb[0].mxu0
    %v848 = vadd.f32 %v767, %v847
    %v849 = vpop.f32.mrb[0].mxu0
    %850 = vdwg.mxu0
    %s851 = scalar_lea.vmem [#allocation10], 256
    %v852 = vld [vmem:[%s851] sm:$0xff]
    %v853 = vld [vmem:[%s851 + $0x8] sm:$0xff]
    %v854 = vld [vmem:[%s851 + $0x10] sm:$0xff]
    %v855 = vld [vmem:[%s851 + $0x18] sm:$0xff]
    %v857 = vsel %vm136, %v677, 0
    %v860 = vsel %vm136, %v678, 0
    %862 = vmatprep.subr.mxu0 0.0
    %863 = vmatpush1.msra.mxu0 %v852
    %864 = vmatprep.subr.mxu0 0.0
    %865 = vmatpush1.msra.mxu0 %v853
    %866 = vmatprep.subr.mxu0 0.0
    %867 = vmatpush1.msra.mxu0 %v854
    %868 = vmatprep.subr.mxu0 0.0
    %869 = vmatpush1.msra.mxu0 %v855
    %870 = vmatprep.subr.mxu0 0.0
    %871 = vmatpush1.msra.mxu0 0.0
    %872 = vmatprep.subr.mxu0 0.0
    %873 = vmatpush1.msra.mxu0 0.0
    %874 = vmatprep.subr.mxu0 0.0
    %875 = vmatpush1.msra.mxu0 0.0
    %876 = vmatprep.subr.mxu0 0.0
    %877 = vmatpush1.msra.mxu0 0.0
    %878 = vmatprep.subr.mxu0 0.0
    %879 = vmatpush1.msra.mxu0 0.0
    %880 = vmatprep.subr.mxu0 0.0
    %881 = vmatpush1.msra.mxu0 0.0
    %882 = vmatprep.subr.mxu0 0.0
    %883 = vmatpush1.msra.mxu0 0.0
    %884 = vmatprep.subr.mxu0 0.0
    %885 = vmatpush1.msra.mxu0 0.0
    %886 = vmatprep.subr.mxu0 0.0
    %887 = vmatpush1.msra.mxu0 0.0
    %888 = vmatprep.subr.mxu0 0.0
    %889 = vmatpush1.msra.mxu0 0.0
    %890 = vmatprep.subr.mxu0 0.0
    %891 = vmatpush1.msra.mxu0 0.0
    %892 = vmatprep.subr.mxu0 0.0
    %893 = vmatpush1.msra.mxu0 0.0
    %894 = vmatprep.subr.mxu0 0.0
    %895 = vmatpush1.msra.mxu0 0.0
    %896 = vmatprep.subr.mxu0 0.0
    %897 = vmatpush1.msra.mxu0 0.0
    %898 = vmatprep.subr.mxu0 0.0
    %899 = vmatpush1.msra.mxu0 0.0
    %900 = vmatprep.subr.mxu0 0.0
    %901 = vmatpush1.msra.mxu0 0.0
    %902 = vmatprep.subr.mxu0 0.0
    %903 = vmatpush1.msra.mxu0 0.0
    %904 = vmatprep.subr.mxu0 0.0
    %905 = vmatpush1.msra.mxu0 0.0
    %906 = vmatprep.subr.mxu0 0.0
    %907 = vmatpush1.msra.mxu0 0.0
    %908 = vmatprep.subr.mxu0 0.0
    %909 = vmatpush1.msra.mxu0 0.0
    %910 = vmatprep.subr.mxu0 0.0
    %911 = vmatpush1.msra.mxu0 0.0
    %912 = vmatprep.subr.mxu0 0.0
    %913 = vmatpush1.msra.mxu0 0.0
    %914 = vmatprep.subr.mxu0 0.0
    %915 = vmatpush1.msra.mxu0 0.0
    %916 = vmatprep.subr.mxu0 0.0
    %917 = vmatpush1.msra.mxu0 0.0
    %918 = vmatprep.subr.mxu0 0.0
    %919 = vmatpush1.msra.mxu0 0.0
    %920 = vmatprep.subr.mxu0 0.0
    %921 = vmatpush1.msra.mxu0 0.0
    %922 = vmatprep.subr.mxu0 0.0
    %923 = vmatpush1.msra.mxu0 0.0
    %924 = vmatprep.subr.mxu0 0.0
    %925 = vmatpush1.msra.mxu0 0.0
    %926 = vmatprep.mubr.f32.mxu0 0.0
    %927 = vmatmul.mubr.f32.gmra.mrb[0].mxu0 %v857
    %v928 = vpop.f32.mrb[0].mxu0
    %v929 = vadd.f32 0.0, %v928
    %v930 = vpop.f32.mrb[0].mxu0
    %931 = vmatprep.mubr.f32.mxu0 0.0
    %932 = vmatmul.mubr.f32.gmra.mrb[0].mxu0 %v860
    %v933 = vpop.f32.mrb[0].mxu0
    %v934 = vadd.f32 0.0, %v933
    %v935 = vpop.f32.mrb[0].mxu0
    %936 = vdwg.mxu0
    %v937 = vadd.f32 %v843, %v929
    %v938 = vadd.f32 %v848, %v934
    %s939 = sld [smem:[#allocation5 + $0x2]]
    %v940 = vstv %s939
    %v941 = vadd.f32 %v937, %v940
    %v942 = vadd.f32 %v938, %v940
    %v943 = vmax.f32 %v941, 0.0
    %v944 = vmax.f32 %v942, 0.0
    %v945 = vmul.f32 %v943, %v111
    %v946 = vmul.f32 %v944, %v112
    %v947 = vrot.slane %v945, 7
    %v948 = vrot.slane %v946, 7
    %v949 = vsel %vm119, %v947, %v948
    %v950 = vsel %vm119, %v948, %v947
    %v951 = vrot.slane %v945, 1
    %v952 = vrot.slane %v946, 1
    %v953 = vsel %vm124, %v951, %v952
    %v954 = vsel %vm124, %v952, %v951
    %s955 = scalar_lea.vmem [#allocation10], 288
    %v956 = vld [vmem:[%s955] sm:$0xff]
    %v957 = vld [vmem:[%s955 + $0x8] sm:$0xff]
    %v958 = vld [vmem:[%s955 + $0x10] sm:$0xff]
    %v959 = vld [vmem:[%s955 + $0x18] sm:$0xff]
    %s960 = scalar_lea.vmem [#allocation10], 320
    %v961 = vld [vmem:[%s960] sm:$0xff]
    %v962 = vld [vmem:[%s960 + $0x8] sm:$0xff]
    %v963 = vld [vmem:[%s960 + $0x10] sm:$0xff]
    %v964 = vld [vmem:[%s960 + $0x18] sm:$0xff]
    %v966 = vsel %vm136, %v945, 0
    %v969 = vsel %vm136, %v946, 0
    %971 = vmatprep.subr.mxu0 0.0
    %972 = vmatpush1.msra.mxu0 %v961
    %973 = vmatprep.subr.mxu0 0.0
    %974 = vmatpush1.msra.mxu0 %v962
    %975 = vmatprep.subr.mxu0 0.0
    %976 = vmatpush1.msra.mxu0 %v963
    %977 = vmatprep.subr.mxu0 0.0
    %978 = vmatpush1.msra.mxu0 %v964
    %979 = vmatprep.subr.mxu0 0.0
    %980 = vmatpush1.msra.mxu0 0.0
    %981 = vmatprep.subr.mxu0 0.0
    %982 = vmatpush1.msra.mxu0 0.0
    %983 = vmatprep.subr.mxu0 0.0
    %984 = vmatpush1.msra.mxu0 0.0
    %985 = vmatprep.subr.mxu0 0.0
    %986 = vmatpush1.msra.mxu0 0.0
    %987 = vmatprep.subr.mxu0 0.0
    %988 = vmatpush1.msra.mxu0 0.0
    %989 = vmatprep.subr.mxu0 0.0
    %990 = vmatpush1.msra.mxu0 0.0
    %991 = vmatprep.subr.mxu0 0.0
    %992 = vmatpush1.msra.mxu0 0.0
    %993 = vmatprep.subr.mxu0 0.0
    %994 = vmatpush1.msra.mxu0 0.0
    %995 = vmatprep.subr.mxu0 0.0
    %996 = vmatpush1.msra.mxu0 0.0
    %997 = vmatprep.subr.mxu0 0.0
    %998 = vmatpush1.msra.mxu0 0.0
    %999 = vmatprep.subr.mxu0 0.0
    %1000 = vmatpush1.msra.mxu0 0.0
    %1001 = vmatprep.subr.mxu0 0.0
    %1002 = vmatpush1.msra.mxu0 0.0
    %1003 = vmatprep.subr.mxu0 0.0
    %1004 = vmatpush1.msra.mxu0 0.0
    %1005 = vmatprep.subr.mxu0 0.0
    %1006 = vmatpush1.msra.mxu0 0.0
    %1007 = vmatprep.subr.mxu0 0.0
    %1008 = vmatpush1.msra.mxu0 0.0
    %1009 = vmatprep.subr.mxu0 0.0
    %1010 = vmatpush1.msra.mxu0 0.0
    %1011 = vmatprep.subr.mxu0 0.0
    %1012 = vmatpush1.msra.mxu0 0.0
    %1013 = vmatprep.subr.mxu0 0.0
    %1014 = vmatpush1.msra.mxu0 0.0
    %1015 = vmatprep.subr.mxu0 0.0
    %1016 = vmatpush1.msra.mxu0 0.0
    %1017 = vmatprep.subr.mxu0 0.0
    %1018 = vmatpush1.msra.mxu0 0.0
    %1019 = vmatprep.subr.mxu0 0.0
    %1020 = vmatpush1.msra.mxu0 0.0
    %1021 = vmatprep.subr.mxu0 0.0
    %1022 = vmatpush1.msra.mxu0 0.0
    %1023 = vmatprep.subr.mxu0 0.0
    %1024 = vmatpush1.msra.mxu0 0.0
    %1025 = vmatprep.subr.mxu0 0.0
    %1026 = vmatpush1.msra.mxu0 0.0
    %1027 = vmatprep.subr.mxu0 0.0
    %1028 = vmatpush1.msra.mxu0 0.0
    %1029 = vmatprep.subr.mxu0 0.0
    %1030 = vmatpush1.msra.mxu0 0.0
    %1031 = vmatprep.subr.mxu0 0.0
    %1032 = vmatpush1.msra.mxu0 0.0
    %1033 = vmatprep.subr.mxu0 0.0
    %1034 = vmatpush1.msra.mxu0 0.0
    %1035 = vmatprep.mubr.f32.mxu0 0.0
    %1036 = vmatmul.mubr.f32.gmra.mrb[0].mxu0 %v966
    %v1037 = vpop.f32.mrb[0].mxu0
    %v1038 = vadd.f32 0.0, %v1037
    %v1039 = vpop.f32.mrb[0].mxu0
    %1040 = vmatprep.mubr.f32.mxu0 0.0
    %1041 = vmatmul.mubr.f32.gmra.mrb[0].mxu0 %v969
    %v1042 = vpop.f32.mrb[0].mxu0
    %v1043 = vadd.f32 0.0, %v1042
    %v1044 = vpop.f32.mrb[0].mxu0
    %1045 = vdwg.mxu0
    %v1047 = vsel %vm136, %v950, 0
    %v1050 = vsel %vm136, %v949, 0
    %1052 = vmatprep.subr.mxu0 0.0
    %1053 = vmatpush1.msra.mxu0 %v956
    %1054 = vmatprep.subr.mxu0 0.0
    %1055 = vmatpush1.msra.mxu0 %v957
    %1056 = vmatprep.subr.mxu0 0.0
    %1057 = vmatpush1.msra.mxu0 %v958
    %1058 = vmatprep.subr.mxu0 0.0
    %1059 = vmatpush1.msra.mxu0 %v959
    %1060 = vmatprep.subr.mxu0 0.0
    %1061 = vmatpush1.msra.mxu0 0.0
    %1062 = vmatprep.subr.mxu0 0.0
    %1063 = vmatpush1.msra.mxu0 0.0
    %1064 = vmatprep.subr.mxu0 0.0
    %1065 = vmatpush1.msra.mxu0 0.0
    %1066 = vmatprep.subr.mxu0 0.0
    %1067 = vmatpush1.msra.mxu0 0.0
    %1068 = vmatprep.subr.mxu0 0.0
    %1069 = vmatpush1.msra.mxu0 0.0
    %1070 = vmatprep.subr.mxu0 0.0
    %1071 = vmatpush1.msra.mxu0 0.0
    %1072 = vmatprep.subr.mxu0 0.0
    %1073 = vmatpush1.msra.mxu0 0.0
    %1074 = vmatprep.subr.mxu0 0.0
    %1075 = vmatpush1.msra.mxu0 0.0
    %1076 = vmatprep.subr.mxu0 0.0
    %1077 = vmatpush1.msra.mxu0 0.0
    %1078 = vmatprep.subr.mxu0 0.0
    %1079 = vmatpush1.msra.mxu0 0.0
    %1080 = vmatprep.subr.mxu0 0.0
    %1081 = vmatpush1.msra.mxu0 0.0
    %1082 = vmatprep.subr.mxu0 0.0
    %1083 = vmatpush1.msra.mxu0 0.0
    %1084 = vmatprep.subr.mxu0 0.0
    %1085 = vmatpush1.msra.mxu0 0.0
    %1086 = vmatprep.subr.mxu0 0.0
    %1087 = vmatpush1.msra.mxu0 0.0
    %1088 = vmatprep.subr.mxu0 0.0
    %1089 = vmatpush1.msra.mxu0 0.0
    %1090 = vmatprep.subr.mxu0 0.0
    %1091 = vmatpush1.msra.mxu0 0.0
    %1092 = vmatprep.subr.mxu0 0.0
    %1093 = vmatpush1.msra.mxu0 0.0
    %1094 = vmatprep.subr.mxu0 0.0
    %1095 = vmatpush1.msra.mxu0 0.0
    %1096 = vmatprep.subr.mxu0 0.0
    %1097 = vmatpush1.msra.mxu0 0.0
    %1098 = vmatprep.subr.mxu0 0.0
    %1099 = vmatpush1.msra.mxu0 0.0
    %1100 = vmatprep.subr.mxu0 0.0
    %1101 = vmatpush1.msra.mxu0 0.0
    %1102 = vmatprep.subr.mxu0 0.0
    %1103 = vmatpush1.msra.mxu0 0.0
    %1104 = vmatprep.subr.mxu0 0.0
    %1105 = vmatpush1.msra.mxu0 0.0
    %1106 = vmatprep.subr.mxu0 0.0
    %1107 = vmatpush1.msra.mxu0 0.0
    %1108 = vmatprep.subr.mxu0 0.0
    %1109 = vmatpush1.msra.mxu0 0.0
    %1110 = vmatprep.subr.mxu0 0.0
    %1111 = vmatpush1.msra.mxu0 0.0
    %1112 = vmatprep.subr.mxu0 0.0
    %1113 = vmatpush1.msra.mxu0 0.0
    %1114 = vmatprep.subr.mxu0 0.0
    %1115 = vmatpush1.msra.mxu0 0.0
    %1116 = vmatprep.mubr.f32.mxu0 0.0
    %1117 = vmatmul.mubr.f32.gmra.mrb[0].mxu0 %v1047
    %v1118 = vpop.f32.mrb[0].mxu0
    %v1119 = vadd.f32 %v1038, %v1118
    %v1120 = vpop.f32.mrb[0].mxu0
    %1121 = vmatprep.mubr.f32.mxu0 0.0
    %1122 = vmatmul.mubr.f32.gmra.mrb[0].mxu0 %v1050
    %v1123 = vpop.f32.mrb[0].mxu0
    %v1124 = vadd.f32 %v1043, %v1123
    %v1125 = vpop.f32.mrb[0].mxu0
    %1126 = vdwg.mxu0
    %s1127 = scalar_lea.vmem [#allocation10], 352
    %v1128 = vld [vmem:[%s1127] sm:$0xff]
    %v1129 = vld [vmem:[%s1127 + $0x8] sm:$0xff]
    %v1130 = vld [vmem:[%s1127 + $0x10] sm:$0xff]
    %v1131 = vld [vmem:[%s1127 + $0x18] sm:$0xff]
    %v1133 = vsel %vm136, %v953, 0
    %v1136 = vsel %vm136, %v954, 0
    %1138 = vmatprep.subr.mxu0 0.0
    %1139 = vmatpush1.msra.mxu0 %v1128
    %1140 = vmatprep.subr.mxu0 0.0
    %1141 = vmatpush1.msra.mxu0 %v1129
    %1142 = vmatprep.subr.mxu0 0.0
    %1143 = vmatpush1.msra.mxu0 %v1130
    %1144 = vmatprep.subr.mxu0 0.0
    %1145 = vmatpush1.msra.mxu0 %v1131
    %1146 = vmatprep.subr.mxu0 0.0
    %1147 = vmatpush1.msra.mxu0 0.0
    %1148 = vmatprep.subr.mxu0 0.0
    %1149 = vmatpush1.msra.mxu0 0.0
    %1150 = vmatprep.subr.mxu0 0.0
    %1151 = vmatpush1.msra.mxu0 0.0
    %1152 = vmatprep.subr.mxu0 0.0
    %1153 = vmatpush1.msra.mxu0 0.0
    %1154 = vmatprep.subr.mxu0 0.0
    %1155 = vmatpush1.msra.mxu0 0.0
    %1156 = vmatprep.subr.mxu0 0.0
    %1157 = vmatpush1.msra.mxu0 0.0
    %1158 = vmatprep.subr.mxu0 0.0
    %1159 = vmatpush1.msra.mxu0 0.0
    %1160 = vmatprep.subr.mxu0 0.0
    %1161 = vmatpush1.msra.mxu0 0.0
    %1162 = vmatprep.subr.mxu0 0.0
    %1163 = vmatpush1.msra.mxu0 0.0
    %1164 = vmatprep.subr.mxu0 0.0
    %1165 = vmatpush1.msra.mxu0 0.0
    %1166 = vmatprep.subr.mxu0 0.0
    %1167 = vmatpush1.msra.mxu0 0.0
    %1168 = vmatprep.subr.mxu0 0.0
    %1169 = vmatpush1.msra.mxu0 0.0
    %1170 = vmatprep.subr.mxu0 0.0
    %1171 = vmatpush1.msra.mxu0 0.0
    %1172 = vmatprep.subr.mxu0 0.0
    %1173 = vmatpush1.msra.mxu0 0.0
    %1174 = vmatprep.subr.mxu0 0.0
    %1175 = vmatpush1.msra.mxu0 0.0
    %1176 = vmatprep.subr.mxu0 0.0
    %1177 = vmatpush1.msra.mxu0 0.0
    %1178 = vmatprep.subr.mxu0 0.0
    %1179 = vmatpush1.msra.mxu0 0.0
    %1180 = vmatprep.subr.mxu0 0.0
    %1181 = vmatpush1.msra.mxu0 0.0
    %1182 = vmatprep.subr.mxu0 0.0
    %1183 = vmatpush1.msra.mxu0 0.0
    %1184 = vmatprep.subr.mxu0 0.0
    %1185 = vmatpush1.msra.mxu0 0.0
    %1186 = vmatprep.subr.mxu0 0.0
    %1187 = vmatpush1.msra.mxu0 0.0
    %1188 = vmatprep.subr.mxu0 0.0
    %1189 = vmatpush1.msra.mxu0 0.0
    %1190 = vmatprep.subr.mxu0 0.0
    %1191 = vmatpush1.msra.mxu0 0.0
    %1192 = vmatprep.subr.mxu0 0.0
    %1193 = vmatpush1.msra.mxu0 0.0
    %1194 = vmatprep.subr.mxu0 0.0
    %1195 = vmatpush1.msra.mxu0 0.0
    %1196 = vmatprep.subr.mxu0 0.0
    %1197 = vmatpush1.msra.mxu0 0.0
    %1198 = vmatprep.subr.mxu0 0.0
    %1199 = vmatpush1.msra.mxu0 0.0
    %1200 = vmatprep.subr.mxu0 0.0
    %1201 = vmatpush1.msra.mxu0 0.0
    %1202 = vmatprep.mubr.f32.mxu0 0.0
    %1203 = vmatmul.mubr.f32.gmra.mrb[0].mxu0 %v1133
    %v1204 = vpop.f32.mrb[0].mxu0
    %v1205 = vadd.f32 0.0, %v1204
    %v1206 = vpop.f32.mrb[0].mxu0
    %1207 = vmatprep.mubr.f32.mxu0 0.0
    %1208 = vmatmul.mubr.f32.gmra.mrb[0].mxu0 %v1136
    %v1209 = vpop.f32.mrb[0].mxu0
    %v1210 = vadd.f32 0.0, %v1209
    %v1211 = vpop.f32.mrb[0].mxu0
    %1212 = vdwg.mxu0
    %v1213 = vadd.f32 %v1119, %v1205
    %v1214 = vadd.f32 %v1124, %v1210
    %s1215 = sld [smem:[#allocation5 + $0x3]]
    %v1216 = vstv %s1215
    %v1217 = vadd.f32 %v1213, %v1216
    %v1218 = vadd.f32 %v1214, %v1216
    %v1219 = vmax.f32 %v1217, 0.0
    %v1220 = vmax.f32 %v1218, 0.0
    %v1221 = vmul.f32 %v1219, %v111
    %v1222 = vmul.f32 %v1220, %v112
    %v1223 = vrot.slane %v1221, 1
    %v1224 = vrot.slane %v1222, 1
    %v1225 = vsel %vm124, %v1223, %v1224
    %v1226 = vsel %vm124, %v1224, %v1223
    %v1227 = vld [vmem:[%s4] sm:$0x1]
    %v1228 = vlaneseq
    %v1229 = vshrl.u32 %v1228, 7
    %v1230 = vsub.s32 0, %v1229
    %v1231 = vrot.slane %v1227, %v1230
    %v1232 = vmul.f32 %v1221, %v1231
    %v1233 = vmul.f32 %v1222, %v1231
    %v1234 = vsel %vm136, %v1232, 0.0
    %1235 = vadd.xlane.f32.xlu0 %v1234
    %v1236 = vpop.xlane.xlu0 %1235
    %v1237 = vsel %vm136, %v1233, 0.0
    %1238 = vadd.xlane.f32.xlu0 %v1237
    %v1239 = vpop.xlane.xlu0 %1238
    %v1240 = vld [vmem:[%s4 + $0x1] sm:$0x1]
    %v1241 = vlaneseq
    %v1242 = vshrl.u32 %v1241, 7
    %v1243 = vsub.s32 0, %v1242
    %v1244 = vrot.slane %v1240, %v1243
    %v1245 = vmul.f32 %v1225, %v1244
    %v1246 = vmul.f32 %v1226, %v1244
    %v1247 = vsel %vm136, %v1245, 0.0
    %1248 = vadd.xlane.f32.xlu0 %v1247
    %v1249 = vpop.xlane.xlu0 %1248
    %v1250 = vsel %vm136, %v1246, 0.0
    %1251 = vadd.xlane.f32.xlu0 %v1250
    %v1252 = vpop.xlane.xlu0 %1251
    %v1253 = vadd.f32 %v1236, %v1249
    %v1254 = vadd.f32 %v1239, %v1252
    %s1255 = sld [smem:[#allocation5 + $0x4]]
    %v1256 = vstv %s1255
    %v1257 = vadd.f32 %v1253, %v1256
    %v1258 = vadd.f32 %v1254, %v1256
    %v1259 = vxor.u32 %v1257, 2147483648
    %v1260 = vxor.u32 %v1258, 2147483648
    %v1261 = vmul.f32 %v1259, 1.442695
    %v1262 = vpow.pop %v1261
    %v1263 = vmul.f32 %v1260, 1.442695
    %v1264 = vpow.pop %v1263
    %v1265 = vadd.f32 %v1262, 1.0
    %v1266 = vadd.f32 %v1264, 1.0
    %v1267 = vrcp.pop %v1265
    %v1268 = vmul.f32 1.0, %v1267
    %v1269 = vrcp.pop %v1266
    %v1270 = vmul.f32 1.0, %v1269
    %vm1271 = vcmask 7168
    %1272 = vst.msk [vmem:[%s8] sm:$0xff] %vm1271, %v1268
    %1273 = vst.msk [vmem:[%s8 + $0x8] sm:$0xff] %vm1271, %v1270
    %vm1274 = vcmp.ge.f32.partialorder %v1268, 0.5
    %vm1275 = vcmp.ge.f32.partialorder %v1270, 0.5
    %v1276 = vsel %vm1274, 0.0, 1.0
    %v1277 = vsel %vm1275, 0.0, 1.0
    %v1278 = vrot.slane %v1276, 7
    %v1279 = vrot.slane %v1277, 7
    %v1280 = vsel %vm119, %v1278, %v1279
    %v1281 = vsel %vm119, %v1279, %v1278
    %vm1282 = vcmp.eq.s32.totalorder %v104, 0
    %vm1283 = vcmp.eq.s32.totalorder %v105, 0
    %v1284 = vsel %vm1282, 1, 0
    %v1285 = vsel %vm1283, 1, 0
    %vm1286 = vcmp.eq.s32.totalorder %v1284, 1
    %vm1287 = vcmp.eq.s32.totalorder %v1285, 1
    %v1288 = vsel %vm1286, 0.0, %v1281
    %v1289 = vsel %vm1287, 0.0, %v1280
    %1290 = vst [vmem:[#allocation3] sm:$0xff] %v1288
    %1291 = vst [vmem:[#allocation3 + $0x8] sm:$0xff] %v1289
    %v1292 = vld [vmem:[#allocation9] sm:$0xff]
    %v1293 = vld [vmem:[#allocation9 + $0x8] sm:$0xff]
    %v1294 = vpack.c.bf16 %v1293, %v1292
    %v1295 = vld [vmem:[#allocation12] sm:$0xff]
    %v1296 = vld [vmem:[#allocation12 + $0x8] sm:$0xff]
    %v1297 = vld [vmem:[#allocation12 + $0x10] sm:$0xff]
    %v1298 = vld [vmem:[#allocation12 + $0x18] sm:$0xff]
    %v1299 = vld [vmem:[#allocation12 + $0x20] sm:$0xff]
    %v1300 = vld [vmem:[#allocation12 + $0x28] sm:$0xff]
    %v1301 = vld [vmem:[#allocation12 + $0x30] sm:$0xff]
    %v1302 = vld [vmem:[#allocation12 + $0x38] sm:$0xff]
    %v1303 = vld [vmem:[%s7] sm:$0xf]
    %v1305 = vlaneseq
    %v1306 = vshrl.u32 %v1305, 7
    %v1307 = vsub.s32 0, %v1306
    %v1308 = vrot.slane %v1303, %v1307
    %v1309 = vlaneseq
    %v1310 = vshrl.u32 %v1309, 7
    %v1311 = vsub.s32 1, %v1310
    %v1312 = vrot.slane %v1303, %v1311
    %v1313 = vlaneseq
    %v1314 = vshrl.u32 %v1313, 7
    %v1315 = vsub.s32 2, %v1314
    %v1316 = vrot.slane %v1303, %v1315
    %v1317 = vlaneseq
    %v1318 = vshrl.u32 %v1317, 7
    %v1319 = vsub.s32 3, %v1318
    %v1320 = vrot.slane %v1303, %v1319
    %v1333 = vunpack.c.l.b16 %v1295
    %v1334 = vunpack.c.h.b16 %v1295
    %v1335 = vunpack.c.l.b16 %v1296
    %v1336 = vunpack.c.h.b16 %v1296
    %v1337 = vunpack.c.l.b16 %v1297
    %v1338 = vunpack.c.h.b16 %v1297
    %v1339 = vunpack.c.l.b16 %v1298
    %v1340 = vunpack.c.h.b16 %v1298
    %v1341 = vunpack.c.l.b16 %v1299
    %v1342 = vunpack.c.h.b16 %v1299
    %v1343 = vunpack.c.l.b16 %v1300
    %v1344 = vunpack.c.h.b16 %v1300
    %v1345 = vunpack.c.l.b16 %v1301
    %v1346 = vunpack.c.h.b16 %v1301
    %v1347 = vunpack.c.l.b16 %v1302
    %v1348 = vunpack.c.h.b16 %v1302
    %v1349 = vpack.c.b16 %v1337, %v1333
    %v1350 = vpack.c.b16 %v1338, %v1334
    %v1351 = vpack.c.b16 %v1339, %v1335
    %v1352 = vpack.c.b16 %v1340, %v1336
    %v1353 = vpack.c.b16 %v1345, %v1341
    %v1354 = vpack.c.b16 %v1346, %v1342
    %v1355 = vpack.c.b16 %v1347, %v1343
    %v1356 = vpack.c.b16 %v1348, %v1344
    %v1366 = vsel %vm136, %v1294, 0
    %1368 = vmatprep.subr.bf16.mxu0 %v1350
    %1369 = vmatpush1.bf16.msra.mxu0 %v1349
    %1370 = vmatprep.subr.bf16.mxu0 %v1354
    %1371 = vmatpush1.bf16.msra.mxu0 %v1353
    %1372 = vmatprep.subr.bf16.mxu0 0
    %1373 = vmatpush1.bf16.msra.mxu0 0
    %1374 = vmatprep.subr.bf16.mxu0 0
    %1375 = vmatpush1.bf16.msra.mxu0 0
    %1376 = vmatprep.subr.bf16.mxu0 0
    %1377 = vmatpush1.bf16.msra.mxu0 0
    %1378 = vmatprep.subr.bf16.mxu0 0
    %1379 = vmatpush1.bf16.msra.mxu0 0
    %1380 = vmatprep.subr.bf16.mxu0 0
    %1381 = vmatpush1.bf16.msra.mxu0 0
    %1382 = vmatprep.subr.bf16.mxu0 0
    %1383 = vmatpush1.bf16.msra.mxu0 0
    %1384 = vmatprep.subr.bf16.mxu0 0
    %1385 = vmatpush1.bf16.msra.mxu0 0
    %1386 = vmatprep.subr.bf16.mxu0 0
    %1387 = vmatpush1.bf16.msra.mxu0 0
    %1388 = vmatprep.subr.bf16.mxu0 0
    %1389 = vmatpush1.bf16.msra.mxu0 0
    %1390 = vmatprep.subr.bf16.mxu0 0
    %1391 = vmatpush1.bf16.msra.mxu0 0
    %1392 = vmatprep.subr.bf16.mxu0 0
    %1393 = vmatpush1.bf16.msra.mxu0 0
    %1394 = vmatprep.subr.bf16.mxu0 0
    %1395 = vmatpush1.bf16.msra.mxu0 0
    %1396 = vmatprep.subr.bf16.mxu0 0
    %1397 = vmatpush1.bf16.msra.mxu0 0
    %1398 = vmatprep.subr.bf16.mxu0 0
    %1399 = vmatpush1.bf16.msra.mxu0 0
    %1400 = vmatprep.mubr.bf16.mxu0 0
    %1401 = vmatmul.mubr.bf16.gmra.mrb[0].mxu0 %v1366
    %v1402 = vpop.f32.mrb[0].mxu0
    %v1403 = vadd.f32 %v1308, %v1402
    %v1404 = vpop.f32.mrb[0].mxu0
    %v1405 = vadd.f32 %v1312, %v1404
    %v1406 = vpop.f32.mrb[0].mxu0
    %v1407 = vadd.f32 %v1308, %v1406
    %v1408 = vpop.f32.mrb[0].mxu0
    %v1409 = vadd.f32 %v1312, %v1408
    %1410 = vdwg.mxu0
    %1411 = vmatprep.subr.bf16.mxu0 %v1352
    %1412 = vmatpush1.bf16.msra.mxu0 %v1351
    %1413 = vmatprep.subr.bf16.mxu0 %v1356
    %1414 = vmatpush1.bf16.msra.mxu0 %v1355
    %1415 = vmatprep.subr.bf16.mxu0 0
    %1416 = vmatpush1.bf16.msra.mxu0 0
    %1417 = vmatprep.subr.bf16.mxu0 0
    %1418 = vmatpush1.bf16.msra.mxu0 0
    %1419 = vmatprep.subr.bf16.mxu0 0
    %1420 = vmatpush1.bf16.msra.mxu0 0
    %1421 = vmatprep.subr.bf16.mxu0 0
    %1422 = vmatpush1.bf16.msra.mxu0 0
    %1423 = vmatprep.subr.bf16.mxu0 0
    %1424 = vmatpush1.bf16.msra.mxu0 0
    %1425 = vmatprep.subr.bf16.mxu0 0
    %1426 = vmatpush1.bf16.msra.mxu0 0
    %1427 = vmatprep.subr.bf16.mxu0 0
    %1428 = vmatpush1.bf16.msra.mxu0 0
    %1429 = vmatprep.subr.bf16.mxu0 0
    %1430 = vmatpush1.bf16.msra.mxu0 0
    %1431 = vmatprep.subr.bf16.mxu0 0
    %1432 = vmatpush1.bf16.msra.mxu0 0
    %1433 = vmatprep.subr.bf16.mxu0 0
    %1434 = vmatpush1.bf16.msra.mxu0 0
    %1435 = vmatprep.subr.bf16.mxu0 0
    %1436 = vmatpush1.bf16.msra.mxu0 0
    %1437 = vmatprep.subr.bf16.mxu0 0
    %1438 = vmatpush1.bf16.msra.mxu0 0
    %1439 = vmatprep.subr.bf16.mxu0 0
    %1440 = vmatpush1.bf16.msra.mxu0 0
    %1441 = vmatprep.subr.bf16.mxu0 0
    %1442 = vmatpush1.bf16.msra.mxu0 0
    %1443 = vmatprep.mubr.bf16.mxu0 0
    %1444 = vmatmul.mubr.bf16.gmra.mrb[0].mxu0 %v1366
    %v1445 = vpop.f32.mrb[0].mxu0
    %v1446 = vadd.f32 %v1316, %v1445
    %v1447 = vpop.f32.mrb[0].mxu0
    %v1448 = vadd.f32 %v1320, %v1447
    %v1449 = vpop.f32.mrb[0].mxu0
    %v1450 = vadd.f32 %v1316, %v1449
    %v1451 = vpop.f32.mrb[0].mxu0
    %v1452 = vadd.f32 %v1320, %v1451
    %1453 = vdwg.mxu0
    %1454 = vst [vmem:[#allocation2] sm:$0xff] %v1403
    %1455 = vst [vmem:[#allocation2 + $0x8] sm:$0xff] %v1405
    %1456 = vst [vmem:[#allocation2 + $0x10] sm:$0xff] %v1446
    %1457 = vst [vmem:[#allocation2 + $0x18] sm:$0xff] %v1448
    %1458 = vst [vmem:[#allocation2 + $0x20] sm:$0xff] %v1407
    %1459 = vst [vmem:[#allocation2 + $0x28] sm:$0xff] %v1409
    %1460 = vst [vmem:[#allocation2 + $0x30] sm:$0xff] %v1450
    %1461 = vst [vmem:[#allocation2 + $0x38] sm:$0xff] %v1452
    %s1462 = sadd.s32 %s102, 7
    %p1463 = scmp.lt.s32.totalorder %s1462, 0
    %s1464 = ssub.s32 0, %s1462
    %s1465 = scalar_select %p1463, %s1464, %s1462
    %s1466 = sshrl.u32 %s1465, 3
    %s1467 = ssub.s32 0, %s1466
    %s1468 = scalar_select %p1463, %s1467, %s1466
    // While loop
    $region54: #{tpu_custom_call.1} parent=1 // loop_pre_header
      _
    $region55: #{tpu_custom_call.1} parent=1 // loop_header
      %s1470 = sphi 0, %s1472
      %p1471 = scmp.ge.s32.totalorder %s1470, %s1468
      %v1475 = vphi 0.0, %v2723
      %v1476 = vphi 0.0, %v2721
    $region56: #{tpu_custom_call.1} parent=1 // loop_header_branch
      %1474 = sbr.rel (%p1471) target = $region60
    $region57: #{tpu_custom_call.1} parent=1 // loop_body
      %s1477 = smul.u32 %s1470, 8
      %s1478 = sshra.s32 %s1477, 3
      %s1479 = sand.u32 %s1477, 7
      %s1480 = smul.u32 %s1478, 4
      %s1481 = smul.addr %s1480, 8
      %s1482 = scalar_lea.vmem [#allocation2], %s1481
      %v1483 = vld [vmem:[%s1482] sm:$0xff]
      %v1484 = vld [vmem:[%s1482 + $0x8] sm:$0xff]
      %v1485 = vld [vmem:[%s1482 + $0x10] sm:$0xff]
      %v1486 = vld [vmem:[%s1482 + $0x18] sm:$0xff]
      %s1487 = scalar_lea.vmem [#allocation3], %s1477
      %v1488 = vld [vmem:[%s1487] sm:$0xff]
      %v1490 = vrot.slane %v1488, 1
      %v1492 = vmul.f32 %v1475, %v1490
      %v1493 = vmul.f32 %v1476, %v1490
      %v1494 = vpack.c.bf16 %v1492, %v1492
      %v1495 = vld [vmem:[#allocation13] sm:$0xff]
      %v1496 = vld [vmem:[#allocation13 + $0x8] sm:$0xff]
      %v1497 = vld [vmem:[#allocation13 + $0x10] sm:$0xff]
      %v1498 = vld [vmem:[#allocation13 + $0x18] sm:$0xff]
      %v1499 = vld [vmem:[#allocation13 + $0x20] sm:$0xff]
      %v1500 = vld [vmem:[#allocation13 + $0x28] sm:$0xff]
      %v1501 = vld [vmem:[#allocation13 + $0x30] sm:$0xff]
      %v1502 = vld [vmem:[#allocation13 + $0x38] sm:$0xff]
      %v1503 = vld [vmem:[#allocation13 + $0x40] sm:$0xff]
      %v1504 = vld [vmem:[#allocation13 + $0x48] sm:$0xff]
      %v1505 = vld [vmem:[#allocation13 + $0x50] sm:$0xff]
      %v1506 = vld [vmem:[#allocation13 + $0x58] sm:$0xff]
      %v1507 = vld [vmem:[#allocation13 + $0x60] sm:$0xff]
      %v1508 = vld [vmem:[#allocation13 + $0x68] sm:$0xff]
      %v1509 = vld [vmem:[#allocation13 + $0x70] sm:$0xff]
      %v1510 = vld [vmem:[#allocation13 + $0x78] sm:$0xff]
      %v1511 = vld [vmem:[#allocation13 + $0x80] sm:$0xff]
      %v1512 = vld [vmem:[#allocation13 + $0x88] sm:$0xff]
      %v1513 = vld [vmem:[#allocation13 + $0x90] sm:$0xff]
      %v1514 = vld [vmem:[#allocation13 + $0x98] sm:$0xff]
      %v1515 = vld [vmem:[#allocation13 + $0xa0] sm:$0xff]
      %v1516 = vld [vmem:[#allocation13 + $0xa8] sm:$0xff]
      %v1517 = vld [vmem:[#allocation13 + $0xb0] sm:$0xff]
      %v1518 = vld [vmem:[#allocation13 + $0xb8] sm:$0xff]
      %v1519 = vld [vmem:[#allocation13 + $0xc0] sm:$0xff]
      %v1520 = vld [vmem:[#allocation13 + $0xc8] sm:$0xff]
      %v1521 = vld [vmem:[#allocation13 + $0xd0] sm:$0xff]
      %v1522 = vld [vmem:[#allocation13 + $0xd8] sm:$0xff]
      %v1523 = vld [vmem:[#allocation13 + $0xe0] sm:$0xff]
      %v1524 = vld [vmem:[#allocation13 + $0xe8] sm:$0xff]
      %v1525 = vld [vmem:[#allocation13 + $0xf0] sm:$0xff]
      %v1526 = vld [vmem:[#allocation13 + $0xf8] sm:$0xff]
      %v1528 = vshrl.u32 %v1494, 16
      %v1530 = vrot.slane %v1528, 3
      %v1564 = vunpack.c.l.b16 %v1495
      %v1565 = vunpack.c.h.b16 %v1495
      %v1566 = vunpack.c.l.b16 %v1496
      %v1567 = vunpack.c.h.b16 %v1496
      %v1568 = vunpack.c.l.b16 %v1497
      %v1569 = vunpack.c.h.b16 %v1497
      %v1570 = vunpack.c.l.b16 %v1498
      %v1571 = vunpack.c.h.b16 %v1498
      %v1572 = vunpack.c.l.b16 %v1499
      %v1573 = vunpack.c.h.b16 %v1499
      %v1574 = vunpack.c.l.b16 %v1500
      %v1575 = vunpack.c.h.b16 %v1500
      %v1576 = vunpack.c.l.b16 %v1501
      %v1577 = vunpack.c.h.b16 %v1501
      %v1578 = vunpack.c.l.b16 %v1502
      %v1579 = vunpack.c.h.b16 %v1502
      %v1580 = vunpack.c.l.b16 %v1503
      %v1581 = vunpack.c.h.b16 %v1503
      %v1582 = vunpack.c.l.b16 %v1504
      %v1583 = vunpack.c.h.b16 %v1504
      %v1584 = vunpack.c.l.b16 %v1505
      %v1585 = vunpack.c.h.b16 %v1505
      %v1586 = vunpack.c.l.b16 %v1506
      %v1587 = vunpack.c.h.b16 %v1506
      %v1588 = vunpack.c.l.b16 %v1507
      %v1589 = vunpack.c.h.b16 %v1507
      %v1590 = vunpack.c.l.b16 %v1508
      %v1591 = vunpack.c.h.b16 %v1508
      %v1592 = vunpack.c.l.b16 %v1509
      %v1593 = vunpack.c.h.b16 %v1509
      %v1594 = vunpack.c.l.b16 %v1510
      %v1595 = vunpack.c.h.b16 %v1510
      %v1596 = vunpack.c.l.b16 %v1511
      %v1597 = vunpack.c.h.b16 %v1511
      %v1598 = vunpack.c.l.b16 %v1512
      %v1599 = vunpack.c.h.b16 %v1512
      %v1600 = vunpack.c.l.b16 %v1513
      %v1601 = vunpack.c.h.b16 %v1513
      %v1602 = vunpack.c.l.b16 %v1514
      %v1603 = vunpack.c.h.b16 %v1514
      %v1604 = vunpack.c.l.b16 %v1515
      %v1605 = vunpack.c.h.b16 %v1515
      %v1606 = vunpack.c.l.b16 %v1516
      %v1607 = vunpack.c.h.b16 %v1516
      %v1608 = vunpack.c.l.b16 %v1517
      %v1609 = vunpack.c.h.b16 %v1517
      %v1610 = vunpack.c.l.b16 %v1518
      %v1611 = vunpack.c.h.b16 %v1518
      %v1612 = vunpack.c.l.b16 %v1519
      %v1613 = vunpack.c.h.b16 %v1519
      %v1614 = vunpack.c.l.b16 %v1520
      %v1615 = vunpack.c.h.b16 %v1520
      %v1616 = vunpack.c.l.b16 %v1521
      %v1617 = vunpack.c.h.b16 %v1521
      %v1618 = vunpack.c.l.b16 %v1522
      %v1619 = vunpack.c.h.b16 %v1522
      %v1620 = vunpack.c.l.b16 %v1523
      %v1621 = vunpack.c.h.b16 %v1523
      %v1622 = vunpack.c.l.b16 %v1524
      %v1623 = vunpack.c.h.b16 %v1524
      %v1624 = vunpack.c.l.b16 %v1525
      %v1625 = vunpack.c.h.b16 %v1525
      %v1626 = vunpack.c.l.b16 %v1526
      %v1627 = vunpack.c.h.b16 %v1526
      %v1628 = vpack.c.b16 %v1568, %v1564
      %v1629 = vpack.c.b16 %v1569, %v1565
      %v1630 = vpack.c.b16 %v1570, %v1566
      %v1631 = vpack.c.b16 %v1571, %v1567
      %v1632 = vpack.c.b16 %v1576, %v1572
      %v1633 = vpack.c.b16 %v1577, %v1573
      %v1634 = vpack.c.b16 %v1578, %v1574
      %v1635 = vpack.c.b16 %v1579, %v1575
      %v1636 = vpack.c.b16 %v1584, %v1580
      %v1637 = vpack.c.b16 %v1585, %v1581
      %v1638 = vpack.c.b16 %v1586, %v1582
      %v1639 = vpack.c.b16 %v1587, %v1583
      %v1640 = vpack.c.b16 %v1592, %v1588
      %v1641 = vpack.c.b16 %v1593, %v1589
      %v1642 = vpack.c.b16 %v1594, %v1590
      %v1643 = vpack.c.b16 %v1595, %v1591
      %v1644 = vpack.c.b16 %v1600, %v1596
      %v1645 = vpack.c.b16 %v1601, %v1597
      %v1646 = vpack.c.b16 %v1602, %v1598
      %v1647 = vpack.c.b16 %v1603, %v1599
      %v1648 = vpack.c.b16 %v1608, %v1604
      %v1649 = vpack.c.b16 %v1609, %v1605
      %v1650 = vpack.c.b16 %v1610, %v1606
      %v1651 = vpack.c.b16 %v1611, %v1607
      %v1652 = vpack.c.b16 %v1616, %v1612
      %v1653 = vpack.c.b16 %v1617, %v1613
      %v1654 = vpack.c.b16 %v1618, %v1614
      %v1655 = vpack.c.b16 %v1619, %v1615
      %v1656 = vpack.c.b16 %v1624, %v1620
      %v1657 = vpack.c.b16 %v1625, %v1621
      %v1658 = vpack.c.b16 %v1626, %v1622
      %v1659 = vpack.c.b16 %v1627, %v1623
      %1692 = vmatprep.subr.bf16.mxu0 %v1629
      %1693 = vmatpush1.bf16.msra.mxu0 %v1628
      %1694 = vmatprep.subr.bf16.mxu0 %v1633
      %1695 = vmatpush1.bf16.msra.mxu0 %v1632
      %1696 = vmatprep.subr.bf16.mxu0 %v1637
      %1697 = vmatpush1.bf16.msra.mxu0 %v1636
      %1698 = vmatprep.subr.bf16.mxu0 %v1641
      %1699 = vmatpush1.bf16.msra.mxu0 %v1640
      %1700 = vmatprep.subr.bf16.mxu0 %v1645
      %1701 = vmatpush1.bf16.msra.mxu0 %v1644
      %1702 = vmatprep.subr.bf16.mxu0 %v1649
      %1703 = vmatpush1.bf16.msra.mxu0 %v1648
      %1704 = vmatprep.subr.bf16.mxu0 %v1653
      %1705 = vmatpush1.bf16.msra.mxu0 %v1652
      %1706 = vmatprep.subr.bf16.mxu0 %v1657
      %1707 = vmatpush1.bf16.msra.mxu0 %v1656
      %1708 = vmatprep.subr.bf16.mxu0 0
      %1709 = vmatpush1.bf16.msra.mxu0 0
      %1710 = vmatprep.subr.bf16.mxu0 0
      %1711 = vmatpush1.bf16.msra.mxu0 0
      %1712 = vmatprep.subr.bf16.mxu0 0
      %1713 = vmatpush1.bf16.msra.mxu0 0
      %1714 = vmatprep.subr.bf16.mxu0 0
      %1715 = vmatpush1.bf16.msra.mxu0 0
      %1716 = vmatprep.subr.bf16.mxu0 0
      %1717 = vmatpush1.bf16.msra.mxu0 0
      %1718 = vmatprep.subr.bf16.mxu0 0
      %1719 = vmatpush1.bf16.msra.mxu0 0
      %1720 = vmatprep.subr.bf16.mxu0 0
      %1721 = vmatpush1.bf16.msra.mxu0 0
      %1722 = vmatprep.subr.bf16.mxu0 0
      %1723 = vmatpush1.bf16.msra.mxu0 0
      %1724 = vmatprep.mubr.bf16.mxu0 0
      %1725 = vmatmul.mubr.bf16.gmra.mrb[0].mxu0 %v1530
      %v1726 = vpop.f32.mrb[0].mxu0
      %v1727 = vadd.f32 0.0, %v1726
      %v1728 = vpop.f32.mrb[0].mxu0
      %v1729 = vadd.f32 0.0, %v1728
      %v1730 = vpop.f32.mrb[0].mxu0
      %v1731 = vpop.f32.mrb[0].mxu0
      %1732 = vdwg.mxu0
      %1733 = vmatprep.subr.bf16.mxu0 %v1631
      %1734 = vmatpush1.bf16.msra.mxu0 %v1630
      %1735 = vmatprep.subr.bf16.mxu0 %v1635
      %1736 = vmatpush1.bf16.msra.mxu0 %v1634
      %1737 = vmatprep.subr.bf16.mxu0 %v1639
      %1738 = vmatpush1.bf16.msra.mxu0 %v1638
      %1739 = vmatprep.subr.bf16.mxu0 %v1643
      %1740 = vmatpush1.bf16.msra.mxu0 %v1642
      %1741 = vmatprep.subr.bf16.mxu0 %v1647
      %1742 = vmatpush1.bf16.msra.mxu0 %v1646
      %1743 = vmatprep.subr.bf16.mxu0 %v1651
      %1744 = vmatpush1.bf16.msra.mxu0 %v1650
      %1745 = vmatprep.subr.bf16.mxu0 %v1655
      %1746 = vmatpush1.bf16.msra.mxu0 %v1654
      %1747 = vmatprep.subr.bf16.mxu0 %v1659
      %1748 = vmatpush1.bf16.msra.mxu0 %v1658
      %1749 = vmatprep.subr.bf16.mxu0 0
      %1750 = vmatpush1.bf16.msra.mxu0 0
      %1751 = vmatprep.subr.bf16.mxu0 0
      %1752 = vmatpush1.bf16.msra.mxu0 0
      %1753 = vmatprep.subr.bf16.mxu0 0
      %1754 = vmatpush1.bf16.msra.mxu0 0
      %1755 = vmatprep.subr.bf16.mxu0 0
      %1756 = vmatpush1.bf16.msra.mxu0 0
      %1757 = vmatprep.subr.bf16.mxu0 0
      %1758 = vmatpush1.bf16.msra.mxu0 0
      %1759 = vmatprep.subr.bf16.mxu0 0
      %1760 = vmatpush1.bf16.msra.mxu0 0
      %1761 = vmatprep.subr.bf16.mxu0 0
      %1762 = vmatpush1.bf16.msra.mxu0 0
      %1763 = vmatprep.subr.bf16.mxu0 0
      %1764 = vmatpush1.bf16.msra.mxu0 0
      %1765 = vmatprep.mubr.bf16.mxu0 0
      %1766 = vmatmul.mubr.bf16.gmra.mrb[0].mxu0 %v1530
      %v1767 = vpop.f32.mrb[0].mxu0
      %v1768 = vadd.f32 0.0, %v1767
      %v1769 = vpop.f32.mrb[0].mxu0
      %v1770 = vadd.f32 0.0, %v1769
      %v1771 = vpop.f32.mrb[0].mxu0
      %v1772 = vpop.f32.mrb[0].mxu0
      %1773 = vdwg.mxu0
      %v1774 = vadd.f32 %v1483, %v1727
      %v1775 = vadd.f32 %v1484, %v1729
      %v1776 = vadd.f32 %v1485, %v1768
      %v1777 = vadd.f32 %v1486, %v1770
      %v1778 = vxor.u32 %v1774, 2147483648
      %v1779 = vmul.f32 %v1778, 1.442695
      %v1780 = vpow.pop %v1779
      %v1781 = vadd.f32 %v1780, 1.0
      %v1782 = vrcp.pop %v1781
      %v1783 = vmul.f32 1.0, %v1782
      %v1784 = vxor.u32 %v1775, 2147483648
      %v1785 = vmul.f32 %v1784, 1.442695
      %v1786 = vpow.pop %v1785
      %v1787 = vadd.f32 %v1786, 1.0
      %v1788 = vrcp.pop %v1787
      %v1789 = vmul.f32 1.0, %v1788
      %v1790 = vtanh.pop %v1776
      %v1791 = vxor.u32 %v1777, 2147483648
      %v1792 = vmul.f32 %v1791, 1.442695
      %v1793 = vpow.pop %v1792
      %v1794 = vadd.f32 %v1793, 1.0
      %v1795 = vrcp.pop %v1794
      %v1796 = vmul.f32 1.0, %v1795
      %v1798 = vrot.slane %v1493, 7
      %v1800 = vmul.f32 %v1789, %v1798
      %v1801 = vmul.f32 %v1783, %v1790
      %v1802 = vadd.f32 %v1800, %v1801
      %v1803 = vtanh.pop %v1802
      %v1804 = vmul.f32 %v1796, %v1803
      %v1805 = vmul.f32 %v1804, %v1490
      %v1806 = vmul.f32 %v1802, %v1490
      %v1807 = vpack.c.bf16 %v1805, %v1805
      %1808 = vmatprep.subr.bf16.mxu0 %v1629
      %1809 = vmatpush1.bf16.msra.mxu0 %v1628
      %1810 = vmatprep.subr.bf16.mxu0 %v1633
      %1811 = vmatpush1.bf16.msra.mxu0 %v1632
      %1812 = vmatprep.subr.bf16.mxu0 %v1637
      %1813 = vmatpush1.bf16.msra.mxu0 %v1636
      %1814 = vmatprep.subr.bf16.mxu0 %v1641
      %1815 = vmatpush1.bf16.msra.mxu0 %v1640
      %1816 = vmatprep.subr.bf16.mxu0 %v1645
      %1817 = vmatpush1.bf16.msra.mxu0 %v1644
      %1818 = vmatprep.subr.bf16.mxu0 %v1649
      %1819 = vmatpush1.bf16.msra.mxu0 %v1648
      %1820 = vmatprep.subr.bf16.mxu0 %v1653
      %1821 = vmatpush1.bf16.msra.mxu0 %v1652
      %1822 = vmatprep.subr.bf16.mxu0 %v1657
      %1823 = vmatpush1.bf16.msra.mxu0 %v1656
      %1824 = vmatprep.subr.bf16.mxu0 0
      %1825 = vmatpush1.bf16.msra.mxu0 0
      %1826 = vmatprep.subr.bf16.mxu0 0
      %1827 = vmatpush1.bf16.msra.mxu0 0
      %1828 = vmatprep.subr.bf16.mxu0 0
      %1829 = vmatpush1.bf16.msra.mxu0 0
      %1830 = vmatprep.subr.bf16.mxu0 0
      %1831 = vmatpush1.bf16.msra.mxu0 0
      %1832 = vmatprep.subr.bf16.mxu0 0
      %1833 = vmatpush1.bf16.msra.mxu0 0
      %1834 = vmatprep.subr.bf16.mxu0 0
      %1835 = vmatpush1.bf16.msra.mxu0 0
      %1836 = vmatprep.subr.bf16.mxu0 0
      %1837 = vmatpush1.bf16.msra.mxu0 0
      %1838 = vmatprep.subr.bf16.mxu0 0
      %1839 = vmatpush1.bf16.msra.mxu0 0
      %1840 = vmatprep.mubr.bf16.mxu0 0
      %1841 = vmatmul.mubr.bf16.gmra.mrb[0].mxu0 %v1807
      %v1842 = vpop.f32.mrb[0].mxu0
      %v1843 = vadd.f32 0.0, %v1842
      %v1844 = vpop.f32.mrb[0].mxu0
      %v1845 = vadd.f32 0.0, %v1844
      %v1846 = vpop.f32.mrb[0].mxu0
      %v1847 = vpop.f32.mrb[0].mxu0
      %1848 = vdwg.mxu0
      %1849 = vmatprep.subr.bf16.mxu0 %v1631
      %1850 = vmatpush1.bf16.msra.mxu0 %v1630
      %1851 = vmatprep.subr.bf16.mxu0 %v1635
      %1852 = vmatpush1.bf16.msra.mxu0 %v1634
      %1853 = vmatprep.subr.bf16.mxu0 %v1639
      %1854 = vmatpush1.bf16.msra.mxu0 %v1638
      %1855 = vmatprep.subr.bf16.mxu0 %v1643
      %1856 = vmatpush1.bf16.msra.mxu0 %v1642
      %1857 = vmatprep.subr.bf16.mxu0 %v1647
      %1858 = vmatpush1.bf16.msra.mxu0 %v1646
      %1859 = vmatprep.subr.bf16.mxu0 %v1651
      %1860 = vmatpush1.bf16.msra.mxu0 %v1650
      %1861 = vmatprep.subr.bf16.mxu0 %v1655
      %1862 = vmatpush1.bf16.msra.mxu0 %v1654
      %1863 = vmatprep.subr.bf16.mxu0 %v1659
      %1864 = vmatpush1.bf16.msra.mxu0 %v1658
      %1865 = vmatprep.subr.bf16.mxu0 0
      %1866 = vmatpush1.bf16.msra.mxu0 0
      %1867 = vmatprep.subr.bf16.mxu0 0
      %1868 = vmatpush1.bf16.msra.mxu0 0
      %1869 = vmatprep.subr.bf16.mxu0 0
      %1870 = vmatpush1.bf16.msra.mxu0 0
      %1871 = vmatprep.subr.bf16.mxu0 0
      %1872 = vmatpush1.bf16.msra.mxu0 0
      %1873 = vmatprep.subr.bf16.mxu0 0
      %1874 = vmatpush1.bf16.msra.mxu0 0
      %1875 = vmatprep.subr.bf16.mxu0 0
      %1876 = vmatpush1.bf16.msra.mxu0 0
      %1877 = vmatprep.subr.bf16.mxu0 0
      %1878 = vmatpush1.bf16.msra.mxu0 0
      %1879 = vmatprep.subr.bf16.mxu0 0
      %1880 = vmatpush1.bf16.msra.mxu0 0
      %1881 = vmatprep.mubr.bf16.mxu0 0
      %1882 = vmatmul.mubr.bf16.gmra.mrb[0].mxu0 %v1807
      %v1883 = vpop.f32.mrb[0].mxu0
      %v1884 = vadd.f32 0.0, %v1883
      %v1885 = vpop.f32.mrb[0].mxu0
      %v1886 = vadd.f32 0.0, %v1885
      %v1887 = vpop.f32.mrb[0].mxu0
      %v1888 = vpop.f32.mrb[0].mxu0
      %1889 = vdwg.mxu0
      %v1894 = vrot.slane %v1843, 7
      %v1895 = vrot.slane %v1845, 7
      %v1896 = vrot.slane %v1884, 7
      %v1897 = vrot.slane %v1886, 7
      %v1902 = vadd.f32 %v1483, %v1894
      %v1903 = vadd.f32 %v1484, %v1895
      %v1904 = vadd.f32 %v1485, %v1896
      %v1905 = vadd.f32 %v1486, %v1897
      %v1906 = vxor.u32 %v1902, 2147483648
      %v1907 = vmul.f32 %v1906, 1.442695
      %v1908 = vpow.pop %v1907
      %v1909 = vadd.f32 %v1908, 1.0
      %v1910 = vrcp.pop %v1909
      %v1911 = vmul.f32 1.0, %v1910
      %v1912 = vxor.u32 %v1903, 2147483648
      %v1913 = vmul.f32 %v1912, 1.442695
      %v1914 = vpow.pop %v1913
      %v1915 = vadd.f32 %v1914, 1.0
      %v1916 = vrcp.pop %v1915
      %v1917 = vmul.f32 1.0, %v1916
      %v1918 = vtanh.pop %v1904
      %v1919 = vxor.u32 %v1905, 2147483648
      %v1920 = vmul.f32 %v1919, 1.442695
      %v1921 = vpow.pop %v1920
      %v1922 = vadd.f32 %v1921, 1.0
      %v1923 = vrcp.pop %v1922
      %v1924 = vmul.f32 1.0, %v1923
      %v1926 = vrot.slane %v1806, 7
      %v1928 = vmul.f32 %v1917, %v1926
      %v1929 = vmul.f32 %v1911, %v1918
      %v1930 = vadd.f32 %v1928, %v1929
      %v1931 = vtanh.pop %v1930
      %v1932 = vmul.f32 %v1924, %v1931
      %v1933 = vmul.f32 %v1932, %v1490
      %v1934 = vmul.f32 %v1930, %v1490
      %v1935 = vpack.c.bf16 %v1933, %v1933
      %v1937 = vshrl.u32 %v1935, 16
      %1940 = vmatprep.subr.bf16.mxu0 %v1629
      %1941 = vmatpush1.bf16.msra.mxu0 %v1628
      %1942 = vmatprep.subr.bf16.mxu0 %v1633
      %1943 = vmatpush1.bf16.msra.mxu0 %v1632
      %1944 = vmatprep.subr.bf16.mxu0 %v1637
      %1945 = vmatpush1.bf16.msra.mxu0 %v1636
      %1946 = vmatprep.subr.bf16.mxu0 %v1641
      %1947 = vmatpush1.bf16.msra.mxu0 %v1640
      %1948 = vmatprep.subr.bf16.mxu0 %v1645
      %1949 = vmatpush1.bf16.msra.mxu0 %v1644
      %1950 = vmatprep.subr.bf16.mxu0 %v1649
      %1951 = vmatpush1.bf16.msra.mxu0 %v1648
      %1952 = vmatprep.subr.bf16.mxu0 %v1653
      %1953 = vmatpush1.bf16.msra.mxu0 %v1652
      %1954 = vmatprep.subr.bf16.mxu0 %v1657
      %1955 = vmatpush1.bf16.msra.mxu0 %v1656
      %1956 = vmatprep.subr.bf16.mxu0 0
      %1957 = vmatpush1.bf16.msra.mxu0 0
      %1958 = vmatprep.subr.bf16.mxu0 0
      %1959 = vmatpush1.bf16.msra.mxu0 0
      %1960 = vmatprep.subr.bf16.mxu0 0
      %1961 = vmatpush1.bf16.msra.mxu0 0
      %1962 = vmatprep.subr.bf16.mxu0 0
      %1963 = vmatpush1.bf16.msra.mxu0 0
      %1964 = vmatprep.subr.bf16.mxu0 0
      %1965 = vmatpush1.bf16.msra.mxu0 0
      %1966 = vmatprep.subr.bf16.mxu0 0
      %1967 = vmatpush1.bf16.msra.mxu0 0
      %1968 = vmatprep.subr.bf16.mxu0 0
      %1969 = vmatpush1.bf16.msra.mxu0 0
      %1970 = vmatprep.subr.bf16.mxu0 0
      %1971 = vmatpush1.bf16.msra.mxu0 0
      %1972 = vmatprep.mubr.bf16.mxu0 0
      %1973 = vmatmul.mubr.bf16.gmra.mrb[0].mxu0 %v1937
      %v1974 = vpop.f32.mrb[0].mxu0
      %v1975 = vadd.f32 0.0, %v1974
      %v1976 = vpop.f32.mrb[0].mxu0
      %v1977 = vadd.f32 0.0, %v1976
      %v1978 = vpop.f32.mrb[0].mxu0
      %v1979 = vpop.f32.mrb[0].mxu0
      %1980 = vdwg.mxu0
      %1981 = vmatprep.subr.bf16.mxu0 %v1631
      %1982 = vmatpush1.bf16.msra.mxu0 %v1630
      %1983 = vmatprep.subr.bf16.mxu0 %v1635
      %1984 = vmatpush1.bf16.msra.mxu0 %v1634
      %1985 = vmatprep.subr.bf16.mxu0 %v1639
      %1986 = vmatpush1.bf16.msra.mxu0 %v1638
      %1987 = vmatprep.subr.bf16.mxu0 %v1643
      %1988 = vmatpush1.bf16.msra.mxu0 %v1642
      %1989 = vmatprep.subr.bf16.mxu0 %v1647
      %1990 = vmatpush1.bf16.msra.mxu0 %v1646
      %1991 = vmatprep.subr.bf16.mxu0 %v1651
      %1992 = vmatpush1.bf16.msra.mxu0 %v1650
      %1993 = vmatprep.subr.bf16.mxu0 %v1655
      %1994 = vmatpush1.bf16.msra.mxu0 %v1654
      %1995 = vmatprep.subr.bf16.mxu0 %v1659
      %1996 = vmatpush1.bf16.msra.mxu0 %v1658
      %1997 = vmatprep.subr.bf16.mxu0 0
      %1998 = vmatpush1.bf16.msra.mxu0 0
      %1999 = vmatprep.subr.bf16.mxu0 0
      %2000 = vmatpush1.bf16.msra.mxu0 0
      %2001 = vmatprep.subr.bf16.mxu0 0
      %2002 = vmatpush1.bf16.msra.mxu0 0
      %2003 = vmatprep.subr.bf16.mxu0 0
      %2004 = vmatpush1.bf16.msra.mxu0 0
      %2005 = vmatprep.subr.bf16.mxu0 0
      %2006 = vmatpush1.bf16.msra.mxu0 0
      %2007 = vmatprep.subr.bf16.mxu0 0
      %2008 = vmatpush1.bf16.msra.mxu0 0
      %2009 = vmatprep.subr.bf16.mxu0 0
      %2010 = vmatpush1.bf16.msra.mxu0 0
      %2011 = vmatprep.subr.bf16.mxu0 0
      %2012 = vmatpush1.bf16.msra.mxu0 0
      %2013 = vmatprep.mubr.bf16.mxu0 0
      %2014 = vmatmul.mubr.bf16.gmra.mrb[0].mxu0 %v1937
      %v2015 = vpop.f32.mrb[0].mxu0
      %v2016 = vadd.f32 0.0, %v2015
      %v2017 = vpop.f32.mrb[0].mxu0
      %v2018 = vadd.f32 0.0, %v2017
      %v2019 = vpop.f32.mrb[0].mxu0
      %v2020 = vpop.f32.mrb[0].mxu0
      %2021 = vdwg.mxu0
      %v2026 = vrot.slane %v1975, 6
      %v2027 = vrot.slane %v1977, 6
      %v2028 = vrot.slane %v2016, 6
      %v2029 = vrot.slane %v2018, 6
      %v2034 = vadd.f32 %v1483, %v2026
      %v2035 = vadd.f32 %v1484, %v2027
      %v2036 = vadd.f32 %v1485, %v2028
      %v2037 = vadd.f32 %v1486, %v2029
      %v2038 = vxor.u32 %v2034, 2147483648
      %v2039 = vmul.f32 %v2038, 1.442695
      %v2040 = vpow.pop %v2039
      %v2041 = vadd.f32 %v2040, 1.0
      %v2042 = vrcp.pop %v2041
      %v2043 = vmul.f32 1.0, %v2042
      %v2044 = vxor.u32 %v2035, 2147483648
      %v2045 = vmul.f32 %v2044, 1.442695
      %v2046 = vpow.pop %v2045
      %v2047 = vadd.f32 %v2046, 1.0
      %v2048 = vrcp.pop %v2047
      %v2049 = vmul.f32 1.0, %v2048
      %v2050 = vtanh.pop %v2036
      %v2051 = vxor.u32 %v2037, 2147483648
      %v2052 = vmul.f32 %v2051, 1.442695
      %v2053 = vpow.pop %v2052
      %v2054 = vadd.f32 %v2053, 1.0
      %v2055 = vrcp.pop %v2054
      %v2056 = vmul.f32 1.0, %v2055
      %v2058 = vrot.slane %v1934, 7
      %v2060 = vmul.f32 %v2049, %v2058
      %v2061 = vmul.f32 %v2043, %v2050
      %v2062 = vadd.f32 %v2060, %v2061
      %v2063 = vtanh.pop %v2062
      %v2064 = vmul.f32 %v2056, %v2063
      %v2065 = vmul.f32 %v2064, %v1490
      %v2066 = vmul.f32 %v2062, %v1490
      %v2067 = vpack.c.bf16 %v2065, %v2065
      %v2069 = vrot.slane %v2067, 1
      %2071 = vmatprep.subr.bf16.mxu0 %v1629
      %2072 = vmatpush1.bf16.msra.mxu0 %v1628
      %2073 = vmatprep.subr.bf16.mxu0 %v1633
      %2074 = vmatpush1.bf16.msra.mxu0 %v1632
      %2075 = vmatprep.subr.bf16.mxu0 %v1637
      %2076 = vmatpush1.bf16.msra.mxu0 %v1636
      %2077 = vmatprep.subr.bf16.mxu0 %v1641
      %2078 = vmatpush1.bf16.msra.mxu0 %v1640
      %2079 = vmatprep.subr.bf16.mxu0 %v1645
      %2080 = vmatpush1.bf16.msra.mxu0 %v1644
      %2081 = vmatprep.subr.bf16.mxu0 %v1649
      %2082 = vmatpush1.bf16.msra.mxu0 %v1648
      %2083 = vmatprep.subr.bf16.mxu0 %v1653
      %2084 = vmatpush1.bf16.msra.mxu0 %v1652
      %2085 = vmatprep.subr.bf16.mxu0 %v1657
      %2086 = vmatpush1.bf16.msra.mxu0 %v1656
      %2087 = vmatprep.subr.bf16.mxu0 0
      %2088 = vmatpush1.bf16.msra.mxu0 0
      %2089 = vmatprep.subr.bf16.mxu0 0
      %2090 = vmatpush1.bf16.msra.mxu0 0
      %2091 = vmatprep.subr.bf16.mxu0 0
      %2092 = vmatpush1.bf16.msra.mxu0 0
      %2093 = vmatprep.subr.bf16.mxu0 0
      %2094 = vmatpush1.bf16.msra.mxu0 0
      %2095 = vmatprep.subr.bf16.mxu0 0
      %2096 = vmatpush1.bf16.msra.mxu0 0
      %2097 = vmatprep.subr.bf16.mxu0 0
      %2098 = vmatpush1.bf16.msra.mxu0 0
      %2099 = vmatprep.subr.bf16.mxu0 0
      %2100 = vmatpush1.bf16.msra.mxu0 0
      %2101 = vmatprep.subr.bf16.mxu0 0
      %2102 = vmatpush1.bf16.msra.mxu0 0
      %2103 = vmatprep.mubr.bf16.mxu0 0
      %2104 = vmatmul.mubr.bf16.gmra.mrb[0].mxu0 %v2069
      %v2105 = vpop.f32.mrb[0].mxu0
      %v2106 = vadd.f32 0.0, %v2105
      %v2107 = vpop.f32.mrb[0].mxu0
      %v2108 = vadd.f32 0.0, %v2107
      %v2109 = vpop.f32.mrb[0].mxu0
      %v2110 = vpop.f32.mrb[0].mxu0
      %2111 = vdwg.mxu0
      %2112 = vmatprep.subr.bf16.mxu0 %v1631
      %2113 = vmatpush1.bf16.msra.mxu0 %v1630
      %2114 = vmatprep.subr.bf16.mxu0 %v1635
      %2115 = vmatpush1.bf16.msra.mxu0 %v1634
      %2116 = vmatprep.subr.bf16.mxu0 %v1639
      %2117 = vmatpush1.bf16.msra.mxu0 %v1638
      %2118 = vmatprep.subr.bf16.mxu0 %v1643
      %2119 = vmatpush1.bf16.msra.mxu0 %v1642
      %2120 = vmatprep.subr.bf16.mxu0 %v1647
      %2121 = vmatpush1.bf16.msra.mxu0 %v1646
      %2122 = vmatprep.subr.bf16.mxu0 %v1651
      %2123 = vmatpush1.bf16.msra.mxu0 %v1650
      %2124 = vmatprep.subr.bf16.mxu0 %v1655
      %2125 = vmatpush1.bf16.msra.mxu0 %v1654
      %2126 = vmatprep.subr.bf16.mxu0 %v1659
      %2127 = vmatpush1.bf16.msra.mxu0 %v1658
      %2128 = vmatprep.subr.bf16.mxu0 0
      %2129 = vmatpush1.bf16.msra.mxu0 0
      %2130 = vmatprep.subr.bf16.mxu0 0
      %2131 = vmatpush1.bf16.msra.mxu0 0
      %2132 = vmatprep.subr.bf16.mxu0 0
      %2133 = vmatpush1.bf16.msra.mxu0 0
      %2134 = vmatprep.subr.bf16.mxu0 0
      %2135 = vmatpush1.bf16.msra.mxu0 0
      %2136 = vmatprep.subr.bf16.mxu0 0
      %2137 = vmatpush1.bf16.msra.mxu0 0
      %2138 = vmatprep.subr.bf16.mxu0 0
      %2139 = vmatpush1.bf16.msra.mxu0 0
      %2140 = vmatprep.subr.bf16.mxu0 0
      %2141 = vmatpush1.bf16.msra.mxu0 0
      %2142 = vmatprep.subr.bf16.mxu0 0
      %2143 = vmatpush1.bf16.msra.mxu0 0
      %2144 = vmatprep.mubr.bf16.mxu0 0
      %2145 = vmatmul.mubr.bf16.gmra.mrb[0].mxu0 %v2069
      %v2146 = vpop.f32.mrb[0].mxu0
      %v2147 = vadd.f32 0.0, %v2146
      %v2148 = vpop.f32.mrb[0].mxu0
      %v2149 = vadd.f32 0.0, %v2148
      %v2150 = vpop.f32.mrb[0].mxu0
      %v2151 = vpop.f32.mrb[0].mxu0
      %2152 = vdwg.mxu0
      %v2157 = vrot.slane %v2106, 5
      %v2158 = vrot.slane %v2108, 5
      %v2159 = vrot.slane %v2147, 5
      %v2160 = vrot.slane %v2149, 5
      %v2165 = vadd.f32 %v1483, %v2157
      %v2166 = vadd.f32 %v1484, %v2158
      %v2167 = vadd.f32 %v1485, %v2159
      %v2168 = vadd.f32 %v1486, %v2160
      %v2169 = vxor.u32 %v2165, 2147483648
      %v2170 = vmul.f32 %v2169, 1.442695
      %v2171 = vpow.pop %v2170
      %v2172 = vadd.f32 %v2171, 1.0
      %v2173 = vrcp.pop %v2172
      %v2174 = vmul.f32 1.0, %v2173
      %v2175 = vxor.u32 %v2166, 2147483648
      %v2176 = vmul.f32 %v2175, 1.442695
      %v2177 = vpow.pop %v2176
      %v2178 = vadd.f32 %v2177, 1.0
      %v2179 = vrcp.pop %v2178
      %v2180 = vmul.f32 1.0, %v2179
      %v2181 = vtanh.pop %v2167
      %v2182 = vxor.u32 %v2168, 2147483648
      %v2183 = vmul.f32 %v2182, 1.442695
      %v2184 = vpow.pop %v2183
      %v2185 = vadd.f32 %v2184, 1.0
      %v2186 = vrcp.pop %v2185
      %v2187 = vmul.f32 1.0, %v2186
      %v2189 = vrot.slane %v2066, 7
      %v2191 = vmul.f32 %v2180, %v2189
      %v2192 = vmul.f32 %v2174, %v2181
      %v2193 = vadd.f32 %v2191, %v2192
      %v2194 = vtanh.pop %v2193
      %v2195 = vmul.f32 %v2187, %v2194
      %v2196 = vmul.f32 %v2195, %v1490
      %v2197 = vmul.f32 %v2193, %v1490
      %v2198 = vpack.c.bf16 %v2196, %v2196
      %v2200 = vshrl.u32 %v2198, 16
      %v2202 = vrot.slane %v2200, 1
      %2204 = vmatprep.subr.bf16.mxu0 %v1629
      %2205 = vmatpush1.bf16.msra.mxu0 %v1628
      %2206 = vmatprep.subr.bf16.mxu0 %v1633
      %2207 = vmatpush1.bf16.msra.mxu0 %v1632
      %2208 = vmatprep.subr.bf16.mxu0 %v1637
      %2209 = vmatpush1.bf16.msra.mxu0 %v1636
      %2210 = vmatprep.subr.bf16.mxu0 %v1641
      %2211 = vmatpush1.bf16.msra.mxu0 %v1640
      %2212 = vmatprep.subr.bf16.mxu0 %v1645
      %2213 = vmatpush1.bf16.msra.mxu0 %v1644
      %2214 = vmatprep.subr.bf16.mxu0 %v1649
      %2215 = vmatpush1.bf16.msra.mxu0 %v1648
      %2216 = vmatprep.subr.bf16.mxu0 %v1653
      %2217 = vmatpush1.bf16.msra.mxu0 %v1652
      %2218 = vmatprep.subr.bf16.mxu0 %v1657
      %2219 = vmatpush1.bf16.msra.mxu0 %v1656
      %2220 = vmatprep.subr.bf16.mxu0 0
      %2221 = vmatpush1.bf16.msra.mxu0 0
      %2222 = vmatprep.subr.bf16.mxu0 0
      %2223 = vmatpush1.bf16.msra.mxu0 0
      %2224 = vmatprep.subr.bf16.mxu0 0
      %2225 = vmatpush1.bf16.msra.mxu0 0
      %2226 = vmatprep.subr.bf16.mxu0 0
      %2227 = vmatpush1.bf16.msra.mxu0 0
      %2228 = vmatprep.subr.bf16.mxu0 0
      %2229 = vmatpush1.bf16.msra.mxu0 0
      %2230 = vmatprep.subr.bf16.mxu0 0
      %2231 = vmatpush1.bf16.msra.mxu0 0
      %2232 = vmatprep.subr.bf16.mxu0 0
      %2233 = vmatpush1.bf16.msra.mxu0 0
      %2234 = vmatprep.subr.bf16.mxu0 0
      %2235 = vmatpush1.bf16.msra.mxu0 0
      %2236 = vmatprep.mubr.bf16.mxu0 0
      %2237 = vmatmul.mubr.bf16.gmra.mrb[0].mxu0 %v2202
      %v2238 = vpop.f32.mrb[0].mxu0
      %v2239 = vadd.f32 0.0, %v2238
      %v2240 = vpop.f32.mrb[0].mxu0
      %v2241 = vadd.f32 0.0, %v2240
      %v2242 = vpop.f32.mrb[0].mxu0
      %v2243 = vpop.f32.mrb[0].mxu0
      %2244 = vdwg.mxu0
      %2245 = vmatprep.subr.bf16.mxu0 %v1631
      %2246 = vmatpush1.bf16.msra.mxu0 %v1630
      %2247 = vmatprep.subr.bf16.mxu0 %v1635
      %2248 = vmatpush1.bf16.msra.mxu0 %v1634
      %2249 = vmatprep.subr.bf16.mxu0 %v1639
      %2250 = vmatpush1.bf16.msra.mxu0 %v1638
      %2251 = vmatprep.subr.bf16.mxu0 %v1643
      %2252 = vmatpush1.bf16.msra.mxu0 %v1642
      %2253 = vmatprep.subr.bf16.mxu0 %v1647
      %2254 = vmatpush1.bf16.msra.mxu0 %v1646
      %2255 = vmatprep.subr.bf16.mxu0 %v1651
      %2256 = vmatpush1.bf16.msra.mxu0 %v1650
      %2257 = vmatprep.subr.bf16.mxu0 %v1655
      %2258 = vmatpush1.bf16.msra.mxu0 %v1654
      %2259 = vmatprep.subr.bf16.mxu0 %v1659
      %2260 = vmatpush1.bf16.msra.mxu0 %v1658
      %2261 = vmatprep.subr.bf16.mxu0 0
      %2262 = vmatpush1.bf16.msra.mxu0 0
      %2263 = vmatprep.subr.bf16.mxu0 0
      %2264 = vmatpush1.bf16.msra.mxu0 0
      %2265 = vmatprep.subr.bf16.mxu0 0
      %2266 = vmatpush1.bf16.msra.mxu0 0
      %2267 = vmatprep.subr.bf16.mxu0 0
      %2268 = vmatpush1.bf16.msra.mxu0 0
      %2269 = vmatprep.subr.bf16.mxu0 0
      %2270 = vmatpush1.bf16.msra.mxu0 0
      %2271 = vmatprep.subr.bf16.mxu0 0
      %2272 = vmatpush1.bf16.msra.mxu0 0
      %2273 = vmatprep.subr.bf16.mxu0 0
      %2274 = vmatpush1.bf16.msra.mxu0 0
      %2275 = vmatprep.subr.bf16.mxu0 0
      %2276 = vmatpush1.bf16.msra.mxu0 0
      %2277 = vmatprep.mubr.bf16.mxu0 0
      %2278 = vmatmul.mubr.bf16.gmra.mrb[0].mxu0 %v2202
      %v2279 = vpop.f32.mrb[0].mxu0
      %v2280 = vadd.f32 0.0, %v2279
      %v2281 = vpop.f32.mrb[0].mxu0
      %v2282 = vadd.f32 0.0, %v2281
      %v2283 = vpop.f32.mrb[0].mxu0
      %v2284 = vpop.f32.mrb[0].mxu0
      %2285 = vdwg.mxu0
      %v2290 = vrot.slane %v2239, 4
      %v2291 = vrot.slane %v2241, 4
      %v2292 = vrot.slane %v2280, 4
      %v2293 = vrot.slane %v2282, 4
      %v2298 = vadd.f32 %v1483, %v2290
      %v2299 = vadd.f32 %v1484, %v2291
      %v2300 = vadd.f32 %v1485, %v2292
      %v2301 = vadd.f32 %v1486, %v2293
      %v2302 = vxor.u32 %v2298, 2147483648
      %v2303 = vmul.f32 %v2302, 1.442695
      %v2304 = vpow.pop %v2303
      %v2305 = vadd.f32 %v2304, 1.0
      %v2306 = vrcp.pop %v2305
      %v2307 = vmul.f32 1.0, %v2306
      %v2308 = vxor.u32 %v2299, 2147483648
      %v2309 = vmul.f32 %v2308, 1.442695
      %v2310 = vpow.pop %v2309
      %v2311 = vadd.f32 %v2310, 1.0
      %v2312 = vrcp.pop %v2311
      %v2313 = vmul.f32 1.0, %v2312
      %v2314 = vtanh.pop %v2300
      %v2315 = vxor.u32 %v2301, 2147483648
      %v2316 = vmul.f32 %v2315, 1.442695
      %v2317 = vpow.pop %v2316
      %v2318 = vadd.f32 %v2317, 1.0
      %v2319 = vrcp.pop %v2318
      %v2320 = vmul.f32 1.0, %v2319
      %v2322 = vrot.slane %v2197, 7
      %v2324 = vmul.f32 %v2313, %v2322
      %v2325 = vmul.f32 %v2307, %v2314
      %v2326 = vadd.f32 %v2324, %v2325
      %v2327 = vtanh.pop %v2326
      %v2328 = vmul.f32 %v2320, %v2327
      %v2329 = vmul.f32 %v2328, %v1490
      %v2330 = vmul.f32 %v2326, %v1490
      %v2331 = vpack.c.bf16 %v2329, %v2329
      %v2333 = vrot.slane %v2331, 2
      %2335 = vmatprep.subr.bf16.mxu0 %v1629
      %2336 = vmatpush1.bf16.msra.mxu0 %v1628
      %2337 = vmatprep.subr.bf16.mxu0 %v1633
      %2338 = vmatpush1.bf16.msra.mxu0 %v1632
      %2339 = vmatprep.subr.bf16.mxu0 %v1637
      %2340 = vmatpush1.bf16.msra.mxu0 %v1636
      %2341 = vmatprep.subr.bf16.mxu0 %v1641
      %2342 = vmatpush1.bf16.msra.mxu0 %v1640
      %2343 = vmatprep.subr.bf16.mxu0 %v1645
      %2344 = vmatpush1.bf16.msra.mxu0 %v1644
      %2345 = vmatprep.subr.bf16.mxu0 %v1649
      %2346 = vmatpush1.bf16.msra.mxu0 %v1648
      %2347 = vmatprep.subr.bf16.mxu0 %v1653
      %2348 = vmatpush1.bf16.msra.mxu0 %v1652
      %2349 = vmatprep.subr.bf16.mxu0 %v1657
      %2350 = vmatpush1.bf16.msra.mxu0 %v1656
      %2351 = vmatprep.subr.bf16.mxu0 0
      %2352 = vmatpush1.bf16.msra.mxu0 0
      %2353 = vmatprep.subr.bf16.mxu0 0
      %2354 = vmatpush1.bf16.msra.mxu0 0
      %2355 = vmatprep.subr.bf16.mxu0 0
      %2356 = vmatpush1.bf16.msra.mxu0 0
      %2357 = vmatprep.subr.bf16.mxu0 0
      %2358 = vmatpush1.bf16.msra.mxu0 0
      %2359 = vmatprep.subr.bf16.mxu0 0
      %2360 = vmatpush1.bf16.msra.mxu0 0
      %2361 = vmatprep.subr.bf16.mxu0 0
      %2362 = vmatpush1.bf16.msra.mxu0 0
      %2363 = vmatprep.subr.bf16.mxu0 0
      %2364 = vmatpush1.bf16.msra.mxu0 0
      %2365 = vmatprep.subr.bf16.mxu0 0
      %2366 = vmatpush1.bf16.msra.mxu0 0
      %2367 = vmatprep.mubr.bf16.mxu0 0
      %2368 = vmatmul.mubr.bf16.gmra.mrb[0].mxu0 %v2333
      %v2369 = vpop.f32.mrb[0].mxu0
      %v2370 = vadd.f32 0.0, %v2369
      %v2371 = vpop.f32.mrb[0].mxu0
      %v2372 = vadd.f32 0.0, %v2371
      %v2373 = vpop.f32.mrb[0].mxu0
      %v2374 = vpop.f32.mrb[0].mxu0
      %2375 = vdwg.mxu0
      %2376 = vmatprep.subr.bf16.mxu0 %v1631
      %2377 = vmatpush1.bf16.msra.mxu0 %v1630
      %2378 = vmatprep.subr.bf16.mxu0 %v1635
      %2379 = vmatpush1.bf16.msra.mxu0 %v1634
      %2380 = vmatprep.subr.bf16.mxu0 %v1639
      %2381 = vmatpush1.bf16.msra.mxu0 %v1638
      %2382 = vmatprep.subr.bf16.mxu0 %v1643
      %2383 = vmatpush1.bf16.msra.mxu0 %v1642
      %2384 = vmatprep.subr.bf16.mxu0 %v1647
      %2385 = vmatpush1.bf16.msra.mxu0 %v1646
      %2386 = vmatprep.subr.bf16.mxu0 %v1651
      %2387 = vmatpush1.bf16.msra.mxu0 %v1650
      %2388 = vmatprep.subr.bf16.mxu0 %v1655
      %2389 = vmatpush1.bf16.msra.mxu0 %v1654
      %2390 = vmatprep.subr.bf16.mxu0 %v1659
      %2391 = vmatpush1.bf16.msra.mxu0 %v1658
      %2392 = vmatprep.subr.bf16.mxu0 0
      %2393 = vmatpush1.bf16.msra.mxu0 0
      %2394 = vmatprep.subr.bf16.mxu0 0
      %2395 = vmatpush1.bf16.msra.mxu0 0
      %2396 = vmatprep.subr.bf16.mxu0 0
      %2397 = vmatpush1.bf16.msra.mxu0 0
      %2398 = vmatprep.subr.bf16.mxu0 0
      %2399 = vmatpush1.bf16.msra.mxu0 0
      %2400 = vmatprep.subr.bf16.mxu0 0
      %2401 = vmatpush1.bf16.msra.mxu0 0
      %2402 = vmatprep.subr.bf16.mxu0 0
      %2403 = vmatpush1.bf16.msra.mxu0 0
      %2404 = vmatprep.subr.bf16.mxu0 0
      %2405 = vmatpush1.bf16.msra.mxu0 0
      %2406 = vmatprep.subr.bf16.mxu0 0
      %2407 = vmatpush1.bf16.msra.mxu0 0
      %2408 = vmatprep.mubr.bf16.mxu0 0
      %2409 = vmatmul.mubr.bf16.gmra.mrb[0].mxu0 %v2333
      %v2410 = vpop.f32.mrb[0].mxu0
      %v2411 = vadd.f32 0.0, %v2410
      %v2412 = vpop.f32.mrb[0].mxu0
      %v2413 = vadd.f32 0.0, %v2412
      %v2414 = vpop.f32.mrb[0].mxu0
      %v2415 = vpop.f32.mrb[0].mxu0
      %2416 = vdwg.mxu0
      %v2421 = vrot.slane %v2370, 3
      %v2422 = vrot.slane %v2372, 3
      %v2423 = vrot.slane %v2411, 3
      %v2424 = vrot.slane %v2413, 3
      %v2429 = vadd.f32 %v1483, %v2421
      %v2430 = vadd.f32 %v1484, %v2422
      %v2431 = vadd.f32 %v1485, %v2423
      %v2432 = vadd.f32 %v1486, %v2424
      %v2433 = vxor.u32 %v2429, 2147483648
      %v2434 = vmul.f32 %v2433, 1.442695
      %v2435 = vpow.pop %v2434
      %v2436 = vadd.f32 %v2435, 1.0
      %v2437 = vrcp.pop %v2436
      %v2438 = vmul.f32 1.0, %v2437
      %v2439 = vxor.u32 %v2430, 2147483648
      %v2440 = vmul.f32 %v2439, 1.442695
      %v2441 = vpow.pop %v2440
      %v2442 = vadd.f32 %v2441, 1.0
      %v2443 = vrcp.pop %v2442
      %v2444 = vmul.f32 1.0, %v2443
      %v2445 = vtanh.pop %v2431
      %v2446 = vxor.u32 %v2432, 2147483648
      %v2447 = vmul.f32 %v2446, 1.442695
      %v2448 = vpow.pop %v2447
      %v2449 = vadd.f32 %v2448, 1.0
      %v2450 = vrcp.pop %v2449
      %v2451 = vmul.f32 1.0, %v2450
      %v2453 = vrot.slane %v2330, 7
      %v2455 = vmul.f32 %v2444, %v2453
      %v2456 = vmul.f32 %v2438, %v2445
      %v2457 = vadd.f32 %v2455, %v2456
      %v2458 = vtanh.pop %v2457
      %v2459 = vmul.f32 %v2451, %v2458
      %v2460 = vmul.f32 %v2459, %v1490
      %v2461 = vmul.f32 %v2457, %v1490
      %v2462 = vpack.c.bf16 %v2460, %v2460
      %v2464 = vshrl.u32 %v2462, 16
      %v2466 = vrot.slane %v2464, 2
      %2468 = vmatprep.subr.bf16.mxu0 %v1629
      %2469 = vmatpush1.bf16.msra.mxu0 %v1628
      %2470 = vmatprep.subr.bf16.mxu0 %v1633
      %2471 = vmatpush1.bf16.msra.mxu0 %v1632
      %2472 = vmatprep.subr.bf16.mxu0 %v1637
      %2473 = vmatpush1.bf16.msra.mxu0 %v1636
      %2474 = vmatprep.subr.bf16.mxu0 %v1641
      %2475 = vmatpush1.bf16.msra.mxu0 %v1640
      %2476 = vmatprep.subr.bf16.mxu0 %v1645
      %2477 = vmatpush1.bf16.msra.mxu0 %v1644
      %2478 = vmatprep.subr.bf16.mxu0 %v1649
      %2479 = vmatpush1.bf16.msra.mxu0 %v1648
      %2480 = vmatprep.subr.bf16.mxu0 %v1653
      %2481 = vmatpush1.bf16.msra.mxu0 %v1652
      %2482 = vmatprep.subr.bf16.mxu0 %v1657
      %2483 = vmatpush1.bf16.msra.mxu0 %v1656
      %2484 = vmatprep.subr.bf16.mxu0 0
      %2485 = vmatpush1.bf16.msra.mxu0 0
      %2486 = vmatprep.subr.bf16.mxu0 0
      %2487 = vmatpush1.bf16.msra.mxu0 0
      %2488 = vmatprep.subr.bf16.mxu0 0
      %2489 = vmatpush1.bf16.msra.mxu0 0
      %2490 = vmatprep.subr.bf16.mxu0 0
      %2491 = vmatpush1.bf16.msra.mxu0 0
      %2492 = vmatprep.subr.bf16.mxu0 0
      %2493 = vmatpush1.bf16.msra.mxu0 0
      %2494 = vmatprep.subr.bf16.mxu0 0
      %2495 = vmatpush1.bf16.msra.mxu0 0
      %2496 = vmatprep.subr.bf16.mxu0 0
      %2497 = vmatpush1.bf16.msra.mxu0 0
      %2498 = vmatprep.subr.bf16.mxu0 0
      %2499 = vmatpush1.bf16.msra.mxu0 0
      %2500 = vmatprep.mubr.bf16.mxu0 0
      %2501 = vmatmul.mubr.bf16.gmra.mrb[0].mxu0 %v2466
      %v2502 = vpop.f32.mrb[0].mxu0
      %v2503 = vadd.f32 0.0, %v2502
      %v2504 = vpop.f32.mrb[0].mxu0
      %v2505 = vadd.f32 0.0, %v2504
      %v2506 = vpop.f32.mrb[0].mxu0
      %v2507 = vpop.f32.mrb[0].mxu0
      %2508 = vdwg.mxu0
      %2509 = vmatprep.subr.bf16.mxu0 %v1631
      %2510 = vmatpush1.bf16.msra.mxu0 %v1630
      %2511 = vmatprep.subr.bf16.mxu0 %v1635
      %2512 = vmatpush1.bf16.msra.mxu0 %v1634
      %2513 = vmatprep.subr.bf16.mxu0 %v1639
      %2514 = vmatpush1.bf16.msra.mxu0 %v1638
      %2515 = vmatprep.subr.bf16.mxu0 %v1643
      %2516 = vmatpush1.bf16.msra.mxu0 %v1642
      %2517 = vmatprep.subr.bf16.mxu0 %v1647
      %2518 = vmatpush1.bf16.msra.mxu0 %v1646
      %2519 = vmatprep.subr.bf16.mxu0 %v1651
      %2520 = vmatpush1.bf16.msra.mxu0 %v1650
      %2521 = vmatprep.subr.bf16.mxu0 %v1655
      %2522 = vmatpush1.bf16.msra.mxu0 %v1654
      %2523 = vmatprep.subr.bf16.mxu0 %v1659
      %2524 = vmatpush1.bf16.msra.mxu0 %v1658
      %2525 = vmatprep.subr.bf16.mxu0 0
      %2526 = vmatpush1.bf16.msra.mxu0 0
      %2527 = vmatprep.subr.bf16.mxu0 0
      %2528 = vmatpush1.bf16.msra.mxu0 0
      %2529 = vmatprep.subr.bf16.mxu0 0
      %2530 = vmatpush1.bf16.msra.mxu0 0
      %2531 = vmatprep.subr.bf16.mxu0 0
      %2532 = vmatpush1.bf16.msra.mxu0 0
      %2533 = vmatprep.subr.bf16.mxu0 0
      %2534 = vmatpush1.bf16.msra.mxu0 0
      %2535 = vmatprep.subr.bf16.mxu0 0
      %2536 = vmatpush1.bf16.msra.mxu0 0
      %2537 = vmatprep.subr.bf16.mxu0 0
      %2538 = vmatpush1.bf16.msra.mxu0 0
      %2539 = vmatprep.subr.bf16.mxu0 0
      %2540 = vmatpush1.bf16.msra.mxu0 0
      %2541 = vmatprep.mubr.bf16.mxu0 0
      %2542 = vmatmul.mubr.bf16.gmra.mrb[0].mxu0 %v2466
      %v2543 = vpop.f32.mrb[0].mxu0
      %v2544 = vadd.f32 0.0, %v2543
      %v2545 = vpop.f32.mrb[0].mxu0
      %v2546 = vadd.f32 0.0, %v2545
      %v2547 = vpop.f32.mrb[0].mxu0
      %v2548 = vpop.f32.mrb[0].mxu0
      %2549 = vdwg.mxu0
      %v2554 = vrot.slane %v2503, 2
      %v2555 = vrot.slane %v2505, 2
      %v2556 = vrot.slane %v2544, 2
      %v2557 = vrot.slane %v2546, 2
      %v2562 = vadd.f32 %v1483, %v2554
      %v2563 = vadd.f32 %v1484, %v2555
      %v2564 = vadd.f32 %v1485, %v2556
      %v2565 = vadd.f32 %v1486, %v2557
      %v2566 = vxor.u32 %v2562, 2147483648
      %v2567 = vmul.f32 %v2566, 1.442695
      %v2568 = vpow.pop %v2567
      %v2569 = vadd.f32 %v2568, 1.0
      %v2570 = vrcp.pop %v2569
      %v2571 = vmul.f32 1.0, %v2570
      %v2572 = vxor.u32 %v2563, 2147483648
      %v2573 = vmul.f32 %v2572, 1.442695
      %v2574 = vpow.pop %v2573
      %v2575 = vadd.f32 %v2574, 1.0
      %v2576 = vrcp.pop %v2575
      %v2577 = vmul.f32 1.0, %v2576
      %v2578 = vtanh.pop %v2564
      %v2579 = vxor.u32 %v2565, 2147483648
      %v2580 = vmul.f32 %v2579, 1.442695
      %v2581 = vpow.pop %v2580
      %v2582 = vadd.f32 %v2581, 1.0
      %v2583 = vrcp.pop %v2582
      %v2584 = vmul.f32 1.0, %v2583
      %v2586 = vrot.slane %v2461, 7
      %v2588 = vmul.f32 %v2577, %v2586
      %v2589 = vmul.f32 %v2571, %v2578
      %v2590 = vadd.f32 %v2588, %v2589
      %v2591 = vtanh.pop %v2590
      %v2592 = vmul.f32 %v2584, %v2591
      %v2593 = vmul.f32 %v2592, %v1490
      %v2594 = vmul.f32 %v2590, %v1490
      %v2595 = vpack.c.bf16 %v2593, %v2593
      %v2597 = vrot.slane %v2595, 3
      %2599 = vmatprep.subr.bf16.mxu0 %v1629
      %2600 = vmatpush1.bf16.msra.mxu0 %v1628
      %2601 = vmatprep.subr.bf16.mxu0 %v1633
      %2602 = vmatpush1.bf16.msra.mxu0 %v1632
      %2603 = vmatprep.subr.bf16.mxu0 %v1637
      %2604 = vmatpush1.bf16.msra.mxu0 %v1636
      %2605 = vmatprep.subr.bf16.mxu0 %v1641
      %2606 = vmatpush1.bf16.msra.mxu0 %v1640
      %2607 = vmatprep.subr.bf16.mxu0 %v1645
      %2608 = vmatpush1.bf16.msra.mxu0 %v1644
      %2609 = vmatprep.subr.bf16.mxu0 %v1649
      %2610 = vmatpush1.bf16.msra.mxu0 %v1648
      %2611 = vmatprep.subr.bf16.mxu0 %v1653
      %2612 = vmatpush1.bf16.msra.mxu0 %v1652
      %2613 = vmatprep.subr.bf16.mxu0 %v1657
      %2614 = vmatpush1.bf16.msra.mxu0 %v1656
      %2615 = vmatprep.subr.bf16.mxu0 0
      %2616 = vmatpush1.bf16.msra.mxu0 0
      %2617 = vmatprep.subr.bf16.mxu0 0
      %2618 = vmatpush1.bf16.msra.mxu0 0
      %2619 = vmatprep.subr.bf16.mxu0 0
      %2620 = vmatpush1.bf16.msra.mxu0 0
      %2621 = vmatprep.subr.bf16.mxu0 0
      %2622 = vmatpush1.bf16.msra.mxu0 0
      %2623 = vmatprep.subr.bf16.mxu0 0
      %2624 = vmatpush1.bf16.msra.mxu0 0
      %2625 = vmatprep.subr.bf16.mxu0 0
      %2626 = vmatpush1.bf16.msra.mxu0 0
      %2627 = vmatprep.subr.bf16.mxu0 0
      %2628 = vmatpush1.bf16.msra.mxu0 0
      %2629 = vmatprep.subr.bf16.mxu0 0
      %2630 = vmatpush1.bf16.msra.mxu0 0
      %2631 = vmatprep.mubr.bf16.mxu0 0
      %2632 = vmatmul.mubr.bf16.gmra.mrb[0].mxu0 %v2597
      %v2633 = vpop.f32.mrb[0].mxu0
      %v2634 = vadd.f32 0.0, %v2633
      %v2635 = vpop.f32.mrb[0].mxu0
      %v2636 = vadd.f32 0.0, %v2635
      %v2637 = vpop.f32.mrb[0].mxu0
      %v2638 = vpop.f32.mrb[0].mxu0
      %2639 = vdwg.mxu0
      %2640 = vmatprep.subr.bf16.mxu0 %v1631
      %2641 = vmatpush1.bf16.msra.mxu0 %v1630
      %2642 = vmatprep.subr.bf16.mxu0 %v1635
      %2643 = vmatpush1.bf16.msra.mxu0 %v1634
      %2644 = vmatprep.subr.bf16.mxu0 %v1639
      %2645 = vmatpush1.bf16.msra.mxu0 %v1638
      %2646 = vmatprep.subr.bf16.mxu0 %v1643
      %2647 = vmatpush1.bf16.msra.mxu0 %v1642
      %2648 = vmatprep.subr.bf16.mxu0 %v1647
      %2649 = vmatpush1.bf16.msra.mxu0 %v1646
      %2650 = vmatprep.subr.bf16.mxu0 %v1651
      %2651 = vmatpush1.bf16.msra.mxu0 %v1650
      %2652 = vmatprep.subr.bf16.mxu0 %v1655
      %2653 = vmatpush1.bf16.msra.mxu0 %v1654
      %2654 = vmatprep.subr.bf16.mxu0 %v1659
      %2655 = vmatpush1.bf16.msra.mxu0 %v1658
      %2656 = vmatprep.subr.bf16.mxu0 0
      %2657 = vmatpush1.bf16.msra.mxu0 0
      %2658 = vmatprep.subr.bf16.mxu0 0
      %2659 = vmatpush1.bf16.msra.mxu0 0
      %2660 = vmatprep.subr.bf16.mxu0 0
      %2661 = vmatpush1.bf16.msra.mxu0 0
      %2662 = vmatprep.subr.bf16.mxu0 0
      %2663 = vmatpush1.bf16.msra.mxu0 0
      %2664 = vmatprep.subr.bf16.mxu0 0
      %2665 = vmatpush1.bf16.msra.mxu0 0
      %2666 = vmatprep.subr.bf16.mxu0 0
      %2667 = vmatpush1.bf16.msra.mxu0 0
      %2668 = vmatprep.subr.bf16.mxu0 0
      %2669 = vmatpush1.bf16.msra.mxu0 0
      %2670 = vmatprep.subr.bf16.mxu0 0
      %2671 = vmatpush1.bf16.msra.mxu0 0
      %2672 = vmatprep.mubr.bf16.mxu0 0
      %2673 = vmatmul.mubr.bf16.gmra.mrb[0].mxu0 %v2597
      %v2674 = vpop.f32.mrb[0].mxu0
      %v2675 = vadd.f32 0.0, %v2674
      %v2676 = vpop.f32.mrb[0].mxu0
      %v2677 = vadd.f32 0.0, %v2676
      %v2678 = vpop.f32.mrb[0].mxu0
      %v2679 = vpop.f32.mrb[0].mxu0
      %2680 = vdwg.mxu0
      %v2685 = vrot.slane %v2634, 1
      %v2686 = vrot.slane %v2636, 1
      %v2687 = vrot.slane %v2675, 1
      %v2688 = vrot.slane %v2677, 1
      %v2693 = vadd.f32 %v1483, %v2685
      %v2694 = vadd.f32 %v1484, %v2686
      %v2695 = vadd.f32 %v1485, %v2687
      %v2696 = vadd.f32 %v1486, %v2688
      %v2697 = vxor.u32 %v2693, 2147483648
      %v2698 = vmul.f32 %v2697, 1.442695
      %v2699 = vpow.pop %v2698
      %v2700 = vadd.f32 %v2699, 1.0
      %v2701 = vrcp.pop %v2700
      %v2702 = vmul.f32 1.0, %v2701
      %v2703 = vxor.u32 %v2694, 2147483648
      %v2704 = vmul.f32 %v2703, 1.442695
      %v2705 = vpow.pop %v2704
      %v2706 = vadd.f32 %v2705, 1.0
      %v2707 = vrcp.pop %v2706
      %v2708 = vmul.f32 1.0, %v2707
      %v2709 = vtanh.pop %v2695
      %v2710 = vxor.u32 %v2696, 2147483648
      %v2711 = vmul.f32 %v2710, 1.442695
      %v2712 = vpow.pop %v2711
      %v2713 = vadd.f32 %v2712, 1.0
      %v2714 = vrcp.pop %v2713
      %v2715 = vmul.f32 1.0, %v2714
      %v2717 = vrot.slane %v2594, 7
      %v2719 = vmul.f32 %v2708, %v2717
      %v2720 = vmul.f32 %v2702, %v2709
      %v2721 = vadd.f32 %v2719, %v2720
      %v2722 = vtanh.pop %v2721
      %v2723 = vmul.f32 %v2715, %v2722
      %vm2724 = vcmask 1040384
      %v2725 = vsel %vm2724, %v1804, %v1932
      %vm2726 = vcmask 1041408
      %v2727 = vsel %vm2726, %v2725, %v2064
      %vm2728 = vcmask 1042432
      %v2729 = vsel %vm2728, %v2727, %v2195
      %vm2730 = vcmask 1043456
      %v2731 = vsel %vm2730, %v2729, %v2328
      %vm2732 = vcmask 1044480
      %v2733 = vsel %vm2732, %v2731, %v2459
      %vm2734 = vcmask 1045504
      %v2735 = vsel %vm2734, %v2733, %v2592
      %vm2736 = vcmask 1046528
      %v2737 = vsel %vm2736, %v2735, %v2723
      %s2738 = scalar_lea.vmem [#allocation15], %s1477
      %2739 = vst [vmem:[%s2738] sm:$0xff] %v2737
    $region58: #{tpu_custom_call.1} parent=1 // loop_footer
      %s1472 = sadd.s32 %s1470, 1
    $region59: #{tpu_custom_call.1} parent=1 // loop_footer_branch
      %1469 = sbr.rel target = $region55
    $region60: #{tpu_custom_call.1} parent=1 // loop_exit
      _
    // Predicated region
    $region61: #{tpu_custom_call.1} parent=1 // pred_check
      _
    $region62: #{tpu_custom_call.1} parent=1 // pred_check_branch
      %2741 = sbr.rel (0) target = $region64
    $region63: #{tpu_custom_call.1} parent=1 // pred_region
      _
    $region64: #{tpu_custom_call.1} parent=1 // pred_fallthru
      _
    // Predicated region
    $region65: #{tpu_custom_call.1} parent=1 // pred_check
      _
    $region66: #{tpu_custom_call.1} parent=1 // pred_check_branch
      %2743 = sbr.rel (0) target = $region68
    $region67: #{tpu_custom_call.1} parent=1 // pred_region
      %s2745 = ssub.s32 256, 256
      %2746 = vsyncadd [#allocation7], %s2745
      %s2747 = sshll.u32 [#allocation15], 4
      %s2748 = int_to_ptr.vmem [resolvable:$true] %s2747
      %2753 = dma.vmem_to_hbm [thread:$0]  %s2748, 256, %s9, [#allocation7], 128, 128, 8
    $region68: #{tpu_custom_call.1} parent=1 // pred_fallthru
      _
    // Predicated region
    $region69: #{tpu_custom_call.1} parent=1 // pred_check
      _
    $region70: #{tpu_custom_call.1} parent=1 // pred_check_branch
      %2755 = sbr.rel (0) target = $region72
    $region71: #{tpu_custom_call.1} parent=1 // pred_region
      _
    $region72: #{tpu_custom_call.1} parent=1 // pred_fallthru
      _
    // Predicated region
    $region73: #{tpu_custom_call.1} parent=1 // pred_check
      _
    $region74: #{tpu_custom_call.1} parent=1 // pred_check_branch
      %2757 = sbr.rel (0) target = $region76
    $region75: #{tpu_custom_call.1} parent=1 // pred_region
      %2758 = dma.done [#allocation7], 256
    $region76: #{tpu_custom_call.1} parent=1 // pred_fallthru
      _
    %2759 = vsyncpa [#allocation6], 1
    %2760 = vsyncpa [#allocation11], 1
    %2761 = vsyncpa [#allocation14], 1
    %2762 = vsyncpa [#allocation7], 1
    %2763 = vsyncpa [#allocation8], 1

</llo_original>
